<compile_context>
chip_gen: v5e
topology: v5e:2x2
jax: 0.10.0
libtpu: 0.0.40
codegen_flags: <defaults>
</compile_context>

<pallas_src>
import functools
import numpy as np
import jax
import jax.numpy as jnp
from jax.experimental import pallas as pl
from jax.experimental.pallas import tpu as pltpu

EPS = 1e-5
NEG_INF = -1e30
PAD = 4  # max spatial padding needed by any branch (dil_conv_5x5: pad=4)

# 41 unique (dy, dx) lane offsets needed by the four conv branches:
#   sep3: {-1,0,1}^2   sep5: {-2..2}^2   dil3: {-2,0,2}^2   dil5: {-4,-2,0,2,4}^2
_SEP_TAPS = [(dy, dx) for dy in range(-2, 3) for dx in range(-2, 3)]          # 25
_DIL5_ONLY = [(dy, dx) for dy in (-4, -2, 0, 2, 4) for dx in (-4, -2, 0, 2, 4)
              if not (abs(dy) <= 2 and abs(dx) <= 2)]                          # 16
TAPS = tuple(_SEP_TAPS + _DIL5_ONLY)                                           # 41


def _mixed_op_kernel(w_ref, xf_ref, m_ref, inv_ref, wcat_ref,
                     out_ref, rstack_ref, *, N, H, W, taps):
    # w_ref     : SMEM (8,)              architecture mixing weights
    # xf_ref    : VMEM (Cp, Mtot)        padded + lane-flattened x, all channels
    # m_ref     : VMEM (1,  Mtot)        validity-mask row (shared by channels)
    # inv_ref   : VMEM (1,  P)           1 / avg-pool denominator (0 where den==0)
    # wcat_ref  : VMEM (4*Ct, 41*Cp)     bf16 K-stacked weights of this tile:
    #                                    [sep3; sep5; dil3; dil5] rows
    # out_ref   : VMEM (Ct, P)           lane-dense output tile, P = N*Hp*Wp
    # rstack_ref: VMEM (41*Cp, P) bf16   persistent scratch: stacked relu taps
    Ct, P = out_ref.shape
    Cp = xf_ref.shape[0]
    Wp = W + 2 * PAD
    MARG = PAD * Wp + PAD
    inv_cnt = 1.0 / float(N * H * W)
    tile = pl.program_id(0)

    # ---- step 0 only: build the shared K-stacked bf16 relu-tap slab ---------
    @pl.when(tile == 0)
    def _():
        relu = jnp.maximum(xf_ref[...], 0.0)                 # (Cp, Mtot)
        for t, (dy, dx) in enumerate(taps):                  # 41 unique offsets
            o = MARG + dy * Wp + dx
            rstack_ref[pl.ds(t * Cp, Cp), :] = relu[:, o:o + P].astype(jnp.bfloat16)

    def tap(arr, dy, dx):                                    # shifted lane window
        o = MARG + dy * Wp + dx
        return arr[:, o:o + P]

    # this tile's rows of x, sliced from the resident full slab (no extra DMA)
    start = pl.multiple_of(tile * Ct, 8)
    x_tile = xf_ref[pl.ds(start, Ct), :]                     # (Ct, Mtot)
    mask = m_ref[...]                                        # (1,  Mtot)
    m0 = tap(mask, 0, 0)                                     # (1,  P) valid outputs

    def bn_add(acc, y, wi):
        # BatchNorm2d(affine=False), training-mode batch stats over valid
        # positions only; single-pass f32 sums; mixing weight folded into scale.
        ym = y * m0
        s1 = jnp.sum(ym, axis=-1, keepdims=True)
        s2 = jnp.sum(ym * ym, axis=-1, keepdims=True)
        mean = s1 * inv_cnt
        var = s2 * inv_cnt - mean * mean
        scale = wi * jax.lax.rsqrt(var + EPS)
        return acc + scale * (ym - mean)

    # ---- skip_connect (identity); 'none' (Zero) contributes nothing ---------
    acc = w_ref[3] * tap(x_tile, 0, 0)

    # ---- max_pool_3x3 + BN, avg_pool_3x3(count_include_pad=False) + BN ------
    # single NEG_INF select for the whole tile; avg numerator needs no mask
    # because the padded slab is exactly zero at invalid positions.
    xneg = jnp.where(mask > 0.5, x_tile, NEG_INF)            # (Ct, Mtot)
    mx, num = None, None
    for dy in (-1, 0, 1):
        for dx in (-1, 0, 1):
            v = tap(xneg, dy, dx)
            mx = v if mx is None else jnp.maximum(mx, v)
            s = tap(x_tile, dy, dx)
            num = s if num is None else num + s
    avg = num * inv_ref[...]                                 # (Ct,P) * (1,P)
    acc = bn_add(acc, mx, w_ref[1])
    acc = bn_add(acc, avg, w_ref[2])

    # ---- all four conv branches: ONE bf16 MXU matmul, f32 accumulation ------
    conv = jnp.dot(wcat_ref[...], rstack_ref[...],
                   preferred_element_type=jnp.float32)       # (4*Ct, P)
    acc = bn_add(acc, conv[0 * Ct:1 * Ct, :], w_ref[4])      # sep_conv_3x3
    acc = bn_add(acc, conv[1 * Ct:2 * Ct, :], w_ref[5])      # sep_conv_5x5
    acc = bn_add(acc, conv[2 * Ct:3 * Ct, :], w_ref[6])      # dil_conv_3x3
    acc = bn_add(acc, conv[3 * Ct:4 * Ct, :], w_ref[7])      # dil_conv_5x5

    out_ref[...] = acc


def mixed_op(x, weights, conv_params, *, channel_tile=None):
    """MixedOp forward. x: (N, C, H, W); weights: (8,) softmaxed alphas."""
    dw3, pw3, dw5, pw5, wd3, wd5 = conv_params
    N, C, H, W = x.shape
    Hp, Wp = H + 2 * PAD, W + 2 * PAD
    P = N * Hp * Wp
    MARG = PAD * Wp + PAD
    Mtot = P + 2 * MARG
    f32 = jnp.float32

    # output-channel tiling: default to min(128, C) rounded up to 8
    C8 = ((C + 7) // 8) * 8
    if channel_tile is None:
        Ct = min(128, C8)
    else:
        Ct = min(((channel_tile + 7) // 8) * 8, C8)
    Cp = ((C8 + Ct - 1) // Ct) * Ct
    nt = Cp // Ct
    T = len(TAPS)
    TK = T * Cp

    def pad_c(a, axes):
        cfg = [(0, 0)] * a.ndim
        for ax in axes:
            cfg[ax] = (0, Cp - a.shape[ax])
        return jnp.pad(a.astype(f32), cfg)

    # channel-major, spatially padded + lane-flattened input with lane margins
    xcp = pad_c(x, (1,))                                          # (N, Cp, H, W)
    xp = jnp.pad(xcp, ((0, 0), (0, 0), (PAD, PAD), (PAD, PAD)))
    xp = jnp.transpose(xp, (1, 0, 2, 3)).reshape(Cp, P)
    xpf = jnp.pad(xp, ((0, 0), (MARG, MARG)))                     # (Cp, Mtot)

    # validity mask row + data-independent avg-pool reciprocal denominator
    mask2d = jnp.zeros((Hp, Wp), f32).at[PAD:PAD + H, PAD:PAD + W].set(1.0)
    mrow = jnp.tile(mask2d.reshape(1, Hp * Wp), (1, N))
    mrowf = jnp.pad(mrow, ((0, 0), (MARG, MARG)))                 # (1, Mtot)
    den = sum(mrowf[:, MARG + dy * Wp + dx: MARG + dy * Wp + dx + P]
              for dy in (-1, 0, 1) for dx in (-1, 0, 1))
    inv_den = jnp.where(den > 0.5, 1.0 / jnp.maximum(den, 1.0), 0.0)  # (1, P)

    # ---- fold depthwise into pointwise; build one K-stacked bf16 weight -----
    dw3p, dw5p = pad_c(dw3, (0,)), pad_c(dw5, (0,))
    pw3p, pw5p = pad_c(pw3, (0, 1)), pad_c(pw5, (0, 1))
    wd3p, wd5p = pad_c(wd3, (0, 1)), pad_c(wd5, (0, 1))
    tap_idx = {off: t for t, off in enumerate(TAPS)}

    def scatter_taps(entries):                   # entries: [(tap index, (Cp,Cp))]
        w = jnp.zeros((Cp, T, Cp), f32)
        for t, blk in entries:
            w = w.at[:, t, :].set(blk)
        return w

    w_sep3 = scatter_taps([(tap_idx[(ky - 1, kx - 1)],
                            pw3p * dw3p[:, ky, kx][None, :])
                           for ky in range(3) for kx in range(3)])
    w_sep5 = scatter_taps([(tap_idx[(ky - 2, kx - 2)],
                            pw5p * dw5p[:, ky, kx][None, :])
                           for ky in range(5) for kx in range(5)])
    w_dil3 = scatter_taps([(tap_idx[(2 * ky - 2, 2 * kx - 2)],
                            wd3p[:, :, ky, kx])
                           for ky in range(3) for kx in range(3)])
    w_dil5 = scatter_taps([(tap_idx[(2 * ky - 4, 2 * kx - 4)],
                            wd5p[:, :, ky, kx])
                           for ky in range(5) for kx in range(5)])
    w_all = jnp.stack([w_sep3, w_sep5, w_dil3, w_dil5], 0).reshape(4, Cp, TK)
    # rows grouped tile-major then branch-major so each grid block is contiguous
    w_cat = (w_all.reshape(4, nt, Ct, TK).transpose(1, 0, 2, 3)
                  .reshape(nt * 4 * Ct, TK).astype(jnp.bfloat16))

    kernel = functools.partial(_mixed_op_kernel, N=N, H=H, W=W, taps=TAPS)
    out_flat = pl.pallas_call(
        kernel,
        out_shape=jax.ShapeDtypeStruct((Cp, P), f32),
        grid=(nt,),
        in_specs=[
            pl.BlockSpec(memory_space=pltpu.MemorySpace.SMEM),    # mixing weights
            pl.BlockSpec((Cp, Mtot), lambda i: (0, 0)),           # x slab (all ch.)
            pl.BlockSpec((1, Mtot), lambda i: (0, 0)),            # validity mask
            pl.BlockSpec((1, P), lambda i: (0, 0)),               # 1/avg-pool den
            pl.BlockSpec((4 * Ct, TK), lambda i: (i, 0)),         # stacked weights
        ],
        out_specs=pl.BlockSpec((Ct, P), lambda i: (i, 0)),
        scratch_shapes=[pltpu.VMEM((TK, P), jnp.bfloat16)],       # relu-tap slab
        compiler_params=pltpu.CompilerParams(
            # "arbitrary": the step-0-built scratch slab is reused by later steps.
            dimension_semantics=("arbitrary",),
            # small shapes fit easily; raise for large C/H/W configs
            vmem_limit_bytes=32 * 1024 * 1024),
    )(weights.astype(f32), xpf, mrowf, inv_den, w_cat)

    # crop back to NCHW (kept here so the op matches the torch module's layout)
    out = out_flat.reshape(Cp, N, Hp, Wp)[:C, :, PAD:PAD + H, PAD:PAD + W]
    return jnp.transpose(out, (1, 0, 2, 3))


# ------------------------- pure-JAX reference --------------------------------
def _bn_ref(y):
    mean = jnp.mean(y, axis=(0, 2, 3), keepdims=True)
    var = jnp.mean((y - mean) ** 2, axis=(0, 2, 3), keepdims=True)
    return (y - mean) / jnp.sqrt(var + EPS)


def _conv_ref(x, w, pad, dil=1, groups=1):
    return jax.lax.conv_general_dilated(
        x, w, window_strides=(1, 1), padding=((pad, pad), (pad, pad)),
        rhs_dilation=(dil, dil), feature_group_count=groups,
        dimension_numbers=('NCHW', 'OIHW', 'NCHW'))


def mixed_op_reference(x, weights, conv_params):
    dw3, pw3, dw5, pw5, wd3, wd5 = conv_params
    N, C, H, W = x.shape
    r = jnp.maximum(x, 0.0)

    xpi = jnp.pad(x, ((0, 0), (0, 0), (1, 1), (1, 1)), constant_values=-jnp.inf)
    mx = functools.reduce(jnp.maximum,
                          [xpi[:, :, dy:dy + H, dx:dx + W]
                           for dy in range(3) for dx in range(3)])
    xp0 = jnp.pad(x, ((0, 0), (0, 0), (1, 1), (1, 1)))
    mp0 = jnp.pad(jnp.ones_like(x), ((0, 0), (0, 0), (1, 1), (1, 1)))
    num = sum(xp0[:, :, dy:dy + H, dx:dx + W] for dy in range(3) for dx in range(3))
    den = sum(mp0[:, :, dy:dy + H, dx:dx + W] for dy in range(3) for dx in range(3))
    av = num / den

    sep3 = _conv_ref(_conv_ref(r, dw3.reshape(C, 1, 3, 3), 1, groups=C),
                     pw3.reshape(C, C, 1, 1), 0)
    sep5 = _conv_ref(_conv_ref(r, dw5.reshape(C, 1, 5, 5), 2, groups=C),
                     pw5.reshape(C, C, 1, 1), 0)
    dil3 = _conv_ref(r, wd3, 2, dil=2)
    dil5 = _conv_ref(r, wd5, 4, dil=2)

    return (weights[3] * x
            + weights[1] * _bn_ref(mx)
            + weights[2] * _bn_ref(av)
            + weights[4] * _bn_ref(sep3)
            + weights[5] * _bn_ref(sep5)
            + weights[6] * _bn_ref(dil3)
            + weights[7] * _bn_ref(dil5))


if __name__ == "__main__":
    def make_inputs(key, N, C, H, W):
        ks = jax.random.split(key, 8)
        x = jax.random.normal(ks[0], (N, C, H, W), jnp.float32)
        weights = jax.nn.softmax(jax.random.normal(ks[1], (8,), jnp.float32))
        dw3 = 0.30 * jax.random.normal(ks[2], (C, 3, 3), jnp.float32)
        pw3 = 0.30 * jax.random.normal(ks[3], (C, C), jnp.float32)
        dw5 = 0.20 * jax.random.normal(ks[4], (C, 5, 5), jnp.float32)
        pw5 = 0.30 * jax.random.normal(ks[5], (C, C), jnp.float32)
        wd3 = 0.20 * jax.random.normal(ks[6], (C, C, 3, 3), jnp.float32)
        wd5 = 0.10 * jax.random.normal(ks[7], (C, C, 5, 5), jnp.float32)
        return x, weights, (dw3, pw3, dw5, pw5, wd3, wd5)

    # bf16 MXU operands (f32 accumulation) per the perf review -> compare at
    # 1e-2 instead of the f32-only 1e-3 tolerance.
    RTOL = ATOL = 1e-2

    k1, k2 = jax.random.split(jax.random.PRNGKey(0))

    # primary config (module's small test shape) -> single-step grid
    x, w, params = make_inputs(k1, 2, 4, 16, 16)
    out = jax.block_until_ready(mixed_op(x, w, params))
    ref = jax.block_until_ready(mixed_op_reference(x, w, params))
    assert out.shape == x.shape and out.dtype == jnp.float32
    if not np.allclose(np.asarray(out), np.asarray(ref), rtol=RTOL, atol=ATOL):
        raise AssertionError("Pallas MixedOp kernel does not match reference (C=4)")

    # larger channel count, default tile (single grid step)
    x2, w2, params2 = make_inputs(k2, 2, 16, 16, 16)
    out2 = jax.block_until_ready(mixed_op(x2, w2, params2))
    ref2 = jax.block_until_ready(mixed_op_reference(x2, w2, params2))
    if not np.allclose(np.asarray(out2), np.asarray(ref2), rtol=RTOL, atol=ATOL):
        raise AssertionError("Pallas MixedOp kernel does not match reference (C=16)")

    # forced small channel tile -> exercises the multi-step grid and the
    # reuse of the step-0-built persistent relu-tap scratch slab
    out3 = jax.block_until_ready(mixed_op(x2, w2, params2, channel_tile=8))
    if not np.allclose(np.asarray(out3), np.asarray(ref2), rtol=RTOL, atol=ATOL):
        raise AssertionError("Pallas MixedOp kernel does not match reference (C=16, Ct=8)")

    print("KERNEL_OK")
</pallas_src>

<mosaic_0001>
module attributes {stable_mosaic.version = 11 : i64} {
  func.func @_mixed_op_kernel(%arg0: i32, %arg1: memref<8xf32, #tpu.memory_space<smem>>, %arg2: memref<8x1352xf32, #tpu.memory_space<vmem>>, %arg3: memref<1x1352xf32, #tpu.memory_space<vmem>>, %arg4: memref<1x1152xf32, #tpu.memory_space<vmem>>, %arg5: memref<32x328xbf16, #tpu.memory_space<vmem>>, %arg6: memref<8x1152xf32, #tpu.memory_space<vmem>>, %arg7: memref<328x1152xbf16, #tpu.memory_space<vmem>>) attributes {dimension_semantics = [#tpu.dimension_semantics<arbitrary>], iteration_bounds = array<i64: 1>, scalar_prefetch = 0 : i64, scratch_operands = 1 : i64, tpu.core_type = #tpu.core_type<tc>, window_params = [{transform_indices = @transform_0, window_bounds = array<i64: 8>}, {pipeline_mode = #tpu.pipeline_mode<synchronous>, transform_indices = @transform_1, window_bounds = array<i64: 8, 1352>}, {pipeline_mode = #tpu.pipeline_mode<synchronous>, transform_indices = @transform_2, window_bounds = array<i64: 1, 1352>}, {pipeline_mode = #tpu.pipeline_mode<synchronous>, transform_indices = @transform_3, window_bounds = array<i64: 1, 1152>}, {transform_indices = @transform_4, window_bounds = array<i64: 32, 328>}, {transform_indices = @transform_5, window_bounds = array<i64: 8, 1152>}]} {
    %c0_i32 = arith.constant 0 : i32
    %0 = arith.cmpi eq, %arg0, %c0_i32 : i32
    %1 = arith.extui %0 : i1 to i32
    %c0_i32_0 = arith.constant 0 : i32
    %2 = arith.cmpi ne, %1, %c0_i32_0 : i32
    scf.if %2 {
      %c0_43 = arith.constant 0 : index
      %c0_44 = arith.constant 0 : index
      %208 = vector.load %arg2[%c0_43, %c0_44] : memref<8x1352xf32, #tpu.memory_space<vmem>>, vector<8x1352xf32>
      %cst_45 = arith.constant 0.000000e+00 : f32
      %209 = vector.broadcast %cst_45 : f32 to vector<8x1352xf32>
      %210 = arith.maximumf %208, %209 : vector<8x1352xf32>
      %211 = vector.extract_strided_slice %210 {offsets = [0, 50], sizes = [8, 1152], strides = [1, 1]} : vector<8x1352xf32> to vector<8x1152xf32>
      %212 = arith.truncf %211 : vector<8x1152xf32> to vector<8x1152xbf16>
      %c0_46 = arith.constant 0 : index
      %c0_47 = arith.constant 0 : index
      %213 = vector.load %arg7[%c0_46, %c0_47] : memref<328x1152xbf16, #tpu.memory_space<vmem>>, vector<8x1152xbf16>
      tpu.vector_store %arg7[%c0_46, %c0_47], %212 {strides = array<i32>} : memref<328x1152xbf16, #tpu.memory_space<vmem>>, vector<8x1152xbf16>,
      %214 = vector.extract_strided_slice %210 {offsets = [0, 51], sizes = [8, 1152], strides = [1, 1]} : vector<8x1352xf32> to vector<8x1152xf32>
      %215 = arith.truncf %214 : vector<8x1152xf32> to vector<8x1152xbf16>
      %c8 = arith.constant 8 : index
      %c0_48 = arith.constant 0 : index
      %216 = vector.load %arg7[%c8, %c0_48] : memref<328x1152xbf16, #tpu.memory_space<vmem>>, vector<8x1152xbf16>
      tpu.vector_store %arg7[%c8, %c0_48], %215 {strides = array<i32>} : memref<328x1152xbf16, #tpu.memory_space<vmem>>, vector<8x1152xbf16>,
      %217 = vector.extract_strided_slice %210 {offsets = [0, 52], sizes = [8, 1152], strides = [1, 1]} : vector<8x1352xf32> to vector<8x1152xf32>
      %218 = arith.truncf %217 : vector<8x1152xf32> to vector<8x1152xbf16>
      %c16 = arith.constant 16 : index
      %c0_49 = arith.constant 0 : index
      %219 = vector.load %arg7[%c16, %c0_49] : memref<328x1152xbf16, #tpu.memory_space<vmem>>, vector<8x1152xbf16>
      tpu.vector_store %arg7[%c16, %c0_49], %218 {strides = array<i32>} : memref<328x1152xbf16, #tpu.memory_space<vmem>>, vector<8x1152xbf16>,
      %220 = vector.extract_strided_slice %210 {offsets = [0, 53], sizes = [8, 1152], strides = [1, 1]} : vector<8x1352xf32> to vector<8x1152xf32>
      %221 = arith.truncf %220 : vector<8x1152xf32> to vector<8x1152xbf16>
      %c24 = arith.constant 24 : index
      %c0_50 = arith.constant 0 : index
      %222 = vector.load %arg7[%c24, %c0_50] : memref<328x1152xbf16, #tpu.memory_space<vmem>>, vector<8x1152xbf16>
      tpu.vector_store %arg7[%c24, %c0_50], %221 {strides = array<i32>} : memref<328x1152xbf16, #tpu.memory_space<vmem>>, vector<8x1152xbf16>,
      %223 = vector.extract_strided_slice %210 {offsets = [0, 54], sizes = [8, 1152], strides = [1, 1]} : vector<8x1352xf32> to vector<8x1152xf32>
      %224 = arith.truncf %223 : vector<8x1152xf32> to vector<8x1152xbf16>
      %c32 = arith.constant 32 : index
      %c0_51 = arith.constant 0 : index
      %225 = vector.load %arg7[%c32, %c0_51] : memref<328x1152xbf16, #tpu.memory_space<vmem>>, vector<8x1152xbf16>
      tpu.vector_store %arg7[%c32, %c0_51], %224 {strides = array<i32>} : memref<328x1152xbf16, #tpu.memory_space<vmem>>, vector<8x1152xbf16>,
      %226 = vector.extract_strided_slice %210 {offsets = [0, 74], sizes = [8, 1152], strides = [1, 1]} : vector<8x1352xf32> to vector<8x1152xf32>
      %227 = arith.truncf %226 : vector<8x1152xf32> to vector<8x1152xbf16>
      %c40 = arith.constant 40 : index
      %c0_52 = arith.constant 0 : index
      %228 = vector.load %arg7[%c40, %c0_52] : memref<328x1152xbf16, #tpu.memory_space<vmem>>, vector<8x1152xbf16>
      tpu.vector_store %arg7[%c40, %c0_52], %227 {strides = array<i32>} : memref<328x1152xbf16, #tpu.memory_space<vmem>>, vector<8x1152xbf16>,
      %229 = vector.extract_strided_slice %210 {offsets = [0, 75], sizes = [8, 1152], strides = [1, 1]} : vector<8x1352xf32> to vector<8x1152xf32>
      %230 = arith.truncf %229 : vector<8x1152xf32> to vector<8x1152xbf16>
      %c48 = arith.constant 48 : index
      %c0_53 = arith.constant 0 : index
      %231 = vector.load %arg7[%c48, %c0_53] : memref<328x1152xbf16, #tpu.memory_space<vmem>>, vector<8x1152xbf16>
      tpu.vector_store %arg7[%c48, %c0_53], %230 {strides = array<i32>} : memref<328x1152xbf16, #tpu.memory_space<vmem>>, vector<8x1152xbf16>,
      %232 = vector.extract_strided_slice %210 {offsets = [0, 76], sizes = [8, 1152], strides = [1, 1]} : vector<8x1352xf32> to vector<8x1152xf32>
      %233 = arith.truncf %232 : vector<8x1152xf32> to vector<8x1152xbf16>
      %c56 = arith.constant 56 : index
      %c0_54 = arith.constant 0 : index
      %234 = vector.load %arg7[%c56, %c0_54] : memref<328x1152xbf16, #tpu.memory_space<vmem>>, vector<8x1152xbf16>
      tpu.vector_store %arg7[%c56, %c0_54], %233 {strides = array<i32>} : memref<328x1152xbf16, #tpu.memory_space<vmem>>, vector<8x1152xbf16>,
      %235 = vector.extract_strided_slice %210 {offsets = [0, 77], sizes = [8, 1152], strides = [1, 1]} : vector<8x1352xf32> to vector<8x1152xf32>
      %236 = arith.truncf %235 : vector<8x1152xf32> to vector<8x1152xbf16>
      %c64 = arith.constant 64 : index
      %c0_55 = arith.constant 0 : index
      %237 = vector.load %arg7[%c64, %c0_55] : memref<328x1152xbf16, #tpu.memory_space<vmem>>, vector<8x1152xbf16>
      tpu.vector_store %arg7[%c64, %c0_55], %236 {strides = array<i32>} : memref<328x1152xbf16, #tpu.memory_space<vmem>>, vector<8x1152xbf16>,
      %238 = vector.extract_strided_slice %210 {offsets = [0, 78], sizes = [8, 1152], strides = [1, 1]} : vector<8x1352xf32> to vector<8x1152xf32>
      %239 = arith.truncf %238 : vector<8x1152xf32> to vector<8x1152xbf16>
      %c72 = arith.constant 72 : index
      %c0_56 = arith.constant 0 : index
      %240 = vector.load %arg7[%c72, %c0_56] : memref<328x1152xbf16, #tpu.memory_space<vmem>>, vector<8x1152xbf16>
      tpu.vector_store %arg7[%c72, %c0_56], %239 {strides = array<i32>} : memref<328x1152xbf16, #tpu.memory_space<vmem>>, vector<8x1152xbf16>,
      %241 = vector.extract_strided_slice %210 {offsets = [0, 98], sizes = [8, 1152], strides = [1, 1]} : vector<8x1352xf32> to vector<8x1152xf32>
      %242 = arith.truncf %241 : vector<8x1152xf32> to vector<8x1152xbf16>
      %c80 = arith.constant 80 : index
      %c0_57 = arith.constant 0 : index
      %243 = vector.load %arg7[%c80, %c0_57] : memref<328x1152xbf16, #tpu.memory_space<vmem>>, vector<8x1152xbf16>
      tpu.vector_store %arg7[%c80, %c0_57], %242 {strides = array<i32>} : memref<328x1152xbf16, #tpu.memory_space<vmem>>, vector<8x1152xbf16>,
      %244 = vector.extract_strided_slice %210 {offsets = [0, 99], sizes = [8, 1152], strides = [1, 1]} : vector<8x1352xf32> to vector<8x1152xf32>
      %245 = arith.truncf %244 : vector<8x1152xf32> to vector<8x1152xbf16>
      %c88 = arith.constant 88 : index
      %c0_58 = arith.constant 0 : index
      %246 = vector.load %arg7[%c88, %c0_58] : memref<328x1152xbf16, #tpu.memory_space<vmem>>, vector<8x1152xbf16>
      tpu.vector_store %arg7[%c88, %c0_58], %245 {strides = array<i32>} : memref<328x1152xbf16, #tpu.memory_space<vmem>>, vector<8x1152xbf16>,
      %247 = vector.extract_strided_slice %210 {offsets = [0, 100], sizes = [8, 1152], strides = [1, 1]} : vector<8x1352xf32> to vector<8x1152xf32>
      %248 = arith.truncf %247 : vector<8x1152xf32> to vector<8x1152xbf16>
      %c96 = arith.constant 96 : index
      %c0_59 = arith.constant 0 : index
      %249 = vector.load %arg7[%c96, %c0_59] : memref<328x1152xbf16, #tpu.memory_space<vmem>>, vector<8x1152xbf16>
      tpu.vector_store %arg7[%c96, %c0_59], %248 {strides = array<i32>} : memref<328x1152xbf16, #tpu.memory_space<vmem>>, vector<8x1152xbf16>,
      %250 = vector.extract_strided_slice %210 {offsets = [0, 101], sizes = [8, 1152], strides = [1, 1]} : vector<8x1352xf32> to vector<8x1152xf32>
      %251 = arith.truncf %250 : vector<8x1152xf32> to vector<8x1152xbf16>
      %c104 = arith.constant 104 : index
      %c0_60 = arith.constant 0 : index
      %252 = vector.load %arg7[%c104, %c0_60] : memref<328x1152xbf16, #tpu.memory_space<vmem>>, vector<8x1152xbf16>
      tpu.vector_store %arg7[%c104, %c0_60], %251 {strides = array<i32>} : memref<328x1152xbf16, #tpu.memory_space<vmem>>, vector<8x1152xbf16>,
      %253 = vector.extract_strided_slice %210 {offsets = [0, 102], sizes = [8, 1152], strides = [1, 1]} : vector<8x1352xf32> to vector<8x1152xf32>
      %254 = arith.truncf %253 : vector<8x1152xf32> to vector<8x1152xbf16>
      %c112 = arith.constant 112 : index
      %c0_61 = arith.constant 0 : index
      %255 = vector.load %arg7[%c112, %c0_61] : memref<328x1152xbf16, #tpu.memory_space<vmem>>, vector<8x1152xbf16>
      tpu.vector_store %arg7[%c112, %c0_61], %254 {strides = array<i32>} : memref<328x1152xbf16, #tpu.memory_space<vmem>>, vector<8x1152xbf16>,
      %256 = vector.extract_strided_slice %210 {offsets = [0, 122], sizes = [8, 1152], strides = [1, 1]} : vector<8x1352xf32> to vector<8x1152xf32>
      %257 = arith.truncf %256 : vector<8x1152xf32> to vector<8x1152xbf16>
      %c120 = arith.constant 120 : index
      %c0_62 = arith.constant 0 : index
      %258 = vector.load %arg7[%c120, %c0_62] : memref<328x1152xbf16, #tpu.memory_space<vmem>>, vector<8x1152xbf16>
      tpu.vector_store %arg7[%c120, %c0_62], %257 {strides = array<i32>} : memref<328x1152xbf16, #tpu.memory_space<vmem>>, vector<8x1152xbf16>,
      %259 = vector.extract_strided_slice %210 {offsets = [0, 123], sizes = [8, 1152], strides = [1, 1]} : vector<8x1352xf32> to vector<8x1152xf32>
      %260 = arith.truncf %259 : vector<8x1152xf32> to vector<8x1152xbf16>
      %c128 = arith.constant 128 : index
      %c0_63 = arith.constant 0 : index
      %261 = vector.load %arg7[%c128, %c0_63] : memref<328x1152xbf16, #tpu.memory_space<vmem>>, vector<8x1152xbf16>
      tpu.vector_store %arg7[%c128, %c0_63], %260 {strides = array<i32>} : memref<328x1152xbf16, #tpu.memory_space<vmem>>, vector<8x1152xbf16>,
      %262 = vector.extract_strided_slice %210 {offsets = [0, 124], sizes = [8, 1152], strides = [1, 1]} : vector<8x1352xf32> to vector<8x1152xf32>
      %263 = arith.truncf %262 : vector<8x1152xf32> to vector<8x1152xbf16>
      %c136 = arith.constant 136 : index
      %c0_64 = arith.constant 0 : index
      %264 = vector.load %arg7[%c136, %c0_64] : memref<328x1152xbf16, #tpu.memory_space<vmem>>, vector<8x1152xbf16>
      tpu.vector_store %arg7[%c136, %c0_64], %263 {strides = array<i32>} : memref<328x1152xbf16, #tpu.memory_space<vmem>>, vector<8x1152xbf16>,
      %265 = vector.extract_strided_slice %210 {offsets = [0, 125], sizes = [8, 1152], strides = [1, 1]} : vector<8x1352xf32> to vector<8x1152xf32>
      %266 = arith.truncf %265 : vector<8x1152xf32> to vector<8x1152xbf16>
      %c144 = arith.constant 144 : index
      %c0_65 = arith.constant 0 : index
      %267 = vector.load %arg7[%c144, %c0_65] : memref<328x1152xbf16, #tpu.memory_space<vmem>>, vector<8x1152xbf16>
      tpu.vector_store %arg7[%c144, %c0_65], %266 {strides = array<i32>} : memref<328x1152xbf16, #tpu.memory_space<vmem>>, vector<8x1152xbf16>,
      %268 = vector.extract_strided_slice %210 {offsets = [0, 126], sizes = [8, 1152], strides = [1, 1]} : vector<8x1352xf32> to vector<8x1152xf32>
      %269 = arith.truncf %268 : vector<8x1152xf32> to vector<8x1152xbf16>
      %c152 = arith.constant 152 : index
      %c0_66 = arith.constant 0 : index
      %270 = vector.load %arg7[%c152, %c0_66] : memref<328x1152xbf16, #tpu.memory_space<vmem>>, vector<8x1152xbf16>
      tpu.vector_store %arg7[%c152, %c0_66], %269 {strides = array<i32>} : memref<328x1152xbf16, #tpu.memory_space<vmem>>, vector<8x1152xbf16>,
      %271 = vector.extract_strided_slice %210 {offsets = [0, 146], sizes = [8, 1152], strides = [1, 1]} : vector<8x1352xf32> to vector<8x1152xf32>
      %272 = arith.truncf %271 : vector<8x1152xf32> to vector<8x1152xbf16>
      %c160 = arith.constant 160 : index
      %c0_67 = arith.constant 0 : index
      %273 = vector.load %arg7[%c160, %c0_67] : memref<328x1152xbf16, #tpu.memory_space<vmem>>, vector<8x1152xbf16>
      tpu.vector_store %arg7[%c160, %c0_67], %272 {strides = array<i32>} : memref<328x1152xbf16, #tpu.memory_space<vmem>>, vector<8x1152xbf16>,
      %274 = vector.extract_strided_slice %210 {offsets = [0, 147], sizes = [8, 1152], strides = [1, 1]} : vector<8x1352xf32> to vector<8x1152xf32>
      %275 = arith.truncf %274 : vector<8x1152xf32> to vector<8x1152xbf16>
      %c168 = arith.constant 168 : index
      %c0_68 = arith.constant 0 : index
      %276 = vector.load %arg7[%c168, %c0_68] : memref<328x1152xbf16, #tpu.memory_space<vmem>>, vector<8x1152xbf16>
      tpu.vector_store %arg7[%c168, %c0_68], %275 {strides = array<i32>} : memref<328x1152xbf16, #tpu.memory_space<vmem>>, vector<8x1152xbf16>,
      %277 = vector.extract_strided_slice %210 {offsets = [0, 148], sizes = [8, 1152], strides = [1, 1]} : vector<8x1352xf32> to vector<8x1152xf32>
      %278 = arith.truncf %277 : vector<8x1152xf32> to vector<8x1152xbf16>
      %c176 = arith.constant 176 : index
      %c0_69 = arith.constant 0 : index
      %279 = vector.load %arg7[%c176, %c0_69] : memref<328x1152xbf16, #tpu.memory_space<vmem>>, vector<8x1152xbf16>
      tpu.vector_store %arg7[%c176, %c0_69], %278 {strides = array<i32>} : memref<328x1152xbf16, #tpu.memory_space<vmem>>, vector<8x1152xbf16>,
      %280 = vector.extract_strided_slice %210 {offsets = [0, 149], sizes = [8, 1152], strides = [1, 1]} : vector<8x1352xf32> to vector<8x1152xf32>
      %281 = arith.truncf %280 : vector<8x1152xf32> to vector<8x1152xbf16>
      %c184 = arith.constant 184 : index
      %c0_70 = arith.constant 0 : index
      %282 = vector.load %arg7[%c184, %c0_70] : memref<328x1152xbf16, #tpu.memory_space<vmem>>, vector<8x1152xbf16>
      tpu.vector_store %arg7[%c184, %c0_70], %281 {strides = array<i32>} : memref<328x1152xbf16, #tpu.memory_space<vmem>>, vector<8x1152xbf16>,
      %283 = vector.extract_strided_slice %210 {offsets = [0, 150], sizes = [8, 1152], strides = [1, 1]} : vector<8x1352xf32> to vector<8x1152xf32>
      %284 = arith.truncf %283 : vector<8x1152xf32> to vector<8x1152xbf16>
      %c192 = arith.constant 192 : index
      %c0_71 = arith.constant 0 : index
      %285 = vector.load %arg7[%c192, %c0_71] : memref<328x1152xbf16, #tpu.memory_space<vmem>>, vector<8x1152xbf16>
      tpu.vector_store %arg7[%c192, %c0_71], %284 {strides = array<i32>} : memref<328x1152xbf16, #tpu.memory_space<vmem>>, vector<8x1152xbf16>,
      %286 = vector.extract_strided_slice %210 {offsets = [0, 0], sizes = [8, 1152], strides = [1, 1]} : vector<8x1352xf32> to vector<8x1152xf32>
      %287 = arith.truncf %286 : vector<8x1152xf32> to vector<8x1152xbf16>
      %c200 = arith.constant 200 : index
      %c0_72 = arith.constant 0 : index
      %288 = vector.load %arg7[%c200, %c0_72] : memref<328x1152xbf16, #tpu.memory_space<vmem>>, vector<8x1152xbf16>
      tpu.vector_store %arg7[%c200, %c0_72], %287 {strides = array<i32>} : memref<328x1152xbf16, #tpu.memory_space<vmem>>, vector<8x1152xbf16>,
      %289 = vector.extract_strided_slice %210 {offsets = [0, 2], sizes = [8, 1152], strides = [1, 1]} : vector<8x1352xf32> to vector<8x1152xf32>
      %290 = arith.truncf %289 : vector<8x1152xf32> to vector<8x1152xbf16>
      %c208 = arith.constant 208 : index
      %c0_73 = arith.constant 0 : index
      %291 = vector.load %arg7[%c208, %c0_73] : memref<328x1152xbf16, #tpu.memory_space<vmem>>, vector<8x1152xbf16>
      tpu.vector_store %arg7[%c208, %c0_73], %290 {strides = array<i32>} : memref<328x1152xbf16, #tpu.memory_space<vmem>>, vector<8x1152xbf16>,
      %292 = vector.extract_strided_slice %210 {offsets = [0, 4], sizes = [8, 1152], strides = [1, 1]} : vector<8x1352xf32> to vector<8x1152xf32>
      %293 = arith.truncf %292 : vector<8x1152xf32> to vector<8x1152xbf16>
      %c216 = arith.constant 216 : index
      %c0_74 = arith.constant 0 : index
      %294 = vector.load %arg7[%c216, %c0_74] : memref<328x1152xbf16, #tpu.memory_space<vmem>>, vector<8x1152xbf16>
      tpu.vector_store %arg7[%c216, %c0_74], %293 {strides = array<i32>} : memref<328x1152xbf16, #tpu.memory_space<vmem>>, vector<8x1152xbf16>,
      %295 = vector.extract_strided_slice %210 {offsets = [0, 6], sizes = [8, 1152], strides = [1, 1]} : vector<8x1352xf32> to vector<8x1152xf32>
      %296 = arith.truncf %295 : vector<8x1152xf32> to vector<8x1152xbf16>
      %c224 = arith.constant 224 : index
      %c0_75 = arith.constant 0 : index
      %297 = vector.load %arg7[%c224, %c0_75] : memref<328x1152xbf16, #tpu.memory_space<vmem>>, vector<8x1152xbf16>
      tpu.vector_store %arg7[%c224, %c0_75], %296 {strides = array<i32>} : memref<328x1152xbf16, #tpu.memory_space<vmem>>, vector<8x1152xbf16>,
      %298 = vector.extract_strided_slice %210 {offsets = [0, 8], sizes = [8, 1152], strides = [1, 1]} : vector<8x1352xf32> to vector<8x1152xf32>
      %299 = arith.truncf %298 : vector<8x1152xf32> to vector<8x1152xbf16>
      %c232 = arith.constant 232 : index
      %c0_76 = arith.constant 0 : index
      %300 = vector.load %arg7[%c232, %c0_76] : memref<328x1152xbf16, #tpu.memory_space<vmem>>, vector<8x1152xbf16>
      tpu.vector_store %arg7[%c232, %c0_76], %299 {strides = array<i32>} : memref<328x1152xbf16, #tpu.memory_space<vmem>>, vector<8x1152xbf16>,
      %301 = vector.extract_strided_slice %210 {offsets = [0, 48], sizes = [8, 1152], strides = [1, 1]} : vector<8x1352xf32> to vector<8x1152xf32>
      %302 = arith.truncf %301 : vector<8x1152xf32> to vector<8x1152xbf16>
      %c240 = arith.constant 240 : index
      %c0_77 = arith.constant 0 : index
      %303 = vector.load %arg7[%c240, %c0_77] : memref<328x1152xbf16, #tpu.memory_space<vmem>>, vector<8x1152xbf16>
      tpu.vector_store %arg7[%c240, %c0_77], %302 {strides = array<i32>} : memref<328x1152xbf16, #tpu.memory_space<vmem>>, vector<8x1152xbf16>,
      %304 = vector.extract_strided_slice %210 {offsets = [0, 56], sizes = [8, 1152], strides = [1, 1]} : vector<8x1352xf32> to vector<8x1152xf32>
      %305 = arith.truncf %304 : vector<8x1152xf32> to vector<8x1152xbf16>
      %c248 = arith.constant 248 : index
      %c0_78 = arith.constant 0 : index
      %306 = vector.load %arg7[%c248, %c0_78] : memref<328x1152xbf16, #tpu.memory_space<vmem>>, vector<8x1152xbf16>
      tpu.vector_store %arg7[%c248, %c0_78], %305 {strides = array<i32>} : memref<328x1152xbf16, #tpu.memory_space<vmem>>, vector<8x1152xbf16>,
      %307 = vector.extract_strided_slice %210 {offsets = [0, 96], sizes = [8, 1152], strides = [1, 1]} : vector<8x1352xf32> to vector<8x1152xf32>
      %308 = arith.truncf %307 : vector<8x1152xf32> to vector<8x1152xbf16>
      %c256 = arith.constant 256 : index
      %c0_79 = arith.constant 0 : index
      %309 = vector.load %arg7[%c256, %c0_79] : memref<328x1152xbf16, #tpu.memory_space<vmem>>, vector<8x1152xbf16>
      tpu.vector_store %arg7[%c256, %c0_79], %308 {strides = array<i32>} : memref<328x1152xbf16, #tpu.memory_space<vmem>>, vector<8x1152xbf16>,
      %310 = vector.extract_strided_slice %210 {offsets = [0, 104], sizes = [8, 1152], strides = [1, 1]} : vector<8x1352xf32> to vector<8x1152xf32>
      %311 = arith.truncf %310 : vector<8x1152xf32> to vector<8x1152xbf16>
      %c264 = arith.constant 264 : index
      %c0_80 = arith.constant 0 : index
      %312 = vector.load %arg7[%c264, %c0_80] : memref<328x1152xbf16, #tpu.memory_space<vmem>>, vector<8x1152xbf16>
      tpu.vector_store %arg7[%c264, %c0_80], %311 {strides = array<i32>} : memref<328x1152xbf16, #tpu.memory_space<vmem>>, vector<8x1152xbf16>,
      %313 = vector.extract_strided_slice %210 {offsets = [0, 144], sizes = [8, 1152], strides = [1, 1]} : vector<8x1352xf32> to vector<8x1152xf32>
      %314 = arith.truncf %313 : vector<8x1152xf32> to vector<8x1152xbf16>
      %c272 = arith.constant 272 : index
      %c0_81 = arith.constant 0 : index
      %315 = vector.load %arg7[%c272, %c0_81] : memref<328x1152xbf16, #tpu.memory_space<vmem>>, vector<8x1152xbf16>
      tpu.vector_store %arg7[%c272, %c0_81], %314 {strides = array<i32>} : memref<328x1152xbf16, #tpu.memory_space<vmem>>, vector<8x1152xbf16>,
      %316 = vector.extract_strided_slice %210 {offsets = [0, 152], sizes = [8, 1152], strides = [1, 1]} : vector<8x1352xf32> to vector<8x1152xf32>
      %317 = arith.truncf %316 : vector<8x1152xf32> to vector<8x1152xbf16>
      %c280 = arith.constant 280 : index
      %c0_82 = arith.constant 0 : index
      %318 = vector.load %arg7[%c280, %c0_82] : memref<328x1152xbf16, #tpu.memory_space<vmem>>, vector<8x1152xbf16>
      tpu.vector_store %arg7[%c280, %c0_82], %317 {strides = array<i32>} : memref<328x1152xbf16, #tpu.memory_space<vmem>>, vector<8x1152xbf16>,
      %319 = vector.extract_strided_slice %210 {offsets = [0, 192], sizes = [8, 1152], strides = [1, 1]} : vector<8x1352xf32> to vector<8x1152xf32>
      %320 = arith.truncf %319 : vector<8x1152xf32> to vector<8x1152xbf16>
      %c288 = arith.constant 288 : index
      %c0_83 = arith.constant 0 : index
      %321 = vector.load %arg7[%c288, %c0_83] : memref<328x1152xbf16, #tpu.memory_space<vmem>>, vector<8x1152xbf16>
      tpu.vector_store %arg7[%c288, %c0_83], %320 {strides = array<i32>} : memref<328x1152xbf16, #tpu.memory_space<vmem>>, vector<8x1152xbf16>,
      %322 = vector.extract_strided_slice %210 {offsets = [0, 194], sizes = [8, 1152], strides = [1, 1]} : vector<8x1352xf32> to vector<8x1152xf32>
      %323 = arith.truncf %322 : vector<8x1152xf32> to vector<8x1152xbf16>
      %c296 = arith.constant 296 : index
      %c0_84 = arith.constant 0 : index
      %324 = vector.load %arg7[%c296, %c0_84] : memref<328x1152xbf16, #tpu.memory_space<vmem>>, vector<8x1152xbf16>
      tpu.vector_store %arg7[%c296, %c0_84], %323 {strides = array<i32>} : memref<328x1152xbf16, #tpu.memory_space<vmem>>, vector<8x1152xbf16>,
      %325 = vector.extract_strided_slice %210 {offsets = [0, 196], sizes = [8, 1152], strides = [1, 1]} : vector<8x1352xf32> to vector<8x1152xf32>
      %326 = arith.truncf %325 : vector<8x1152xf32> to vector<8x1152xbf16>
      %c304 = arith.constant 304 : index
      %c0_85 = arith.constant 0 : index
      %327 = vector.load %arg7[%c304, %c0_85] : memref<328x1152xbf16, #tpu.memory_space<vmem>>, vector<8x1152xbf16>
      tpu.vector_store %arg7[%c304, %c0_85], %326 {strides = array<i32>} : memref<328x1152xbf16, #tpu.memory_space<vmem>>, vector<8x1152xbf16>,
      %328 = vector.extract_strided_slice %210 {offsets = [0, 198], sizes = [8, 1152], strides = [1, 1]} : vector<8x1352xf32> to vector<8x1152xf32>
      %329 = arith.truncf %328 : vector<8x1152xf32> to vector<8x1152xbf16>
      %c312 = arith.constant 312 : index
      %c0_86 = arith.constant 0 : index
      %330 = vector.load %arg7[%c312, %c0_86] : memref<328x1152xbf16, #tpu.memory_space<vmem>>, vector<8x1152xbf16>
      tpu.vector_store %arg7[%c312, %c0_86], %329 {strides = array<i32>} : memref<328x1152xbf16, #tpu.memory_space<vmem>>, vector<8x1152xbf16>,
      %331 = vector.extract_strided_slice %210 {offsets = [0, 200], sizes = [8, 1152], strides = [1, 1]} : vector<8x1352xf32> to vector<8x1152xf32>
      %332 = arith.truncf %331 : vector<8x1152xf32> to vector<8x1152xbf16>
      %c320 = arith.constant 320 : index
      %c0_87 = arith.constant 0 : index
      %333 = vector.load %arg7[%c320, %c0_87] : memref<328x1152xbf16, #tpu.memory_space<vmem>>, vector<8x1152xbf16>
      tpu.vector_store %arg7[%c320, %c0_87], %332 {strides = array<i32>} : memref<328x1152xbf16, #tpu.memory_space<vmem>>, vector<8x1152xbf16>,
    } else {
    }
    %c8_i32 = arith.constant 8 : i32
    %3 = arith.muli %arg0, %c8_i32 : i32
    %4 = tpu.assume_multiple %3, 8 : i32
    %5 = arith.index_cast %4 : i32 to index
    %c0 = arith.constant 0 : index
    %6 = vector.load %arg2[%5, %c0] : memref<8x1352xf32, #tpu.memory_space<vmem>>, vector<8x1352xf32>
    %c0_1 = arith.constant 0 : index
    %c0_2 = arith.constant 0 : index
    %7 = vector.load %arg3[%c0_1, %c0_2] : memref<1x1352xf32, #tpu.memory_space<vmem>>, vector<1x1352xf32>
    %8 = vector.extract_strided_slice %7 {offsets = [0, 100], sizes = [1, 1152], strides = [1, 1]} : vector<1x1352xf32> to vector<1x1152xf32>
    %c3 = arith.constant 3 : index
    %9 = memref.load %arg1[%c3] : memref<8xf32, #tpu.memory_space<smem>>
    %10 = vector.extract_strided_slice %6 {offsets = [0, 100], sizes = [8, 1152], strides = [1, 1]} : vector<8x1352xf32> to vector<8x1152xf32>
    %11 = vector.broadcast %9 : f32 to vector<8x1152xf32>
    %12 = arith.mulf %11, %10 : vector<8x1152xf32>
    %cst = arith.constant 5.000000e-01 : f32
    %13 = vector.broadcast %cst : f32 to vector<1x1352xf32>
    %14 = arith.cmpf ogt, %7, %13 : vector<1x1352xf32>
    %cst_3 = arith.constant -1.000000e+30 : f32
    %15 = vector.shape_cast %14 : vector<1x1352xi1> to vector<1x1352xi1>
    %16 = vector.broadcast %15 : vector<1x1352xi1> to vector<8x1352xi1>
    %17 = vector.broadcast %cst_3 : f32 to vector<8x1352xf32>
    %18 = arith.select %16, %6, %17 : vector<8x1352xi1>, vector<8x1352xf32>
    %19 = vector.extract_strided_slice %18 {offsets = [0, 75], sizes = [8, 1152], strides = [1, 1]} : vector<8x1352xf32> to vector<8x1152xf32>
    %20 = vector.extract_strided_slice %6 {offsets = [0, 75], sizes = [8, 1152], strides = [1, 1]} : vector<8x1352xf32> to vector<8x1152xf32>
    %21 = vector.extract_strided_slice %18 {offsets = [0, 76], sizes = [8, 1152], strides = [1, 1]} : vector<8x1352xf32> to vector<8x1152xf32>
    %22 = arith.maximumf %19, %21 : vector<8x1152xf32>
    %23 = vector.extract_strided_slice %6 {offsets = [0, 76], sizes = [8, 1152], strides = [1, 1]} : vector<8x1352xf32> to vector<8x1152xf32>
    %24 = arith.addf %20, %23 : vector<8x1152xf32>
    %25 = vector.extract_strided_slice %18 {offsets = [0, 77], sizes = [8, 1152], strides = [1, 1]} : vector<8x1352xf32> to vector<8x1152xf32>
    %26 = arith.maximumf %22, %25 : vector<8x1152xf32>
    %27 = vector.extract_strided_slice %6 {offsets = [0, 77], sizes = [8, 1152], strides = [1, 1]} : vector<8x1352xf32> to vector<8x1152xf32>
    %28 = arith.addf %24, %27 : vector<8x1152xf32>
    %29 = vector.extract_strided_slice %18 {offsets = [0, 99], sizes = [8, 1152], strides = [1, 1]} : vector<8x1352xf32> to vector<8x1152xf32>
    %30 = arith.maximumf %26, %29 : vector<8x1152xf32>
    %31 = vector.extract_strided_slice %6 {offsets = [0, 99], sizes = [8, 1152], strides = [1, 1]} : vector<8x1352xf32> to vector<8x1152xf32>
    %32 = arith.addf %28, %31 : vector<8x1152xf32>
    %33 = vector.extract_strided_slice %18 {offsets = [0, 100], sizes = [8, 1152], strides = [1, 1]} : vector<8x1352xf32> to vector<8x1152xf32>
    %34 = arith.maximumf %30, %33 : vector<8x1152xf32>
    %35 = vector.extract_strided_slice %6 {offsets = [0, 100], sizes = [8, 1152], strides = [1, 1]} : vector<8x1352xf32> to vector<8x1152xf32>
    %36 = arith.addf %32, %35 : vector<8x1152xf32>
    %37 = vector.extract_strided_slice %18 {offsets = [0, 101], sizes = [8, 1152], strides = [1, 1]} : vector<8x1352xf32> to vector<8x1152xf32>
    %38 = arith.maximumf %34, %37 : vector<8x1152xf32>
    %39 = vector.extract_strided_slice %6 {offsets = [0, 101], sizes = [8, 1152], strides = [1, 1]} : vector<8x1352xf32> to vector<8x1152xf32>
    %40 = arith.addf %36, %39 : vector<8x1152xf32>
    %41 = vector.extract_strided_slice %18 {offsets = [0, 123], sizes = [8, 1152], strides = [1, 1]} : vector<8x1352xf32> to vector<8x1152xf32>
    %42 = arith.maximumf %38, %41 : vector<8x1152xf32>
    %43 = vector.extract_strided_slice %6 {offsets = [0, 123], sizes = [8, 1152], strides = [1, 1]} : vector<8x1352xf32> to vector<8x1152xf32>
    %44 = arith.addf %40, %43 : vector<8x1152xf32>
    %45 = vector.extract_strided_slice %18 {offsets = [0, 124], sizes = [8, 1152], strides = [1, 1]} : vector<8x1352xf32> to vector<8x1152xf32>
    %46 = arith.maximumf %42, %45 : vector<8x1152xf32>
    %47 = vector.extract_strided_slice %6 {offsets = [0, 124], sizes = [8, 1152], strides = [1, 1]} : vector<8x1352xf32> to vector<8x1152xf32>
    %48 = arith.addf %44, %47 : vector<8x1152xf32>
    %49 = vector.extract_strided_slice %18 {offsets = [0, 125], sizes = [8, 1152], strides = [1, 1]} : vector<8x1352xf32> to vector<8x1152xf32>
    %50 = arith.maximumf %46, %49 : vector<8x1152xf32>
    %51 = vector.extract_strided_slice %6 {offsets = [0, 125], sizes = [8, 1152], strides = [1, 1]} : vector<8x1352xf32> to vector<8x1152xf32>
    %52 = arith.addf %48, %51 : vector<8x1152xf32>
    %c0_4 = arith.constant 0 : index
    %c0_5 = arith.constant 0 : index
    %53 = vector.load %arg4[%c0_4, %c0_5] : memref<1x1152xf32, #tpu.memory_space<vmem>>, vector<1x1152xf32>
    %54 = vector.broadcast %53 : vector<1x1152xf32> to vector<8x1152xf32>
    %55 = arith.mulf %52, %54 : vector<8x1152xf32>
    %c1 = arith.constant 1 : index
    %56 = memref.load %arg1[%c1] : memref<8xf32, #tpu.memory_space<smem>>
    %57 = vector.broadcast %8 : vector<1x1152xf32> to vector<8x1152xf32>
    %58 = arith.mulf %50, %57 : vector<8x1152xf32>
    %cst_6 = arith.constant dense<0.000000e+00> : vector<8xf32>
    %59 = vector.multi_reduction <add>, %58, %cst_6 [1] : vector<8x1152xf32> to vector<8xf32>
    %60 = vector.shape_cast %59 : vector<8xf32> to vector<8x1xf32>
    %61 = arith.mulf %58, %58 : vector<8x1152xf32>
    %cst_7 = arith.constant dense<0.000000e+00> : vector<8xf32>
    %62 = vector.multi_reduction <add>, %61, %cst_7 [1] : vector<8x1152xf32> to vector<8xf32>
    %63 = vector.shape_cast %62 : vector<8xf32> to vector<8x1xf32>
    %cst_8 = arith.constant 0.001953125 : f32
    %64 = vector.broadcast %cst_8 : f32 to vector<8x1xf32>
    %65 = arith.mulf %60, %64 : vector<8x1xf32>
    %cst_9 = arith.constant 0.001953125 : f32
    %66 = vector.broadcast %cst_9 : f32 to vector<8x1xf32>
    %67 = arith.mulf %63, %66 : vector<8x1xf32>
    %68 = arith.mulf %65, %65 : vector<8x1xf32>
    %69 = arith.subf %67, %68 : vector<8x1xf32>
    %cst_10 = arith.constant 9.99999974E-6 : f32
    %70 = vector.broadcast %cst_10 : f32 to vector<8x1xf32>
    %71 = arith.addf %69, %70 : vector<8x1xf32>
    %72 = math.rsqrt %71 : vector<8x1xf32>
    %73 = vector.broadcast %56 : f32 to vector<8x1xf32>
    %74 = arith.mulf %73, %72 : vector<8x1xf32>
    %75 = vector.broadcast %65 : vector<8x1xf32> to vector<8x1152xf32>
    %76 = arith.subf %58, %75 : vector<8x1152xf32>
    %77 = vector.broadcast %74 : vector<8x1xf32> to vector<8x1152xf32>
    %78 = arith.mulf %77, %76 : vector<8x1152xf32>
    %79 = arith.addf %12, %78 : vector<8x1152xf32>
    %c2 = arith.constant 2 : index
    %80 = memref.load %arg1[%c2] : memref<8xf32, #tpu.memory_space<smem>>
    %81 = vector.broadcast %8 : vector<1x1152xf32> to vector<8x1152xf32>
    %82 = arith.mulf %55, %81 : vector<8x1152xf32>
    %cst_11 = arith.constant dense<0.000000e+00> : vector<8xf32>
    %83 = vector.multi_reduction <add>, %82, %cst_11 [1] : vector<8x1152xf32> to vector<8xf32>
    %84 = vector.shape_cast %83 : vector<8xf32> to vector<8x1xf32>
    %85 = arith.mulf %82, %82 : vector<8x1152xf32>
    %cst_12 = arith.constant dense<0.000000e+00> : vector<8xf32>
    %86 = vector.multi_reduction <add>, %85, %cst_12 [1] : vector<8x1152xf32> to vector<8xf32>
    %87 = vector.shape_cast %86 : vector<8xf32> to vector<8x1xf32>
    %cst_13 = arith.constant 0.001953125 : f32
    %88 = vector.broadcast %cst_13 : f32 to vector<8x1xf32>
    %89 = arith.mulf %84, %88 : vector<8x1xf32>
    %cst_14 = arith.constant 0.001953125 : f32
    %90 = vector.broadcast %cst_14 : f32 to vector<8x1xf32>
    %91 = arith.mulf %87, %90 : vector<8x1xf32>
    %92 = arith.mulf %89, %89 : vector<8x1xf32>
    %93 = arith.subf %91, %92 : vector<8x1xf32>
    %cst_15 = arith.constant 9.99999974E-6 : f32
    %94 = vector.broadcast %cst_15 : f32 to vector<8x1xf32>
    %95 = arith.addf %93, %94 : vector<8x1xf32>
    %96 = math.rsqrt %95 : vector<8x1xf32>
    %97 = vector.broadcast %80 : f32 to vector<8x1xf32>
    %98 = arith.mulf %97, %96 : vector<8x1xf32>
    %99 = vector.broadcast %89 : vector<8x1xf32> to vector<8x1152xf32>
    %100 = arith.subf %82, %99 : vector<8x1152xf32>
    %101 = vector.broadcast %98 : vector<8x1xf32> to vector<8x1152xf32>
    %102 = arith.mulf %101, %100 : vector<8x1152xf32>
    %103 = arith.addf %79, %102 : vector<8x1152xf32>
    %c0_16 = arith.constant 0 : index
    %c0_17 = arith.constant 0 : index
    %104 = vector.load %arg5[%c0_16, %c0_17] : memref<32x328xbf16, #tpu.memory_space<vmem>>, vector<32x328xbf16>
    %c0_18 = arith.constant 0 : index
    %c0_19 = arith.constant 0 : index
    %105 = vector.load %arg7[%c0_18, %c0_19] : memref<328x1152xbf16, #tpu.memory_space<vmem>>, vector<328x1152xbf16>
    %cst_20 = arith.constant dense<0.000000e+00> : vector<32x1152xf32>
    %106 = tpu.matmul %104, %105, %cst_20 {dimension_numbers = #tpu.dot_dimension_numbers<[1], [0], [0], [1], [0, 0, 1, 1], [], []>} : vector<32x328xbf16>, vector<328x1152xbf16>, vector<32x1152xf32> -> vector<32x1152xf32>
    %107 = vector.extract_strided_slice %106 {offsets = [0, 0], sizes = [8, 1152], strides = [1, 1]} : vector<32x1152xf32> to vector<8x1152xf32>
    %c4 = arith.constant 4 : index
    %108 = memref.load %arg1[%c4] : memref<8xf32, #tpu.memory_space<smem>>
    %109 = vector.broadcast %8 : vector<1x1152xf32> to vector<8x1152xf32>
    %110 = arith.mulf %107, %109 : vector<8x1152xf32>
    %cst_21 = arith.constant dense<0.000000e+00> : vector<8xf32>
    %111 = vector.multi_reduction <add>, %110, %cst_21 [1] : vector<8x1152xf32> to vector<8xf32>
    %112 = vector.shape_cast %111 : vector<8xf32> to vector<8x1xf32>
    %113 = arith.mulf %110, %110 : vector<8x1152xf32>
    %cst_22 = arith.constant dense<0.000000e+00> : vector<8xf32>
    %114 = vector.multi_reduction <add>, %113, %cst_22 [1] : vector<8x1152xf32> to vector<8xf32>
    %115 = vector.shape_cast %114 : vector<8xf32> to vector<8x1xf32>
    %cst_23 = arith.constant 0.001953125 : f32
    %116 = vector.broadcast %cst_23 : f32 to vector<8x1xf32>
    %117 = arith.mulf %112, %116 : vector<8x1xf32>
    %cst_24 = arith.constant 0.001953125 : f32
    %118 = vector.broadcast %cst_24 : f32 to vector<8x1xf32>
    %119 = arith.mulf %115, %118 : vector<8x1xf32>
    %120 = arith.mulf %117, %117 : vector<8x1xf32>
    %121 = arith.subf %119, %120 : vector<8x1xf32>
    %cst_25 = arith.constant 9.99999974E-6 : f32
    %122 = vector.broadcast %cst_25 : f32 to vector<8x1xf32>
    %123 = arith.addf %121, %122 : vector<8x1xf32>
    %124 = math.rsqrt %123 : vector<8x1xf32>
    %125 = vector.broadcast %108 : f32 to vector<8x1xf32>
    %126 = arith.mulf %125, %124 : vector<8x1xf32>
    %127 = vector.broadcast %117 : vector<8x1xf32> to vector<8x1152xf32>
    %128 = arith.subf %110, %127 : vector<8x1152xf32>
    %129 = vector.broadcast %126 : vector<8x1xf32> to vector<8x1152xf32>
    %130 = arith.mulf %129, %128 : vector<8x1152xf32>
    %131 = arith.addf %103, %130 : vector<8x1152xf32>
    %132 = vector.extract_strided_slice %106 {offsets = [8, 0], sizes = [8, 1152], strides = [1, 1]} : vector<32x1152xf32> to vector<8x1152xf32>
    %c5 = arith.constant 5 : index
    %133 = memref.load %arg1[%c5] : memref<8xf32, #tpu.memory_space<smem>>
    %134 = vector.broadcast %8 : vector<1x1152xf32> to vector<8x1152xf32>
    %135 = arith.mulf %132, %134 : vector<8x1152xf32>
    %cst_26 = arith.constant dense<0.000000e+00> : vector<8xf32>
    %136 = vector.multi_reduction <add>, %135, %cst_26 [1] : vector<8x1152xf32> to vector<8xf32>
    %137 = vector.shape_cast %136 : vector<8xf32> to vector<8x1xf32>
    %138 = arith.mulf %135, %135 : vector<8x1152xf32>
    %cst_27 = arith.constant dense<0.000000e+00> : vector<8xf32>
    %139 = vector.multi_reduction <add>, %138, %cst_27 [1] : vector<8x1152xf32> to vector<8xf32>
    %140 = vector.shape_cast %139 : vector<8xf32> to vector<8x1xf32>
    %cst_28 = arith.constant 0.001953125 : f32
    %141 = vector.broadcast %cst_28 : f32 to vector<8x1xf32>
    %142 = arith.mulf %137, %141 : vector<8x1xf32>
    %cst_29 = arith.constant 0.001953125 : f32
    %143 = vector.broadcast %cst_29 : f32 to vector<8x1xf32>
    %144 = arith.mulf %140, %143 : vector<8x1xf32>
    %145 = arith.mulf %142, %142 : vector<8x1xf32>
    %146 = arith.subf %144, %145 : vector<8x1xf32>
    %cst_30 = arith.constant 9.99999974E-6 : f32
    %147 = vector.broadcast %cst_30 : f32 to vector<8x1xf32>
    %148 = arith.addf %146, %147 : vector<8x1xf32>
    %149 = math.rsqrt %148 : vector<8x1xf32>
    %150 = vector.broadcast %133 : f32 to vector<8x1xf32>
    %151 = arith.mulf %150, %149 : vector<8x1xf32>
    %152 = vector.broadcast %142 : vector<8x1xf32> to vector<8x1152xf32>
    %153 = arith.subf %135, %152 : vector<8x1152xf32>
    %154 = vector.broadcast %151 : vector<8x1xf32> to vector<8x1152xf32>
    %155 = arith.mulf %154, %153 : vector<8x1152xf32>
    %156 = arith.addf %131, %155 : vector<8x1152xf32>
    %157 = vector.extract_strided_slice %106 {offsets = [16, 0], sizes = [8, 1152], strides = [1, 1]} : vector<32x1152xf32> to vector<8x1152xf32>
    %c6 = arith.constant 6 : index
    %158 = memref.load %arg1[%c6] : memref<8xf32, #tpu.memory_space<smem>>
    %159 = vector.broadcast %8 : vector<1x1152xf32> to vector<8x1152xf32>
    %160 = arith.mulf %157, %159 : vector<8x1152xf32>
    %cst_31 = arith.constant dense<0.000000e+00> : vector<8xf32>
    %161 = vector.multi_reduction <add>, %160, %cst_31 [1] : vector<8x1152xf32> to vector<8xf32>
    %162 = vector.shape_cast %161 : vector<8xf32> to vector<8x1xf32>
    %163 = arith.mulf %160, %160 : vector<8x1152xf32>
    %cst_32 = arith.constant dense<0.000000e+00> : vector<8xf32>
    %164 = vector.multi_reduction <add>, %163, %cst_32 [1] : vector<8x1152xf32> to vector<8xf32>
    %165 = vector.shape_cast %164 : vector<8xf32> to vector<8x1xf32>
    %cst_33 = arith.constant 0.001953125 : f32
    %166 = vector.broadcast %cst_33 : f32 to vector<8x1xf32>
    %167 = arith.mulf %162, %166 : vector<8x1xf32>
    %cst_34 = arith.constant 0.001953125 : f32
    %168 = vector.broadcast %cst_34 : f32 to vector<8x1xf32>
    %169 = arith.mulf %165, %168 : vector<8x1xf32>
    %170 = arith.mulf %167, %167 : vector<8x1xf32>
    %171 = arith.subf %169, %170 : vector<8x1xf32>
    %cst_35 = arith.constant 9.99999974E-6 : f32
    %172 = vector.broadcast %cst_35 : f32 to vector<8x1xf32>
    %173 = arith.addf %171, %172 : vector<8x1xf32>
    %174 = math.rsqrt %173 : vector<8x1xf32>
    %175 = vector.broadcast %158 : f32 to vector<8x1xf32>
    %176 = arith.mulf %175, %174 : vector<8x1xf32>
    %177 = vector.broadcast %167 : vector<8x1xf32> to vector<8x1152xf32>
    %178 = arith.subf %160, %177 : vector<8x1152xf32>
    %179 = vector.broadcast %176 : vector<8x1xf32> to vector<8x1152xf32>
    %180 = arith.mulf %179, %178 : vector<8x1152xf32>
    %181 = arith.addf %156, %180 : vector<8x1152xf32>
    %182 = vector.extract_strided_slice %106 {offsets = [24, 0], sizes = [8, 1152], strides = [1, 1]} : vector<32x1152xf32> to vector<8x1152xf32>
    %c7 = arith.constant 7 : index
    %183 = memref.load %arg1[%c7] : memref<8xf32, #tpu.memory_space<smem>>
    %184 = vector.broadcast %8 : vector<1x1152xf32> to vector<8x1152xf32>
    %185 = arith.mulf %182, %184 : vector<8x1152xf32>
    %cst_36 = arith.constant dense<0.000000e+00> : vector<8xf32>
    %186 = vector.multi_reduction <add>, %185, %cst_36 [1] : vector<8x1152xf32> to vector<8xf32>
    %187 = vector.shape_cast %186 : vector<8xf32> to vector<8x1xf32>
    %188 = arith.mulf %185, %185 : vector<8x1152xf32>
    %cst_37 = arith.constant dense<0.000000e+00> : vector<8xf32>
    %189 = vector.multi_reduction <add>, %188, %cst_37 [1] : vector<8x1152xf32> to vector<8xf32>
    %190 = vector.shape_cast %189 : vector<8xf32> to vector<8x1xf32>
    %cst_38 = arith.constant 0.001953125 : f32
    %191 = vector.broadcast %cst_38 : f32 to vector<8x1xf32>
    %192 = arith.mulf %187, %191 : vector<8x1xf32>
    %cst_39 = arith.constant 0.001953125 : f32
    %193 = vector.broadcast %cst_39 : f32 to vector<8x1xf32>
    %194 = arith.mulf %190, %193 : vector<8x1xf32>
    %195 = arith.mulf %192, %192 : vector<8x1xf32>
    %196 = arith.subf %194, %195 : vector<8x1xf32>
    %cst_40 = arith.constant 9.99999974E-6 : f32
    %197 = vector.broadcast %cst_40 : f32 to vector<8x1xf32>
    %198 = arith.addf %196, %197 : vector<8x1xf32>
    %199 = math.rsqrt %198 : vector<8x1xf32>
    %200 = vector.broadcast %183 : f32 to vector<8x1xf32>
    %201 = arith.mulf %200, %199 : vector<8x1xf32>
    %202 = vector.broadcast %192 : vector<8x1xf32> to vector<8x1152xf32>
    %203 = arith.subf %185, %202 : vector<8x1152xf32>
    %204 = vector.broadcast %201 : vector<8x1xf32> to vector<8x1152xf32>
    %205 = arith.mulf %204, %203 : vector<8x1152xf32>
    %206 = arith.addf %181, %205 : vector<8x1152xf32>
    %c0_41 = arith.constant 0 : index
    %c0_42 = arith.constant 0 : index
    %207 = vector.load %arg6[%c0_41, %c0_42] : memref<8x1152xf32, #tpu.memory_space<vmem>>, vector<8x1152xf32>
    tpu.vector_store %arg6[%c0_41, %c0_42], %206 {strides = array<i32>} : memref<8x1152xf32, #tpu.memory_space<vmem>>, vector<8x1152xf32>,
    return
  }
  func.func @transform_0(%arg0: i32) -> i32 {
    %c0_i32 = arith.constant 0 : i32
    %c0_i32_0 = arith.constant 0 : i32
    return %c0_i32 : i32
  }
  func.func @transform_1(%arg0: i32) -> (i32, i32) {
    %c0_i32 = arith.constant 0 : i32
    %c0_i32_0 = arith.constant 0 : i32
    %c0_i32_1 = arith.constant 0 : i32
    return %c0_i32, %c0_i32_0 : i32, i32
  }
  func.func @transform_2(%arg0: i32) -> (i32, i32) {
    %c0_i32 = arith.constant 0 : i32
    %c0_i32_0 = arith.constant 0 : i32
    %c0_i32_1 = arith.constant 0 : i32
    return %c0_i32, %c0_i32_0 : i32, i32
  }
  func.func @transform_3(%arg0: i32) -> (i32, i32) {
    %c0_i32 = arith.constant 0 : i32
    %c0_i32_0 = arith.constant 0 : i32
    %c0_i32_1 = arith.constant 0 : i32
    return %c0_i32, %c0_i32_0 : i32, i32
  }
  func.func @transform_4(%arg0: i32) -> (i32, i32) {
    %c0_i32 = arith.constant 0 : i32
    %c0_i32_0 = arith.constant 0 : i32
    return %arg0, %c0_i32 : i32, i32
  }
  func.func @transform_5(%arg0: i32) -> (i32, i32) {
    %c0_i32 = arith.constant 0 : i32
    %c0_i32_0 = arith.constant 0 : i32
    return %arg0, %c0_i32 : i32, i32
  }
}

</mosaic_0001>

<llo_original>
// kernel: tpu_custom_call.1
$region0: #{tpu_custom_call.1}
  #allocation0 [shape = 'u32[]', space=smem, size = 0x4, offset = 0x4, fixed_abs, tag = 'smem constant byte address 0x4 - core index']
  #allocation1 [shape = 'u32[72,128]{1,0:T(1,128)}', space=vmem, size = 0x9000, scoped, tag = 'internal scratch']
  #allocation2 [shape = 'bf16[328,1152]{1,0:T(8,128)(2,1)}', space=vmem, size = 0xb8800, scoped, tag = 'scratch operand']
  %s0 = inlined_call_operand.hbm [shape: f32[8], index: 0, kind: input, shape index: {}]
  %s1 = inlined_call_operand.hbm [shape: f32[8,1352], index: 1, kind: input, shape index: {}]
  %s2 = inlined_call_operand.hbm [shape: f32[1,1352], index: 2, kind: input, shape index: {}]
  %s3 = inlined_call_operand.hbm [shape: f32[1,1152], index: 3, kind: input, shape index: {}]
  %s4 = inlined_call_operand.hbm [shape: bf16[32,328], index: 4, kind: input, shape index: {}]
  %s5 = inlined_call_operand.hbm [shape: f32[8,1152], index: 5, kind: output, shape index: {}]
  %s6 = sld [smem:[#allocation0]]
  $region54: #{tpu_custom_call.1} parent=0
    _
  %s8 = ssub.s32 1, %s6
  %s9 = scalar_select 0, %s8, %s6
  $region1: #{tpu_custom_call.1} parent=0
    #allocation3 [shape = 'u8[512]{0}', space=smem, size = 0x200, scoped, tag = 'input window, operand 0, single buffered']
    #allocation4 [shape = 's32[1]{0}', space=sflag, size = 0x4, scoped, tag = 'scoped memory for tpu_custom_call.1']
    #allocation5 [shape = 's32[1]{0}', space=sflag, size = 0x4, scoped, tag = 'scoped memory for tpu_custom_call.1']
    #allocation6 [shape = 's32[1]{0}', space=sflag, size = 0x4, scoped, tag = 'scoped memory for tpu_custom_call.1']
    #allocation7 [shape = 'u8[45056]{0}', space=vmem, size = 0xb000, scoped, tag = 'input window, operand 1, single buffered']
    #allocation8 [shape = 'u8[5632]{0}', space=vmem, size = 0x1800, scoped, tag = 'input window, operand 2, single buffered']
    #allocation9 [shape = 's32[1]{0}', space=sflag, size = 0x4, scoped, tag = 'scoped memory for tpu_custom_call.1']
    #allocation10 [shape = 'u8[4608]{0}', space=vmem, size = 0x1400, scoped, tag = 'input window, operand 3, single buffered']
    #allocation11 [shape = 'u8[24576]{0}', space=vmem, size = 0x6000, scoped, tag = 'input window, operand 4, single buffered']
    #allocation12 [shape = 's32[1]{0}', space=sflag, size = 0x4, scoped, tag = 'scoped memory for tpu_custom_call.1']
    #allocation13 [shape = 'u8[36864]{0}', space=vmem, size = 0x9000, scoped, tag = 'output window, operand 0, single buffered']
    %10 = vsyncpa [#allocation6], 0
    %11 = vsyncpa [#allocation4], 0
    %12 = vsyncpa [#allocation9], 0
    %13 = vsyncpa [#allocation12], 0
    %14 = vsyncpa [#allocation5], 0
    // Predicated region
    $region2: #{tpu_custom_call.1} parent=1 // pred_check
      _
    $region3: #{tpu_custom_call.1} parent=1 // pred_check_branch
      %16 = sbr.rel (0) target = $region5
    $region4: #{tpu_custom_call.1} parent=1 // pred_region
      %18 = vsyncadd [#allocation6], 0
      %s20 = sshll.u32 %s0, 4
      %s21 = int_to_ptr.hbm [resolvable:$true] %s20
      %23 = dma.hbm_to_smem %s21, 16, [#allocation3], [#allocation6]
    $region5: #{tpu_custom_call.1} parent=1 // pred_fallthru
      _
    // Predicated region
    $region6: #{tpu_custom_call.1} parent=1 // pred_check
      _
    $region7: #{tpu_custom_call.1} parent=1 // pred_check_branch
      %25 = sbr.rel (0) target = $region9
    $region8: #{tpu_custom_call.1} parent=1 // pred_region
      %27 = vsyncadd [#allocation4], 0
      %s29 = sshll.u32 %s1, 4
      %s30 = int_to_ptr.hbm [resolvable:$true] %s29
      %s31 = sshll.u32 [#allocation7], 4
      %s32 = int_to_ptr.vmem [resolvable:$true] %s31
      %34 = dma.hbm_to_vmem [thread:$0]  %s30, 1408, %s32, [#allocation4]
    $region9: #{tpu_custom_call.1} parent=1 // pred_fallthru
      _
    // Predicated region
    $region10: #{tpu_custom_call.1} parent=1 // pred_check
      _
    $region11: #{tpu_custom_call.1} parent=1 // pred_check_branch
      %36 = sbr.rel (0) target = $region13
    $region12: #{tpu_custom_call.1} parent=1 // pred_region
      %38 = vsyncadd [#allocation9], 0
      %s40 = sshll.u32 %s2, 4
      %s41 = int_to_ptr.hbm [resolvable:$true] %s40
      %s42 = sshll.u32 [#allocation8], 4
      %s43 = int_to_ptr.vmem [resolvable:$true] %s42
      %45 = dma.hbm_to_vmem [thread:$0]  %s41, 176, %s43, [#allocation9]
    $region13: #{tpu_custom_call.1} parent=1 // pred_fallthru
      _
    // Predicated region
    $region14: #{tpu_custom_call.1} parent=1 // pred_check
      _
    $region15: #{tpu_custom_call.1} parent=1 // pred_check_branch
      %47 = sbr.rel (0) target = $region17
    $region16: #{tpu_custom_call.1} parent=1 // pred_region
      %49 = vsyncadd [#allocation9], 0
      %s51 = sshll.u32 %s3, 4
      %s52 = int_to_ptr.hbm [resolvable:$true] %s51
      %s53 = sshll.u32 [#allocation10], 4
      %s54 = int_to_ptr.vmem [resolvable:$true] %s53
      %56 = dma.hbm_to_vmem [thread:$0]  %s52, 144, %s54, [#allocation9]
    $region17: #{tpu_custom_call.1} parent=1 // pred_fallthru
      _
    // Predicated region
    $region18: #{tpu_custom_call.1} parent=1 // pred_check
      _
    $region19: #{tpu_custom_call.1} parent=1 // pred_check_branch
      %58 = sbr.rel (0) target = $region21
    $region20: #{tpu_custom_call.1} parent=1 // pred_region
      %60 = vsyncadd [#allocation12], 0
      %s61 = sshll.u32 %s4, 4
      %s62 = int_to_ptr.hbm [resolvable:$true] %s61
      %s63 = sshll.u32 [#allocation11], 4
      %s64 = int_to_ptr.vmem [resolvable:$true] %s63
      %69 = dma.hbm_to_vmem [thread:$0]  %s62, 768, %s64, [#allocation12], 192, 192, 12
    $region21: #{tpu_custom_call.1} parent=1 // pred_fallthru
      _
    // Predicated region
    $region22: #{tpu_custom_call.1} parent=1 // pred_check
      _
    $region23: #{tpu_custom_call.1} parent=1 // pred_check_branch
      %71 = sbr.rel (0) target = $region25
    $region24: #{tpu_custom_call.1} parent=1 // pred_region
      %73 = dma.done [#allocation6], 16
    $region25: #{tpu_custom_call.1} parent=1 // pred_fallthru
      _
    // Predicated region
    $region26: #{tpu_custom_call.1} parent=1 // pred_check
      _
    $region27: #{tpu_custom_call.1} parent=1 // pred_check_branch
      %75 = sbr.rel (0) target = $region29
    $region28: #{tpu_custom_call.1} parent=1 // pred_region
      %77 = dma.done [#allocation4], 1408
    $region29: #{tpu_custom_call.1} parent=1 // pred_fallthru
      _
    // Predicated region
    $region30: #{tpu_custom_call.1} parent=1 // pred_check
      _
    $region31: #{tpu_custom_call.1} parent=1 // pred_check_branch
      %79 = sbr.rel (0) target = $region33
    $region32: #{tpu_custom_call.1} parent=1 // pred_region
      %81 = dma.done [#allocation9], 176
    $region33: #{tpu_custom_call.1} parent=1 // pred_fallthru
      _
    // Predicated region
    $region34: #{tpu_custom_call.1} parent=1 // pred_check
      _
    $region35: #{tpu_custom_call.1} parent=1 // pred_check_branch
      %83 = sbr.rel (0) target = $region37
    $region36: #{tpu_custom_call.1} parent=1 // pred_region
      %85 = dma.done [#allocation9], 144
    $region37: #{tpu_custom_call.1} parent=1 // pred_fallthru
      _
    // Predicated region
    $region38: #{tpu_custom_call.1} parent=1 // pred_check
      _
    $region39: #{tpu_custom_call.1} parent=1 // pred_check_branch
      %87 = sbr.rel (0) target = $region41
    $region40: #{tpu_custom_call.1} parent=1 // pred_region
      %89 = dma.done [#allocation12], 768
    $region41: #{tpu_custom_call.1} parent=1 // pred_fallthru
      _
    %90 = sfence
    %p92 = scmp.eq.s32.totalorder 0, 0
    // Predicated region
    $region42: #{tpu_custom_call.1} parent=1 // pred_check
      %p93 = pneg %p92
    $region43: #{tpu_custom_call.1} parent=1 // pred_check_branch
      %95 = sbr.rel (%p93) target = $region45
    $region44: #{tpu_custom_call.1} parent=1 // pred_region
      %v96 = vld [vmem:[#allocation7] sm:$0xff]
      %v97 = vld [vmem:[#allocation7 + $0x8] sm:$0xff]
      %v98 = vld [vmem:[#allocation7 + $0x10] sm:$0xff]
      %v99 = vld [vmem:[#allocation7 + $0x18] sm:$0xff]
      %v100 = vld [vmem:[#allocation7 + $0x20] sm:$0xff]
      %v101 = vld [vmem:[#allocation7 + $0x28] sm:$0xff]
      %v102 = vld [vmem:[#allocation7 + $0x30] sm:$0xff]
      %v103 = vld [vmem:[#allocation7 + $0x38] sm:$0xff]
      %v104 = vld [vmem:[#allocation7 + $0x40] sm:$0xff]
      %v105 = vld [vmem:[#allocation7 + $0x48] sm:$0xff]
      %v106 = vld [vmem:[#allocation7 + $0x50] sm:$0xff]
      %v107 = vmax.f32 %v96, 0.0
      %v108 = vmax.f32 %v97, 0.0
      %v109 = vmax.f32 %v98, 0.0
      %v110 = vmax.f32 %v99, 0.0
      %v111 = vmax.f32 %v100, 0.0
      %v112 = vmax.f32 %v101, 0.0
      %v113 = vmax.f32 %v102, 0.0
      %v114 = vmax.f32 %v103, 0.0
      %v115 = vmax.f32 %v104, 0.0
      %v116 = vmax.f32 %v105, 0.0
      %v117 = vmax.f32 %v106, 0.0
      %v118 = vpack.c.bf16 %v108, %v107
      %v119 = vpack.c.bf16 %v110, %v109
      %v120 = vpack.c.bf16 %v112, %v111
      %v121 = vpack.c.bf16 %v114, %v113
      %v122 = vpack.c.bf16 %v116, %v115
      %128 = vrot.lane.b32.xlu0 %v118, 78
      %v129 = vpop.permute.xlu0 %128
      %130 = vrot.lane.b32.xlu0 %v119, 78
      %v131 = vpop.permute.xlu0 %130
      %132 = vrot.lane.b32.xlu0 %v120, 78
      %v133 = vpop.permute.xlu0 %132
      %134 = vrot.lane.b32.xlu0 %v121, 78
      %v135 = vpop.permute.xlu0 %134
      %136 = vrot.lane.b32.xlu0 %v122, 78
      %v137 = vpop.permute.xlu0 %136
      %v138 = vrot.slane %v129, 4
      %v139 = vrot.slane %v131, 4
      %v140 = vrot.slane %v133, 4
      %v141 = vrot.slane %v135, 4
      %v142 = vrot.slane %v137, 4
      %vm143 = vcmask 1043456
      %v144 = vsel %vm143, %v138, %v139
      %vm145 = vcmask 637952
      %v146 = vsel %vm145, %v129, %v144
      %v147 = vsel %vm143, %v139, %v140
      %v148 = vsel %vm145, %v131, %v147
      %v149 = vsel %vm143, %v140, %v141
      %v150 = vsel %vm145, %v133, %v149
      %v151 = vsel %vm143, %v141, %v142
      %v152 = vsel %vm145, %v135, %v151
      %v153 = vsel %vm145, %v137, %v142
      %159 = vst [vmem:[#allocation2] sm:$0xff] %v146
      %160 = vst [vmem:[#allocation2 + $0x8] sm:$0xff] %v148
      %161 = vst [vmem:[#allocation2 + $0x10] sm:$0xff] %v150
      %162 = vst [vmem:[#allocation2 + $0x18] sm:$0xff] %v152
      %163 = vst [vmem:[#allocation2 + $0x20] sm:$0xf] %v153
      %164 = vrot.lane.b32.xlu0 %v118, 77
      %v165 = vpop.permute.xlu0 %164
      %166 = vrot.lane.b32.xlu0 %v119, 77
      %v167 = vpop.permute.xlu0 %166
      %168 = vrot.lane.b32.xlu0 %v120, 77
      %v169 = vpop.permute.xlu0 %168
      %170 = vrot.lane.b32.xlu0 %v121, 77
      %v171 = vpop.permute.xlu0 %170
      %172 = vrot.lane.b32.xlu0 %v122, 77
      %v173 = vpop.permute.xlu0 %172
      %v174 = vrot.slane %v165, 4
      %v175 = vrot.slane %v167, 4
      %v176 = vrot.slane %v169, 4
      %v177 = vrot.slane %v171, 4
      %v178 = vrot.slane %v173, 4
      %v179 = vsel %vm143, %v174, %v175
      %vm180 = vcmask 629760
      %v181 = vsel %vm180, %v165, %v179
      %v182 = vsel %vm143, %v175, %v176
      %v183 = vsel %vm180, %v167, %v182
      %v184 = vsel %vm143, %v176, %v177
      %v185 = vsel %vm180, %v169, %v184
      %v186 = vsel %vm143, %v177, %v178
      %v187 = vsel %vm180, %v171, %v186
      %v188 = vsel %vm180, %v173, %v178
      %194 = vst [vmem:[#allocation2 + $0x24] sm:$0xff] %v181
      %195 = vst [vmem:[#allocation2 + $0x2c] sm:$0xff] %v183
      %196 = vst [vmem:[#allocation2 + $0x34] sm:$0xff] %v185
      %197 = vst [vmem:[#allocation2 + $0x3c] sm:$0xff] %v187
      %198 = vst [vmem:[#allocation2 + $0x44] sm:$0xf] %v188
      %199 = vrot.lane.b32.xlu0 %v118, 76
      %v200 = vpop.permute.xlu0 %199
      %201 = vrot.lane.b32.xlu0 %v119, 76
      %v202 = vpop.permute.xlu0 %201
      %203 = vrot.lane.b32.xlu0 %v120, 76
      %v204 = vpop.permute.xlu0 %203
      %205 = vrot.lane.b32.xlu0 %v121, 76
      %v206 = vpop.permute.xlu0 %205
      %207 = vrot.lane.b32.xlu0 %v122, 76
      %v208 = vpop.permute.xlu0 %207
      %v209 = vrot.slane %v200, 4
      %v210 = vrot.slane %v202, 4
      %v211 = vrot.slane %v204, 4
      %v212 = vrot.slane %v206, 4
      %v213 = vrot.slane %v208, 4
      %v214 = vsel %vm143, %v209, %v210
      %vm215 = vcmask 621568
      %v216 = vsel %vm215, %v200, %v214
      %v217 = vsel %vm143, %v210, %v211
      %v218 = vsel %vm215, %v202, %v217
      %v219 = vsel %vm143, %v211, %v212
      %v220 = vsel %vm215, %v204, %v219
      %v221 = vsel %vm143, %v212, %v213
      %v222 = vsel %vm215, %v206, %v221
      %v223 = vsel %vm215, %v208, %v213
      %229 = vst [vmem:[#allocation2 + $0x48] sm:$0xff] %v216
      %230 = vst [vmem:[#allocation2 + $0x50] sm:$0xff] %v218
      %231 = vst [vmem:[#allocation2 + $0x58] sm:$0xff] %v220
      %232 = vst [vmem:[#allocation2 + $0x60] sm:$0xff] %v222
      %233 = vst [vmem:[#allocation2 + $0x68] sm:$0xf] %v223
      %234 = vrot.lane.b32.xlu0 %v118, 75
      %v235 = vpop.permute.xlu0 %234
      %236 = vrot.lane.b32.xlu0 %v119, 75
      %v237 = vpop.permute.xlu0 %236
      %238 = vrot.lane.b32.xlu0 %v120, 75
      %v239 = vpop.permute.xlu0 %238
      %240 = vrot.lane.b32.xlu0 %v121, 75
      %v241 = vpop.permute.xlu0 %240
      %242 = vrot.lane.b32.xlu0 %v122, 75
      %v243 = vpop.permute.xlu0 %242
      %v244 = vrot.slane %v235, 4
      %v245 = vrot.slane %v237, 4
      %v246 = vrot.slane %v239, 4
      %v247 = vrot.slane %v241, 4
      %v248 = vrot.slane %v243, 4
      %v249 = vsel %vm143, %v244, %v245
      %vm250 = vcmask 613376
      %v251 = vsel %vm250, %v235, %v249
      %v252 = vsel %vm143, %v245, %v246
      %v253 = vsel %vm250, %v237, %v252
      %v254 = vsel %vm143, %v246, %v247
      %v255 = vsel %vm250, %v239, %v254
      %v256 = vsel %vm143, %v247, %v248
      %v257 = vsel %vm250, %v241, %v256
      %v258 = vsel %vm250, %v243, %v248
      %264 = vst [vmem:[#allocation2 + $0x6c] sm:$0xff] %v251
      %265 = vst [vmem:[#allocation2 + $0x74] sm:$0xff] %v253
      %266 = vst [vmem:[#allocation2 + $0x7c] sm:$0xff] %v255
      %267 = vst [vmem:[#allocation2 + $0x84] sm:$0xff] %v257
      %268 = vst [vmem:[#allocation2 + $0x8c] sm:$0xf] %v258
      %269 = vrot.lane.b32.xlu0 %v118, 74
      %v270 = vpop.permute.xlu0 %269
      %271 = vrot.lane.b32.xlu0 %v119, 74
      %v272 = vpop.permute.xlu0 %271
      %273 = vrot.lane.b32.xlu0 %v120, 74
      %v274 = vpop.permute.xlu0 %273
      %275 = vrot.lane.b32.xlu0 %v121, 74
      %v276 = vpop.permute.xlu0 %275
      %277 = vrot.lane.b32.xlu0 %v122, 74
      %v278 = vpop.permute.xlu0 %277
      %v279 = vrot.slane %v270, 4
      %v280 = vrot.slane %v272, 4
      %v281 = vrot.slane %v274, 4
      %v282 = vrot.slane %v276, 4
      %v283 = vrot.slane %v278, 4
      %v284 = vsel %vm143, %v279, %v280
      %vm285 = vcmask 605184
      %v286 = vsel %vm285, %v270, %v284
      %v287 = vsel %vm143, %v280, %v281
      %v288 = vsel %vm285, %v272, %v287
      %v289 = vsel %vm143, %v281, %v282
      %v290 = vsel %vm285, %v274, %v289
      %v291 = vsel %vm143, %v282, %v283
      %v292 = vsel %vm285, %v276, %v291
      %v293 = vsel %vm285, %v278, %v283
      %299 = vst [vmem:[#allocation2 + $0x90] sm:$0xff] %v286
      %300 = vst [vmem:[#allocation2 + $0x98] sm:$0xff] %v288
      %301 = vst [vmem:[#allocation2 + $0xa0] sm:$0xff] %v290
      %302 = vst [vmem:[#allocation2 + $0xa8] sm:$0xff] %v292
      %303 = vst [vmem:[#allocation2 + $0xb0] sm:$0xf] %v293
      %304 = vrot.lane.b32.xlu0 %v118, 54
      %v305 = vpop.permute.xlu0 %304
      %306 = vrot.lane.b32.xlu0 %v119, 54
      %v307 = vpop.permute.xlu0 %306
      %308 = vrot.lane.b32.xlu0 %v120, 54
      %v309 = vpop.permute.xlu0 %308
      %310 = vrot.lane.b32.xlu0 %v121, 54
      %v311 = vpop.permute.xlu0 %310
      %312 = vrot.lane.b32.xlu0 %v122, 54
      %v313 = vpop.permute.xlu0 %312
      %v314 = vrot.slane %v305, 4
      %v315 = vrot.slane %v307, 4
      %v316 = vrot.slane %v309, 4
      %v317 = vrot.slane %v311, 4
      %v318 = vrot.slane %v313, 4
      %v319 = vsel %vm143, %v314, %v315
      %vm320 = vcmask 441344
      %v321 = vsel %vm320, %v305, %v319
      %v322 = vsel %vm143, %v315, %v316
      %v323 = vsel %vm320, %v307, %v322
      %v324 = vsel %vm143, %v316, %v317
      %v325 = vsel %vm320, %v309, %v324
      %v326 = vsel %vm143, %v317, %v318
      %v327 = vsel %vm320, %v311, %v326
      %v328 = vsel %vm320, %v313, %v318
      %334 = vst [vmem:[#allocation2 + $0xb4] sm:$0xff] %v321
      %335 = vst [vmem:[#allocation2 + $0xbc] sm:$0xff] %v323
      %336 = vst [vmem:[#allocation2 + $0xc4] sm:$0xff] %v325
      %337 = vst [vmem:[#allocation2 + $0xcc] sm:$0xff] %v327
      %338 = vst [vmem:[#allocation2 + $0xd4] sm:$0xf] %v328
      %339 = vrot.lane.b32.xlu0 %v118, 53
      %v340 = vpop.permute.xlu0 %339
      %341 = vrot.lane.b32.xlu0 %v119, 53
      %v342 = vpop.permute.xlu0 %341
      %343 = vrot.lane.b32.xlu0 %v120, 53
      %v344 = vpop.permute.xlu0 %343
      %345 = vrot.lane.b32.xlu0 %v121, 53
      %v346 = vpop.permute.xlu0 %345
      %347 = vrot.lane.b32.xlu0 %v122, 53
      %v348 = vpop.permute.xlu0 %347
      %v349 = vrot.slane %v340, 4
      %v350 = vrot.slane %v342, 4
      %v351 = vrot.slane %v344, 4
      %v352 = vrot.slane %v346, 4
      %v353 = vrot.slane %v348, 4
      %v354 = vsel %vm143, %v349, %v350
      %vm355 = vcmask 433152
      %v356 = vsel %vm355, %v340, %v354
      %v357 = vsel %vm143, %v350, %v351
      %v358 = vsel %vm355, %v342, %v357
      %v359 = vsel %vm143, %v351, %v352
      %v360 = vsel %vm355, %v344, %v359
      %v361 = vsel %vm143, %v352, %v353
      %v362 = vsel %vm355, %v346, %v361
      %v363 = vsel %vm355, %v348, %v353
      %369 = vst [vmem:[#allocation2 + $0xd8] sm:$0xff] %v356
      %370 = vst [vmem:[#allocation2 + $0xe0] sm:$0xff] %v358
      %371 = vst [vmem:[#allocation2 + $0xe8] sm:$0xff] %v360
      %372 = vst [vmem:[#allocation2 + $0xf0] sm:$0xff] %v362
      %373 = vst [vmem:[#allocation2 + $0xf8] sm:$0xf] %v363
      %374 = vrot.lane.b32.xlu0 %v118, 52
      %v375 = vpop.permute.xlu0 %374
      %376 = vrot.lane.b32.xlu0 %v119, 52
      %v377 = vpop.permute.xlu0 %376
      %378 = vrot.lane.b32.xlu0 %v120, 52
      %v379 = vpop.permute.xlu0 %378
      %380 = vrot.lane.b32.xlu0 %v121, 52
      %v381 = vpop.permute.xlu0 %380
      %382 = vrot.lane.b32.xlu0 %v122, 52
      %v383 = vpop.permute.xlu0 %382
      %v384 = vrot.slane %v375, 4
      %v385 = vrot.slane %v377, 4
      %v386 = vrot.slane %v379, 4
      %v387 = vrot.slane %v381, 4
      %v388 = vrot.slane %v383, 4
      %v389 = vsel %vm143, %v384, %v385
      %vm390 = vcmask 424960
      %v391 = vsel %vm390, %v375, %v389
      %v392 = vsel %vm143, %v385, %v386
      %v393 = vsel %vm390, %v377, %v392
      %v394 = vsel %vm143, %v386, %v387
      %v395 = vsel %vm390, %v379, %v394
      %v396 = vsel %vm143, %v387, %v388
      %v397 = vsel %vm390, %v381, %v396
      %v398 = vsel %vm390, %v383, %v388
      %404 = vst [vmem:[#allocation2 + $0xfc] sm:$0xff] %v391
      %405 = vst [vmem:[#allocation2 + $0x104] sm:$0xff] %v393
      %406 = vst [vmem:[#allocation2 + $0x10c] sm:$0xff] %v395
      %407 = vst [vmem:[#allocation2 + $0x114] sm:$0xff] %v397
      %408 = vst [vmem:[#allocation2 + $0x11c] sm:$0xf] %v398
      %409 = vrot.lane.b32.xlu0 %v118, 51
      %v410 = vpop.permute.xlu0 %409
      %411 = vrot.lane.b32.xlu0 %v119, 51
      %v412 = vpop.permute.xlu0 %411
      %413 = vrot.lane.b32.xlu0 %v120, 51
      %v414 = vpop.permute.xlu0 %413
      %415 = vrot.lane.b32.xlu0 %v121, 51
      %v416 = vpop.permute.xlu0 %415
      %417 = vrot.lane.b32.xlu0 %v122, 51
      %v418 = vpop.permute.xlu0 %417
      %v419 = vrot.slane %v410, 4
      %v420 = vrot.slane %v412, 4
      %v421 = vrot.slane %v414, 4
      %v422 = vrot.slane %v416, 4
      %v423 = vrot.slane %v418, 4
      %v424 = vsel %vm143, %v419, %v420
      %vm425 = vcmask 416768
      %v426 = vsel %vm425, %v410, %v424
      %v427 = vsel %vm143, %v420, %v421
      %v428 = vsel %vm425, %v412, %v427
      %v429 = vsel %vm143, %v421, %v422
      %v430 = vsel %vm425, %v414, %v429
      %v431 = vsel %vm143, %v422, %v423
      %v432 = vsel %vm425, %v416, %v431
      %v433 = vsel %vm425, %v418, %v423
      %439 = vst [vmem:[#allocation2 + $0x120] sm:$0xff] %v426
      %440 = vst [vmem:[#allocation2 + $0x128] sm:$0xff] %v428
      %441 = vst [vmem:[#allocation2 + $0x130] sm:$0xff] %v430
      %442 = vst [vmem:[#allocation2 + $0x138] sm:$0xff] %v432
      %443 = vst [vmem:[#allocation2 + $0x140] sm:$0xf] %v433
      %444 = vrot.lane.b32.xlu0 %v118, 50
      %v445 = vpop.permute.xlu0 %444
      %446 = vrot.lane.b32.xlu0 %v119, 50
      %v447 = vpop.permute.xlu0 %446
      %448 = vrot.lane.b32.xlu0 %v120, 50
      %v449 = vpop.permute.xlu0 %448
      %450 = vrot.lane.b32.xlu0 %v121, 50
      %v451 = vpop.permute.xlu0 %450
      %452 = vrot.lane.b32.xlu0 %v122, 50
      %v453 = vpop.permute.xlu0 %452
      %v454 = vrot.slane %v445, 4
      %v455 = vrot.slane %v447, 4
      %v456 = vrot.slane %v449, 4
      %v457 = vrot.slane %v451, 4
      %v458 = vrot.slane %v453, 4
      %v459 = vsel %vm143, %v454, %v455
      %vm460 = vcmask 408576
      %v461 = vsel %vm460, %v445, %v459
      %v462 = vsel %vm143, %v455, %v456
      %v463 = vsel %vm460, %v447, %v462
      %v464 = vsel %vm143, %v456, %v457
      %v465 = vsel %vm460, %v449, %v464
      %v466 = vsel %vm143, %v457, %v458
      %v467 = vsel %vm460, %v451, %v466
      %v468 = vsel %vm460, %v453, %v458
      %474 = vst [vmem:[#allocation2 + $0x144] sm:$0xff] %v461
      %475 = vst [vmem:[#allocation2 + $0x14c] sm:$0xff] %v463
      %476 = vst [vmem:[#allocation2 + $0x154] sm:$0xff] %v465
      %477 = vst [vmem:[#allocation2 + $0x15c] sm:$0xff] %v467
      %478 = vst [vmem:[#allocation2 + $0x164] sm:$0xf] %v468
      %479 = vrot.lane.b32.xlu0 %v118, 30
      %v480 = vpop.permute.xlu0 %479
      %481 = vrot.lane.b32.xlu0 %v119, 30
      %v482 = vpop.permute.xlu0 %481
      %483 = vrot.lane.b32.xlu0 %v120, 30
      %v484 = vpop.permute.xlu0 %483
      %485 = vrot.lane.b32.xlu0 %v121, 30
      %v486 = vpop.permute.xlu0 %485
      %487 = vrot.lane.b32.xlu0 %v122, 30
      %v488 = vpop.permute.xlu0 %487
      %v489 = vrot.slane %v480, 4
      %v490 = vrot.slane %v482, 4
      %v491 = vrot.slane %v484, 4
      %v492 = vrot.slane %v486, 4
      %v493 = vrot.slane %v488, 4
      %v494 = vsel %vm143, %v489, %v490
      %vm495 = vcmask 244736
      %v496 = vsel %vm495, %v480, %v494
      %v497 = vsel %vm143, %v490, %v491
      %v498 = vsel %vm495, %v482, %v497
      %v499 = vsel %vm143, %v491, %v492
      %v500 = vsel %vm495, %v484, %v499
      %v501 = vsel %vm143, %v492, %v493
      %v502 = vsel %vm495, %v486, %v501
      %v503 = vsel %vm495, %v488, %v493
      %509 = vst [vmem:[#allocation2 + $0x168] sm:$0xff] %v496
      %510 = vst [vmem:[#allocation2 + $0x170] sm:$0xff] %v498
      %511 = vst [vmem:[#allocation2 + $0x178] sm:$0xff] %v500
      %512 = vst [vmem:[#allocation2 + $0x180] sm:$0xff] %v502
      %513 = vst [vmem:[#allocation2 + $0x188] sm:$0xf] %v503
      %514 = vrot.lane.b32.xlu0 %v118, 29
      %v515 = vpop.permute.xlu0 %514
      %516 = vrot.lane.b32.xlu0 %v119, 29
      %v517 = vpop.permute.xlu0 %516
      %518 = vrot.lane.b32.xlu0 %v120, 29
      %v519 = vpop.permute.xlu0 %518
      %520 = vrot.lane.b32.xlu0 %v121, 29
      %v521 = vpop.permute.xlu0 %520
      %522 = vrot.lane.b32.xlu0 %v122, 29
      %v523 = vpop.permute.xlu0 %522
      %v524 = vrot.slane %v515, 4
      %v525 = vrot.slane %v517, 4
      %v526 = vrot.slane %v519, 4
      %v527 = vrot.slane %v521, 4
      %v528 = vrot.slane %v523, 4
      %v529 = vsel %vm143, %v524, %v525
      %vm530 = vcmask 236544
      %v531 = vsel %vm530, %v515, %v529
      %v532 = vsel %vm143, %v525, %v526
      %v533 = vsel %vm530, %v517, %v532
      %v534 = vsel %vm143, %v526, %v527
      %v535 = vsel %vm530, %v519, %v534
      %v536 = vsel %vm143, %v527, %v528
      %v537 = vsel %vm530, %v521, %v536
      %v538 = vsel %vm530, %v523, %v528
      %544 = vst [vmem:[#allocation2 + $0x18c] sm:$0xff] %v531
      %545 = vst [vmem:[#allocation2 + $0x194] sm:$0xff] %v533
      %546 = vst [vmem:[#allocation2 + $0x19c] sm:$0xff] %v535
      %547 = vst [vmem:[#allocation2 + $0x1a4] sm:$0xff] %v537
      %548 = vst [vmem:[#allocation2 + $0x1ac] sm:$0xf] %v538
      %549 = vrot.lane.b32.xlu0 %v118, 28
      %v550 = vpop.permute.xlu0 %549
      %551 = vrot.lane.b32.xlu0 %v119, 28
      %v552 = vpop.permute.xlu0 %551
      %553 = vrot.lane.b32.xlu0 %v120, 28
      %v554 = vpop.permute.xlu0 %553
      %555 = vrot.lane.b32.xlu0 %v121, 28
      %v556 = vpop.permute.xlu0 %555
      %557 = vrot.lane.b32.xlu0 %v122, 28
      %v558 = vpop.permute.xlu0 %557
      %v559 = vrot.slane %v550, 4
      %v560 = vrot.slane %v552, 4
      %v561 = vrot.slane %v554, 4
      %v562 = vrot.slane %v556, 4
      %v563 = vrot.slane %v558, 4
      %v564 = vsel %vm143, %v559, %v560
      %vm565 = vcmask 228352
      %v566 = vsel %vm565, %v550, %v564
      %v567 = vsel %vm143, %v560, %v561
      %v568 = vsel %vm565, %v552, %v567
      %v569 = vsel %vm143, %v561, %v562
      %v570 = vsel %vm565, %v554, %v569
      %v571 = vsel %vm143, %v562, %v563
      %v572 = vsel %vm565, %v556, %v571
      %v573 = vsel %vm565, %v558, %v563
      %579 = vst [vmem:[#allocation2 + $0x1b0] sm:$0xff] %v566
      %580 = vst [vmem:[#allocation2 + $0x1b8] sm:$0xff] %v568
      %581 = vst [vmem:[#allocation2 + $0x1c0] sm:$0xff] %v570
      %582 = vst [vmem:[#allocation2 + $0x1c8] sm:$0xff] %v572
      %583 = vst [vmem:[#allocation2 + $0x1d0] sm:$0xf] %v573
      %584 = vrot.lane.b32.xlu0 %v118, 27
      %v585 = vpop.permute.xlu0 %584
      %586 = vrot.lane.b32.xlu0 %v119, 27
      %v587 = vpop.permute.xlu0 %586
      %588 = vrot.lane.b32.xlu0 %v120, 27
      %v589 = vpop.permute.xlu0 %588
      %590 = vrot.lane.b32.xlu0 %v121, 27
      %v591 = vpop.permute.xlu0 %590
      %592 = vrot.lane.b32.xlu0 %v122, 27
      %v593 = vpop.permute.xlu0 %592
      %v594 = vrot.slane %v585, 4
      %v595 = vrot.slane %v587, 4
      %v596 = vrot.slane %v589, 4
      %v597 = vrot.slane %v591, 4
      %v598 = vrot.slane %v593, 4
      %v599 = vsel %vm143, %v594, %v595
      %vm600 = vcmask 220160
      %v601 = vsel %vm600, %v585, %v599
      %v602 = vsel %vm143, %v595, %v596
      %v603 = vsel %vm600, %v587, %v602
      %v604 = vsel %vm143, %v596, %v597
      %v605 = vsel %vm600, %v589, %v604
      %v606 = vsel %vm143, %v597, %v598
      %v607 = vsel %vm600, %v591, %v606
      %v608 = vsel %vm600, %v593, %v598
      %614 = vst [vmem:[#allocation2 + $0x1d4] sm:$0xff] %v601
      %615 = vst [vmem:[#allocation2 + $0x1dc] sm:$0xff] %v603
      %616 = vst [vmem:[#allocation2 + $0x1e4] sm:$0xff] %v605
      %617 = vst [vmem:[#allocation2 + $0x1ec] sm:$0xff] %v607
      %618 = vst [vmem:[#allocation2 + $0x1f4] sm:$0xf] %v608
      %619 = vrot.lane.b32.xlu0 %v118, 26
      %v620 = vpop.permute.xlu0 %619
      %621 = vrot.lane.b32.xlu0 %v119, 26
      %v622 = vpop.permute.xlu0 %621
      %623 = vrot.lane.b32.xlu0 %v120, 26
      %v624 = vpop.permute.xlu0 %623
      %625 = vrot.lane.b32.xlu0 %v121, 26
      %v626 = vpop.permute.xlu0 %625
      %627 = vrot.lane.b32.xlu0 %v122, 26
      %v628 = vpop.permute.xlu0 %627
      %v629 = vrot.slane %v620, 4
      %v630 = vrot.slane %v622, 4
      %v631 = vrot.slane %v624, 4
      %v632 = vrot.slane %v626, 4
      %v633 = vrot.slane %v628, 4
      %v634 = vsel %vm143, %v629, %v630
      %vm635 = vcmask 211968
      %v636 = vsel %vm635, %v620, %v634
      %v637 = vsel %vm143, %v630, %v631
      %v638 = vsel %vm635, %v622, %v637
      %v639 = vsel %vm143, %v631, %v632
      %v640 = vsel %vm635, %v624, %v639
      %v641 = vsel %vm143, %v632, %v633
      %v642 = vsel %vm635, %v626, %v641
      %v643 = vsel %vm635, %v628, %v633
      %649 = vst [vmem:[#allocation2 + $0x1f8] sm:$0xff] %v636
      %650 = vst [vmem:[#allocation2 + $0x200] sm:$0xff] %v638
      %651 = vst [vmem:[#allocation2 + $0x208] sm:$0xff] %v640
      %652 = vst [vmem:[#allocation2 + $0x210] sm:$0xff] %v642
      %653 = vst [vmem:[#allocation2 + $0x218] sm:$0xf] %v643
      %654 = vrot.lane.b32.xlu0 %v118, 6
      %v655 = vpop.permute.xlu0 %654
      %656 = vrot.lane.b32.xlu0 %v119, 6
      %v657 = vpop.permute.xlu0 %656
      %658 = vrot.lane.b32.xlu0 %v120, 6
      %v659 = vpop.permute.xlu0 %658
      %660 = vrot.lane.b32.xlu0 %v121, 6
      %v661 = vpop.permute.xlu0 %660
      %662 = vrot.lane.b32.xlu0 %v122, 6
      %v663 = vpop.permute.xlu0 %662
      %v664 = vrot.slane %v655, 4
      %v665 = vrot.slane %v657, 4
      %v666 = vrot.slane %v659, 4
      %v667 = vrot.slane %v661, 4
      %v668 = vrot.slane %v663, 4
      %v669 = vsel %vm143, %v664, %v665
      %vm670 = vcmask 48128
      %v671 = vsel %vm670, %v655, %v669
      %v672 = vsel %vm143, %v665, %v666
      %v673 = vsel %vm670, %v657, %v672
      %v674 = vsel %vm143, %v666, %v667
      %v675 = vsel %vm670, %v659, %v674
      %v676 = vsel %vm143, %v667, %v668
      %v677 = vsel %vm670, %v661, %v676
      %v678 = vsel %vm670, %v663, %v668
      %684 = vst [vmem:[#allocation2 + $0x21c] sm:$0xff] %v671
      %685 = vst [vmem:[#allocation2 + $0x224] sm:$0xff] %v673
      %686 = vst [vmem:[#allocation2 + $0x22c] sm:$0xff] %v675
      %687 = vst [vmem:[#allocation2 + $0x234] sm:$0xff] %v677
      %688 = vst [vmem:[#allocation2 + $0x23c] sm:$0xf] %v678
      %689 = vrot.lane.b32.xlu0 %v118, 5
      %v690 = vpop.permute.xlu0 %689
      %691 = vrot.lane.b32.xlu0 %v119, 5
      %v692 = vpop.permute.xlu0 %691
      %693 = vrot.lane.b32.xlu0 %v120, 5
      %v694 = vpop.permute.xlu0 %693
      %695 = vrot.lane.b32.xlu0 %v121, 5
      %v696 = vpop.permute.xlu0 %695
      %697 = vrot.lane.b32.xlu0 %v122, 5
      %v698 = vpop.permute.xlu0 %697
      %v699 = vrot.slane %v690, 4
      %v700 = vrot.slane %v692, 4
      %v701 = vrot.slane %v694, 4
      %v702 = vrot.slane %v696, 4
      %v703 = vrot.slane %v698, 4
      %v704 = vsel %vm143, %v699, %v700
      %vm705 = vcmask 39936
      %v706 = vsel %vm705, %v690, %v704
      %v707 = vsel %vm143, %v700, %v701
      %v708 = vsel %vm705, %v692, %v707
      %v709 = vsel %vm143, %v701, %v702
      %v710 = vsel %vm705, %v694, %v709
      %v711 = vsel %vm143, %v702, %v703
      %v712 = vsel %vm705, %v696, %v711
      %v713 = vsel %vm705, %v698, %v703
      %719 = vst [vmem:[#allocation2 + $0x240] sm:$0xff] %v706
      %720 = vst [vmem:[#allocation2 + $0x248] sm:$0xff] %v708
      %721 = vst [vmem:[#allocation2 + $0x250] sm:$0xff] %v710
      %722 = vst [vmem:[#allocation2 + $0x258] sm:$0xff] %v712
      %723 = vst [vmem:[#allocation2 + $0x260] sm:$0xf] %v713
      %724 = vrot.lane.b32.xlu0 %v118, 4
      %v725 = vpop.permute.xlu0 %724
      %726 = vrot.lane.b32.xlu0 %v119, 4
      %v727 = vpop.permute.xlu0 %726
      %728 = vrot.lane.b32.xlu0 %v120, 4
      %v729 = vpop.permute.xlu0 %728
      %730 = vrot.lane.b32.xlu0 %v121, 4
      %v731 = vpop.permute.xlu0 %730
      %732 = vrot.lane.b32.xlu0 %v122, 4
      %v733 = vpop.permute.xlu0 %732
      %v734 = vrot.slane %v725, 4
      %v735 = vrot.slane %v727, 4
      %v736 = vrot.slane %v729, 4
      %v737 = vrot.slane %v731, 4
      %v738 = vrot.slane %v733, 4
      %v739 = vsel %vm143, %v734, %v735
      %vm740 = vcmask 31744
      %v741 = vsel %vm740, %v725, %v739
      %v742 = vsel %vm143, %v735, %v736
      %v743 = vsel %vm740, %v727, %v742
      %v744 = vsel %vm143, %v736, %v737
      %v745 = vsel %vm740, %v729, %v744
      %v746 = vsel %vm143, %v737, %v738
      %v747 = vsel %vm740, %v731, %v746
      %v748 = vsel %vm740, %v733, %v738
      %754 = vst [vmem:[#allocation2 + $0x264] sm:$0xff] %v741
      %755 = vst [vmem:[#allocation2 + $0x26c] sm:$0xff] %v743
      %756 = vst [vmem:[#allocation2 + $0x274] sm:$0xff] %v745
      %757 = vst [vmem:[#allocation2 + $0x27c] sm:$0xff] %v747
      %758 = vst [vmem:[#allocation2 + $0x284] sm:$0xf] %v748
      %759 = vrot.lane.b32.xlu0 %v118, 3
      %v760 = vpop.permute.xlu0 %759
      %761 = vrot.lane.b32.xlu0 %v119, 3
      %v762 = vpop.permute.xlu0 %761
      %763 = vrot.lane.b32.xlu0 %v120, 3
      %v764 = vpop.permute.xlu0 %763
      %765 = vrot.lane.b32.xlu0 %v121, 3
      %v766 = vpop.permute.xlu0 %765
      %767 = vrot.lane.b32.xlu0 %v122, 3
      %v768 = vpop.permute.xlu0 %767
      %v769 = vrot.slane %v760, 4
      %v770 = vrot.slane %v762, 4
      %v771 = vrot.slane %v764, 4
      %v772 = vrot.slane %v766, 4
      %v773 = vrot.slane %v768, 4
      %v774 = vsel %vm143, %v769, %v770
      %vm775 = vcmask 23552
      %v776 = vsel %vm775, %v760, %v774
      %v777 = vsel %vm143, %v770, %v771
      %v778 = vsel %vm775, %v762, %v777
      %v779 = vsel %vm143, %v771, %v772
      %v780 = vsel %vm775, %v764, %v779
      %v781 = vsel %vm143, %v772, %v773
      %v782 = vsel %vm775, %v766, %v781
      %v783 = vsel %vm775, %v768, %v773
      %789 = vst [vmem:[#allocation2 + $0x288] sm:$0xff] %v776
      %790 = vst [vmem:[#allocation2 + $0x290] sm:$0xff] %v778
      %791 = vst [vmem:[#allocation2 + $0x298] sm:$0xff] %v780
      %792 = vst [vmem:[#allocation2 + $0x2a0] sm:$0xff] %v782
      %793 = vst [vmem:[#allocation2 + $0x2a8] sm:$0xf] %v783
      %794 = vrot.lane.b32.xlu0 %v118, 2
      %v795 = vpop.permute.xlu0 %794
      %796 = vrot.lane.b32.xlu0 %v119, 2
      %v797 = vpop.permute.xlu0 %796
      %798 = vrot.lane.b32.xlu0 %v120, 2
      %v799 = vpop.permute.xlu0 %798
      %800 = vrot.lane.b32.xlu0 %v121, 2
      %v801 = vpop.permute.xlu0 %800
      %802 = vrot.lane.b32.xlu0 %v122, 2
      %v803 = vpop.permute.xlu0 %802
      %v804 = vrot.slane %v795, 4
      %v805 = vrot.slane %v797, 4
      %v806 = vrot.slane %v799, 4
      %v807 = vrot.slane %v801, 4
      %v808 = vrot.slane %v803, 4
      %v809 = vsel %vm143, %v804, %v805
      %vm810 = vcmask 15360
      %v811 = vsel %vm810, %v795, %v809
      %v812 = vsel %vm143, %v805, %v806
      %v813 = vsel %vm810, %v797, %v812
      %v814 = vsel %vm143, %v806, %v807
      %v815 = vsel %vm810, %v799, %v814
      %v816 = vsel %vm143, %v807, %v808
      %v817 = vsel %vm810, %v801, %v816
      %v818 = vsel %vm810, %v803, %v808
      %824 = vst [vmem:[#allocation2 + $0x2ac] sm:$0xff] %v811
      %825 = vst [vmem:[#allocation2 + $0x2b4] sm:$0xff] %v813
      %826 = vst [vmem:[#allocation2 + $0x2bc] sm:$0xff] %v815
      %827 = vst [vmem:[#allocation2 + $0x2c4] sm:$0xff] %v817
      %828 = vst [vmem:[#allocation2 + $0x2cc] sm:$0xf] %v818
      %v829 = vpack.c.bf16 %v109, %v108
      %v830 = vpack.c.bf16 %v111, %v110
      %v831 = vpack.c.bf16 %v113, %v112
      %v832 = vpack.c.bf16 %v115, %v114
      %v833 = vpack.c.bf16 %v117, %v116
      %839 = vrot.lane.b32.xlu0 %v829, 110
      %v840 = vpop.permute.xlu0 %839
      %841 = vrot.lane.b32.xlu0 %v830, 110
      %v842 = vpop.permute.xlu0 %841
      %843 = vrot.lane.b32.xlu0 %v831, 110
      %v844 = vpop.permute.xlu0 %843
      %845 = vrot.lane.b32.xlu0 %v832, 110
      %v846 = vpop.permute.xlu0 %845
      %847 = vrot.lane.b32.xlu0 %v833, 110
      %v848 = vpop.permute.xlu0 %847
      %v849 = vrot.slane %v840, 4
      %v850 = vrot.slane %v842, 4
      %v851 = vrot.slane %v844, 4
      %v852 = vrot.slane %v846, 4
      %v853 = vrot.slane %v848, 4
      %v854 = vsel %vm143, %v849, %v850
      %vm855 = vcmask 900096
      %v856 = vsel %vm855, %v840, %v854
      %v857 = vsel %vm143, %v850, %v851
      %v858 = vsel %vm855, %v842, %v857
      %v859 = vsel %vm143, %v851, %v852
      %v860 = vsel %vm855, %v844, %v859
      %v861 = vsel %vm143, %v852, %v853
      %v862 = vsel %vm855, %v846, %v861
      %v863 = vsel %vm855, %v848, %v853
      %869 = vst [vmem:[#allocation2 + $0x2d0] sm:$0xff] %v856
      %870 = vst [vmem:[#allocation2 + $0x2d8] sm:$0xff] %v858
      %871 = vst [vmem:[#allocation2 + $0x2e0] sm:$0xff] %v860
      %872 = vst [vmem:[#allocation2 + $0x2e8] sm:$0xff] %v862
      %873 = vst [vmem:[#allocation2 + $0x2f0] sm:$0xf] %v863
      %874 = vrot.lane.b32.xlu0 %v829, 109
      %v875 = vpop.permute.xlu0 %874
      %876 = vrot.lane.b32.xlu0 %v830, 109
      %v877 = vpop.permute.xlu0 %876
      %878 = vrot.lane.b32.xlu0 %v831, 109
      %v879 = vpop.permute.xlu0 %878
      %880 = vrot.lane.b32.xlu0 %v832, 109
      %v881 = vpop.permute.xlu0 %880
      %882 = vrot.lane.b32.xlu0 %v833, 109
      %v883 = vpop.permute.xlu0 %882
      %v884 = vrot.slane %v875, 4
      %v885 = vrot.slane %v877, 4
      %v886 = vrot.slane %v879, 4
      %v887 = vrot.slane %v881, 4
      %v888 = vrot.slane %v883, 4
      %v889 = vsel %vm143, %v884, %v885
      %vm890 = vcmask 891904
      %v891 = vsel %vm890, %v875, %v889
      %v892 = vsel %vm143, %v885, %v886
      %v893 = vsel %vm890, %v877, %v892
      %v894 = vsel %vm143, %v886, %v887
      %v895 = vsel %vm890, %v879, %v894
      %v896 = vsel %vm143, %v887, %v888
      %v897 = vsel %vm890, %v881, %v896
      %v898 = vsel %vm890, %v883, %v888
      %904 = vst [vmem:[#allocation2 + $0x2f4] sm:$0xff] %v891
      %905 = vst [vmem:[#allocation2 + $0x2fc] sm:$0xff] %v893
      %906 = vst [vmem:[#allocation2 + $0x304] sm:$0xff] %v895
      %907 = vst [vmem:[#allocation2 + $0x30c] sm:$0xff] %v897
      %908 = vst [vmem:[#allocation2 + $0x314] sm:$0xf] %v898
      %909 = vrot.lane.b32.xlu0 %v829, 108
      %v910 = vpop.permute.xlu0 %909
      %911 = vrot.lane.b32.xlu0 %v830, 108
      %v912 = vpop.permute.xlu0 %911
      %913 = vrot.lane.b32.xlu0 %v831, 108
      %v914 = vpop.permute.xlu0 %913
      %915 = vrot.lane.b32.xlu0 %v832, 108
      %v916 = vpop.permute.xlu0 %915
      %917 = vrot.lane.b32.xlu0 %v833, 108
      %v918 = vpop.permute.xlu0 %917
      %v919 = vrot.slane %v910, 4
      %v920 = vrot.slane %v912, 4
      %v921 = vrot.slane %v914, 4
      %v922 = vrot.slane %v916, 4
      %v923 = vrot.slane %v918, 4
      %v924 = vsel %vm143, %v919, %v920
      %vm925 = vcmask 883712
      %v926 = vsel %vm925, %v910, %v924
      %v927 = vsel %vm143, %v920, %v921
      %v928 = vsel %vm925, %v912, %v927
      %v929 = vsel %vm143, %v921, %v922
      %v930 = vsel %vm925, %v914, %v929
      %v931 = vsel %vm143, %v922, %v923
      %v932 = vsel %vm925, %v916, %v931
      %v933 = vsel %vm925, %v918, %v923
      %939 = vst [vmem:[#allocation2 + $0x318] sm:$0xff] %v926
      %940 = vst [vmem:[#allocation2 + $0x320] sm:$0xff] %v928
      %941 = vst [vmem:[#allocation2 + $0x328] sm:$0xff] %v930
      %942 = vst [vmem:[#allocation2 + $0x330] sm:$0xff] %v932
      %943 = vst [vmem:[#allocation2 + $0x338] sm:$0xf] %v933
      %944 = vrot.lane.b32.xlu0 %v829, 107
      %v945 = vpop.permute.xlu0 %944
      %946 = vrot.lane.b32.xlu0 %v830, 107
      %v947 = vpop.permute.xlu0 %946
      %948 = vrot.lane.b32.xlu0 %v831, 107
      %v949 = vpop.permute.xlu0 %948
      %950 = vrot.lane.b32.xlu0 %v832, 107
      %v951 = vpop.permute.xlu0 %950
      %952 = vrot.lane.b32.xlu0 %v833, 107
      %v953 = vpop.permute.xlu0 %952
      %v954 = vrot.slane %v945, 4
      %v955 = vrot.slane %v947, 4
      %v956 = vrot.slane %v949, 4
      %v957 = vrot.slane %v951, 4
      %v958 = vrot.slane %v953, 4
      %v959 = vsel %vm143, %v954, %v955
      %vm960 = vcmask 875520
      %v961 = vsel %vm960, %v945, %v959
      %v962 = vsel %vm143, %v955, %v956
      %v963 = vsel %vm960, %v947, %v962
      %v964 = vsel %vm143, %v956, %v957
      %v965 = vsel %vm960, %v949, %v964
      %v966 = vsel %vm143, %v957, %v958
      %v967 = vsel %vm960, %v951, %v966
      %v968 = vsel %vm960, %v953, %v958
      %974 = vst [vmem:[#allocation2 + $0x33c] sm:$0xff] %v961
      %975 = vst [vmem:[#allocation2 + $0x344] sm:$0xff] %v963
      %976 = vst [vmem:[#allocation2 + $0x34c] sm:$0xff] %v965
      %977 = vst [vmem:[#allocation2 + $0x354] sm:$0xff] %v967
      %978 = vst [vmem:[#allocation2 + $0x35c] sm:$0xf] %v968
      %979 = vrot.lane.b32.xlu0 %v829, 106
      %v980 = vpop.permute.xlu0 %979
      %981 = vrot.lane.b32.xlu0 %v830, 106
      %v982 = vpop.permute.xlu0 %981
      %983 = vrot.lane.b32.xlu0 %v831, 106
      %v984 = vpop.permute.xlu0 %983
      %985 = vrot.lane.b32.xlu0 %v832, 106
      %v986 = vpop.permute.xlu0 %985
      %987 = vrot.lane.b32.xlu0 %v833, 106
      %v988 = vpop.permute.xlu0 %987
      %v989 = vrot.slane %v980, 4
      %v990 = vrot.slane %v982, 4
      %v991 = vrot.slane %v984, 4
      %v992 = vrot.slane %v986, 4
      %v993 = vrot.slane %v988, 4
      %v994 = vsel %vm143, %v989, %v990
      %vm995 = vcmask 867328
      %v996 = vsel %vm995, %v980, %v994
      %v997 = vsel %vm143, %v990, %v991
      %v998 = vsel %vm995, %v982, %v997
      %v999 = vsel %vm143, %v991, %v992
      %v1000 = vsel %vm995, %v984, %v999
      %v1001 = vsel %vm143, %v992, %v993
      %v1002 = vsel %vm995, %v986, %v1001
      %v1003 = vsel %vm995, %v988, %v993
      %1009 = vst [vmem:[#allocation2 + $0x360] sm:$0xff] %v996
      %1010 = vst [vmem:[#allocation2 + $0x368] sm:$0xff] %v998
      %1011 = vst [vmem:[#allocation2 + $0x370] sm:$0xff] %v1000
      %1012 = vst [vmem:[#allocation2 + $0x378] sm:$0xff] %v1002
      %1013 = vst [vmem:[#allocation2 + $0x380] sm:$0xf] %v1003
      %v1014 = vpack.c.bf16 %v115, %v115
      %1015 = vst [vmem:[#allocation2 + $0x384] sm:$0xff] %v118
      %1016 = vst [vmem:[#allocation2 + $0x38c] sm:$0xff] %v119
      %1017 = vst [vmem:[#allocation2 + $0x394] sm:$0xff] %v120
      %1018 = vst [vmem:[#allocation2 + $0x39c] sm:$0xff] %v121
      %1019 = vst [vmem:[#allocation2 + $0x3a4] sm:$0xf] %v1014
      %1020 = vrot.lane.b32.xlu0 %v118, 126
      %v1021 = vpop.permute.xlu0 %1020
      %1022 = vrot.lane.b32.xlu0 %v119, 126
      %v1023 = vpop.permute.xlu0 %1022
      %1024 = vrot.lane.b32.xlu0 %v120, 126
      %v1025 = vpop.permute.xlu0 %1024
      %1026 = vrot.lane.b32.xlu0 %v121, 126
      %v1027 = vpop.permute.xlu0 %1026
      %1028 = vrot.lane.b32.xlu0 %v122, 126
      %v1029 = vpop.permute.xlu0 %1028
      %v1030 = vrot.slane %v1021, 4
      %v1031 = vrot.slane %v1023, 4
      %v1032 = vrot.slane %v1025, 4
      %v1033 = vrot.slane %v1027, 4
      %v1034 = vrot.slane %v1029, 4
      %v1035 = vsel %vm143, %v1030, %v1031
      %vm1036 = vcmask 1031168
      %v1037 = vsel %vm1036, %v1021, %v1035
      %v1038 = vsel %vm143, %v1031, %v1032
      %v1039 = vsel %vm1036, %v1023, %v1038
      %v1040 = vsel %vm143, %v1032, %v1033
      %v1041 = vsel %vm1036, %v1025, %v1040
      %v1042 = vsel %vm143, %v1033, %v1034
      %v1043 = vsel %vm1036, %v1027, %v1042
      %v1044 = vsel %vm1036, %v1029, %v1034
      %1050 = vst [vmem:[#allocation2 + $0x3a8] sm:$0xff] %v1037
      %1051 = vst [vmem:[#allocation2 + $0x3b0] sm:$0xff] %v1039
      %1052 = vst [vmem:[#allocation2 + $0x3b8] sm:$0xff] %v1041
      %1053 = vst [vmem:[#allocation2 + $0x3c0] sm:$0xff] %v1043
      %1054 = vst [vmem:[#allocation2 + $0x3c8] sm:$0xf] %v1044
      %1055 = vrot.lane.b32.xlu0 %v118, 124
      %v1056 = vpop.permute.xlu0 %1055
      %1057 = vrot.lane.b32.xlu0 %v119, 124
      %v1058 = vpop.permute.xlu0 %1057
      %1059 = vrot.lane.b32.xlu0 %v120, 124
      %v1060 = vpop.permute.xlu0 %1059
      %1061 = vrot.lane.b32.xlu0 %v121, 124
      %v1062 = vpop.permute.xlu0 %1061
      %1063 = vrot.lane.b32.xlu0 %v122, 124
      %v1064 = vpop.permute.xlu0 %1063
      %v1065 = vrot.slane %v1056, 4
      %v1066 = vrot.slane %v1058, 4
      %v1067 = vrot.slane %v1060, 4
      %v1068 = vrot.slane %v1062, 4
      %v1069 = vrot.slane %v1064, 4
      %v1070 = vsel %vm143, %v1065, %v1066
      %vm1071 = vcmask 1014784
      %v1072 = vsel %vm1071, %v1056, %v1070
      %v1073 = vsel %vm143, %v1066, %v1067
      %v1074 = vsel %vm1071, %v1058, %v1073
      %v1075 = vsel %vm143, %v1067, %v1068
      %v1076 = vsel %vm1071, %v1060, %v1075
      %v1077 = vsel %vm143, %v1068, %v1069
      %v1078 = vsel %vm1071, %v1062, %v1077
      %v1079 = vsel %vm1071, %v1064, %v1069
      %1085 = vst [vmem:[#allocation2 + $0x3cc] sm:$0xff] %v1072
      %1086 = vst [vmem:[#allocation2 + $0x3d4] sm:$0xff] %v1074
      %1087 = vst [vmem:[#allocation2 + $0x3dc] sm:$0xff] %v1076
      %1088 = vst [vmem:[#allocation2 + $0x3e4] sm:$0xff] %v1078
      %1089 = vst [vmem:[#allocation2 + $0x3ec] sm:$0xf] %v1079
      %1090 = vrot.lane.b32.xlu0 %v118, 122
      %v1091 = vpop.permute.xlu0 %1090
      %1092 = vrot.lane.b32.xlu0 %v119, 122
      %v1093 = vpop.permute.xlu0 %1092
      %1094 = vrot.lane.b32.xlu0 %v120, 122
      %v1095 = vpop.permute.xlu0 %1094
      %1096 = vrot.lane.b32.xlu0 %v121, 122
      %v1097 = vpop.permute.xlu0 %1096
      %1098 = vrot.lane.b32.xlu0 %v122, 122
      %v1099 = vpop.permute.xlu0 %1098
      %v1100 = vrot.slane %v1091, 4
      %v1101 = vrot.slane %v1093, 4
      %v1102 = vrot.slane %v1095, 4
      %v1103 = vrot.slane %v1097, 4
      %v1104 = vrot.slane %v1099, 4
      %v1105 = vsel %vm143, %v1100, %v1101
      %vm1106 = vcmask 998400
      %v1107 = vsel %vm1106, %v1091, %v1105
      %v1108 = vsel %vm143, %v1101, %v1102
      %v1109 = vsel %vm1106, %v1093, %v1108
      %v1110 = vsel %vm143, %v1102, %v1103
      %v1111 = vsel %vm1106, %v1095, %v1110
      %v1112 = vsel %vm143, %v1103, %v1104
      %v1113 = vsel %vm1106, %v1097, %v1112
      %v1114 = vsel %vm1106, %v1099, %v1104
      %1120 = vst [vmem:[#allocation2 + $0x3f0] sm:$0xff] %v1107
      %1121 = vst [vmem:[#allocation2 + $0x3f8] sm:$0xff] %v1109
      %1122 = vst [vmem:[#allocation2 + $0x400] sm:$0xff] %v1111
      %1123 = vst [vmem:[#allocation2 + $0x408] sm:$0xff] %v1113
      %1124 = vst [vmem:[#allocation2 + $0x410] sm:$0xf] %v1114
      %1125 = vrot.lane.b32.xlu0 %v118, 120
      %v1126 = vpop.permute.xlu0 %1125
      %1127 = vrot.lane.b32.xlu0 %v119, 120
      %v1128 = vpop.permute.xlu0 %1127
      %1129 = vrot.lane.b32.xlu0 %v120, 120
      %v1130 = vpop.permute.xlu0 %1129
      %1131 = vrot.lane.b32.xlu0 %v121, 120
      %v1132 = vpop.permute.xlu0 %1131
      %1133 = vrot.lane.b32.xlu0 %v122, 120
      %v1134 = vpop.permute.xlu0 %1133
      %v1135 = vrot.slane %v1126, 4
      %v1136 = vrot.slane %v1128, 4
      %v1137 = vrot.slane %v1130, 4
      %v1138 = vrot.slane %v1132, 4
      %v1139 = vrot.slane %v1134, 4
      %v1140 = vsel %vm143, %v1135, %v1136
      %vm1141 = vcmask 982016
      %v1142 = vsel %vm1141, %v1126, %v1140
      %v1143 = vsel %vm143, %v1136, %v1137
      %v1144 = vsel %vm1141, %v1128, %v1143
      %v1145 = vsel %vm143, %v1137, %v1138
      %v1146 = vsel %vm1141, %v1130, %v1145
      %v1147 = vsel %vm143, %v1138, %v1139
      %v1148 = vsel %vm1141, %v1132, %v1147
      %v1149 = vsel %vm1141, %v1134, %v1139
      %1155 = vst [vmem:[#allocation2 + $0x414] sm:$0xff] %v1142
      %1156 = vst [vmem:[#allocation2 + $0x41c] sm:$0xff] %v1144
      %1157 = vst [vmem:[#allocation2 + $0x424] sm:$0xff] %v1146
      %1158 = vst [vmem:[#allocation2 + $0x42c] sm:$0xff] %v1148
      %1159 = vst [vmem:[#allocation2 + $0x434] sm:$0xf] %v1149
      %1160 = vrot.lane.b32.xlu0 %v118, 80
      %v1161 = vpop.permute.xlu0 %1160
      %1162 = vrot.lane.b32.xlu0 %v119, 80
      %v1163 = vpop.permute.xlu0 %1162
      %1164 = vrot.lane.b32.xlu0 %v120, 80
      %v1165 = vpop.permute.xlu0 %1164
      %1166 = vrot.lane.b32.xlu0 %v121, 80
      %v1167 = vpop.permute.xlu0 %1166
      %1168 = vrot.lane.b32.xlu0 %v122, 80
      %v1169 = vpop.permute.xlu0 %1168
      %v1170 = vrot.slane %v1161, 4
      %v1171 = vrot.slane %v1163, 4
      %v1172 = vrot.slane %v1165, 4
      %v1173 = vrot.slane %v1167, 4
      %v1174 = vrot.slane %v1169, 4
      %v1175 = vsel %vm143, %v1170, %v1171
      %vm1176 = vcmask 654336
      %v1177 = vsel %vm1176, %v1161, %v1175
      %v1178 = vsel %vm143, %v1171, %v1172
      %v1179 = vsel %vm1176, %v1163, %v1178
      %v1180 = vsel %vm143, %v1172, %v1173
      %v1181 = vsel %vm1176, %v1165, %v1180
      %v1182 = vsel %vm143, %v1173, %v1174
      %v1183 = vsel %vm1176, %v1167, %v1182
      %v1184 = vsel %vm1176, %v1169, %v1174
      %1190 = vst [vmem:[#allocation2 + $0x438] sm:$0xff] %v1177
      %1191 = vst [vmem:[#allocation2 + $0x440] sm:$0xff] %v1179
      %1192 = vst [vmem:[#allocation2 + $0x448] sm:$0xff] %v1181
      %1193 = vst [vmem:[#allocation2 + $0x450] sm:$0xff] %v1183
      %1194 = vst [vmem:[#allocation2 + $0x458] sm:$0xf] %v1184
      %1195 = vrot.lane.b32.xlu0 %v118, 72
      %v1196 = vpop.permute.xlu0 %1195
      %1197 = vrot.lane.b32.xlu0 %v119, 72
      %v1198 = vpop.permute.xlu0 %1197
      %1199 = vrot.lane.b32.xlu0 %v120, 72
      %v1200 = vpop.permute.xlu0 %1199
      %1201 = vrot.lane.b32.xlu0 %v121, 72
      %v1202 = vpop.permute.xlu0 %1201
      %1203 = vrot.lane.b32.xlu0 %v122, 72
      %v1204 = vpop.permute.xlu0 %1203
      %v1205 = vrot.slane %v1196, 4
      %v1206 = vrot.slane %v1198, 4
      %v1207 = vrot.slane %v1200, 4
      %v1208 = vrot.slane %v1202, 4
      %v1209 = vrot.slane %v1204, 4
      %v1210 = vsel %vm143, %v1205, %v1206
      %vm1211 = vcmask 588800
      %v1212 = vsel %vm1211, %v1196, %v1210
      %v1213 = vsel %vm143, %v1206, %v1207
      %v1214 = vsel %vm1211, %v1198, %v1213
      %v1215 = vsel %vm143, %v1207, %v1208
      %v1216 = vsel %vm1211, %v1200, %v1215
      %v1217 = vsel %vm143, %v1208, %v1209
      %v1218 = vsel %vm1211, %v1202, %v1217
      %v1219 = vsel %vm1211, %v1204, %v1209
      %1225 = vst [vmem:[#allocation2 + $0x45c] sm:$0xff] %v1212
      %1226 = vst [vmem:[#allocation2 + $0x464] sm:$0xff] %v1214
      %1227 = vst [vmem:[#allocation2 + $0x46c] sm:$0xff] %v1216
      %1228 = vst [vmem:[#allocation2 + $0x474] sm:$0xff] %v1218
      %1229 = vst [vmem:[#allocation2 + $0x47c] sm:$0xf] %v1219
      %1230 = vrot.lane.b32.xlu0 %v118, 32
      %v1231 = vpop.permute.xlu0 %1230
      %1232 = vrot.lane.b32.xlu0 %v119, 32
      %v1233 = vpop.permute.xlu0 %1232
      %1234 = vrot.lane.b32.xlu0 %v120, 32
      %v1235 = vpop.permute.xlu0 %1234
      %1236 = vrot.lane.b32.xlu0 %v121, 32
      %v1237 = vpop.permute.xlu0 %1236
      %1238 = vrot.lane.b32.xlu0 %v122, 32
      %v1239 = vpop.permute.xlu0 %1238
      %v1240 = vrot.slane %v1231, 4
      %v1241 = vrot.slane %v1233, 4
      %v1242 = vrot.slane %v1235, 4
      %v1243 = vrot.slane %v1237, 4
      %v1244 = vrot.slane %v1239, 4
      %v1245 = vsel %vm143, %v1240, %v1241
      %vm1246 = vcmask 261120
      %v1247 = vsel %vm1246, %v1231, %v1245
      %v1248 = vsel %vm143, %v1241, %v1242
      %v1249 = vsel %vm1246, %v1233, %v1248
      %v1250 = vsel %vm143, %v1242, %v1243
      %v1251 = vsel %vm1246, %v1235, %v1250
      %v1252 = vsel %vm143, %v1243, %v1244
      %v1253 = vsel %vm1246, %v1237, %v1252
      %v1254 = vsel %vm1246, %v1239, %v1244
      %1260 = vst [vmem:[#allocation2 + $0x480] sm:$0xff] %v1247
      %1261 = vst [vmem:[#allocation2 + $0x488] sm:$0xff] %v1249
      %1262 = vst [vmem:[#allocation2 + $0x490] sm:$0xff] %v1251
      %1263 = vst [vmem:[#allocation2 + $0x498] sm:$0xff] %v1253
      %1264 = vst [vmem:[#allocation2 + $0x4a0] sm:$0xf] %v1254
      %1265 = vrot.lane.b32.xlu0 %v118, 24
      %v1266 = vpop.permute.xlu0 %1265
      %1267 = vrot.lane.b32.xlu0 %v119, 24
      %v1268 = vpop.permute.xlu0 %1267
      %1269 = vrot.lane.b32.xlu0 %v120, 24
      %v1270 = vpop.permute.xlu0 %1269
      %1271 = vrot.lane.b32.xlu0 %v121, 24
      %v1272 = vpop.permute.xlu0 %1271
      %1273 = vrot.lane.b32.xlu0 %v122, 24
      %v1274 = vpop.permute.xlu0 %1273
      %v1275 = vrot.slane %v1266, 4
      %v1276 = vrot.slane %v1268, 4
      %v1277 = vrot.slane %v1270, 4
      %v1278 = vrot.slane %v1272, 4
      %v1279 = vrot.slane %v1274, 4
      %v1280 = vsel %vm143, %v1275, %v1276
      %vm1281 = vcmask 195584
      %v1282 = vsel %vm1281, %v1266, %v1280
      %v1283 = vsel %vm143, %v1276, %v1277
      %v1284 = vsel %vm1281, %v1268, %v1283
      %v1285 = vsel %vm143, %v1277, %v1278
      %v1286 = vsel %vm1281, %v1270, %v1285
      %v1287 = vsel %vm143, %v1278, %v1279
      %v1288 = vsel %vm1281, %v1272, %v1287
      %v1289 = vsel %vm1281, %v1274, %v1279
      %1295 = vst [vmem:[#allocation2 + $0x4a4] sm:$0xff] %v1282
      %1296 = vst [vmem:[#allocation2 + $0x4ac] sm:$0xff] %v1284
      %1297 = vst [vmem:[#allocation2 + $0x4b4] sm:$0xff] %v1286
      %1298 = vst [vmem:[#allocation2 + $0x4bc] sm:$0xff] %v1288
      %1299 = vst [vmem:[#allocation2 + $0x4c4] sm:$0xf] %v1289
      %1300 = vrot.lane.b32.xlu0 %v829, 112
      %v1301 = vpop.permute.xlu0 %1300
      %1302 = vrot.lane.b32.xlu0 %v830, 112
      %v1303 = vpop.permute.xlu0 %1302
      %1304 = vrot.lane.b32.xlu0 %v831, 112
      %v1305 = vpop.permute.xlu0 %1304
      %1306 = vrot.lane.b32.xlu0 %v832, 112
      %v1307 = vpop.permute.xlu0 %1306
      %1308 = vrot.lane.b32.xlu0 %v833, 112
      %v1309 = vpop.permute.xlu0 %1308
      %v1310 = vrot.slane %v1301, 4
      %v1311 = vrot.slane %v1303, 4
      %v1312 = vrot.slane %v1305, 4
      %v1313 = vrot.slane %v1307, 4
      %v1314 = vrot.slane %v1309, 4
      %v1315 = vsel %vm143, %v1310, %v1311
      %vm1316 = vcmask 916480
      %v1317 = vsel %vm1316, %v1301, %v1315
      %v1318 = vsel %vm143, %v1311, %v1312
      %v1319 = vsel %vm1316, %v1303, %v1318
      %v1320 = vsel %vm143, %v1312, %v1313
      %v1321 = vsel %vm1316, %v1305, %v1320
      %v1322 = vsel %vm143, %v1313, %v1314
      %v1323 = vsel %vm1316, %v1307, %v1322
      %v1324 = vsel %vm1316, %v1309, %v1314
      %1330 = vst [vmem:[#allocation2 + $0x4c8] sm:$0xff] %v1317
      %1331 = vst [vmem:[#allocation2 + $0x4d0] sm:$0xff] %v1319
      %1332 = vst [vmem:[#allocation2 + $0x4d8] sm:$0xff] %v1321
      %1333 = vst [vmem:[#allocation2 + $0x4e0] sm:$0xff] %v1323
      %1334 = vst [vmem:[#allocation2 + $0x4e8] sm:$0xf] %v1324
      %1335 = vrot.lane.b32.xlu0 %v829, 104
      %v1336 = vpop.permute.xlu0 %1335
      %1337 = vrot.lane.b32.xlu0 %v830, 104
      %v1338 = vpop.permute.xlu0 %1337
      %1339 = vrot.lane.b32.xlu0 %v831, 104
      %v1340 = vpop.permute.xlu0 %1339
      %1341 = vrot.lane.b32.xlu0 %v832, 104
      %v1342 = vpop.permute.xlu0 %1341
      %1343 = vrot.lane.b32.xlu0 %v833, 104
      %v1344 = vpop.permute.xlu0 %1343
      %v1345 = vrot.slane %v1336, 4
      %v1346 = vrot.slane %v1338, 4
      %v1347 = vrot.slane %v1340, 4
      %v1348 = vrot.slane %v1342, 4
      %v1349 = vrot.slane %v1344, 4
      %v1350 = vsel %vm143, %v1345, %v1346
      %vm1351 = vcmask 850944
      %v1352 = vsel %vm1351, %v1336, %v1350
      %v1353 = vsel %vm143, %v1346, %v1347
      %v1354 = vsel %vm1351, %v1338, %v1353
      %v1355 = vsel %vm143, %v1347, %v1348
      %v1356 = vsel %vm1351, %v1340, %v1355
      %v1357 = vsel %vm143, %v1348, %v1349
      %v1358 = vsel %vm1351, %v1342, %v1357
      %v1359 = vsel %vm1351, %v1344, %v1349
      %1365 = vst [vmem:[#allocation2 + $0x4ec] sm:$0xff] %v1352
      %1366 = vst [vmem:[#allocation2 + $0x4f4] sm:$0xff] %v1354
      %1367 = vst [vmem:[#allocation2 + $0x4fc] sm:$0xff] %v1356
      %1368 = vst [vmem:[#allocation2 + $0x504] sm:$0xff] %v1358
      %1369 = vst [vmem:[#allocation2 + $0x50c] sm:$0xf] %v1359
      %1370 = vrot.lane.b32.xlu0 %v829, 64
      %v1371 = vpop.permute.xlu0 %1370
      %1372 = vrot.lane.b32.xlu0 %v830, 64
      %v1373 = vpop.permute.xlu0 %1372
      %1374 = vrot.lane.b32.xlu0 %v831, 64
      %v1375 = vpop.permute.xlu0 %1374
      %1376 = vrot.lane.b32.xlu0 %v832, 64
      %v1377 = vpop.permute.xlu0 %1376
      %1378 = vrot.lane.b32.xlu0 %v833, 64
      %v1379 = vpop.permute.xlu0 %1378
      %v1380 = vrot.slane %v1371, 4
      %v1381 = vrot.slane %v1373, 4
      %v1382 = vrot.slane %v1375, 4
      %v1383 = vrot.slane %v1377, 4
      %v1384 = vrot.slane %v1379, 4
      %v1385 = vsel %vm143, %v1380, %v1381
      %vm1386 = vcmask 523264
      %v1387 = vsel %vm1386, %v1371, %v1385
      %v1388 = vsel %vm143, %v1381, %v1382
      %v1389 = vsel %vm1386, %v1373, %v1388
      %v1390 = vsel %vm143, %v1382, %v1383
      %v1391 = vsel %vm1386, %v1375, %v1390
      %v1392 = vsel %vm143, %v1383, %v1384
      %v1393 = vsel %vm1386, %v1377, %v1392
      %v1394 = vsel %vm1386, %v1379, %v1384
      %1400 = vst [vmem:[#allocation2 + $0x510] sm:$0xff] %v1387
      %1401 = vst [vmem:[#allocation2 + $0x518] sm:$0xff] %v1389
      %1402 = vst [vmem:[#allocation2 + $0x520] sm:$0xff] %v1391
      %1403 = vst [vmem:[#allocation2 + $0x528] sm:$0xff] %v1393
      %1404 = vst [vmem:[#allocation2 + $0x530] sm:$0xf] %v1394
      %1405 = vrot.lane.b32.xlu0 %v829, 62
      %v1406 = vpop.permute.xlu0 %1405
      %1407 = vrot.lane.b32.xlu0 %v830, 62
      %v1408 = vpop.permute.xlu0 %1407
      %1409 = vrot.lane.b32.xlu0 %v831, 62
      %v1410 = vpop.permute.xlu0 %1409
      %1411 = vrot.lane.b32.xlu0 %v832, 62
      %v1412 = vpop.permute.xlu0 %1411
      %1413 = vrot.lane.b32.xlu0 %v833, 62
      %v1414 = vpop.permute.xlu0 %1413
      %v1415 = vrot.slane %v1406, 4
      %v1416 = vrot.slane %v1408, 4
      %v1417 = vrot.slane %v1410, 4
      %v1418 = vrot.slane %v1412, 4
      %v1419 = vrot.slane %v1414, 4
      %v1420 = vsel %vm143, %v1415, %v1416
      %vm1421 = vcmask 506880
      %v1422 = vsel %vm1421, %v1406, %v1420
      %v1423 = vsel %vm143, %v1416, %v1417
      %v1424 = vsel %vm1421, %v1408, %v1423
      %v1425 = vsel %vm143, %v1417, %v1418
      %v1426 = vsel %vm1421, %v1410, %v1425
      %v1427 = vsel %vm143, %v1418, %v1419
      %v1428 = vsel %vm1421, %v1412, %v1427
      %v1429 = vsel %vm1421, %v1414, %v1419
      %1435 = vst [vmem:[#allocation2 + $0x534] sm:$0xff] %v1422
      %1436 = vst [vmem:[#allocation2 + $0x53c] sm:$0xff] %v1424
      %1437 = vst [vmem:[#allocation2 + $0x544] sm:$0xff] %v1426
      %1438 = vst [vmem:[#allocation2 + $0x54c] sm:$0xff] %v1428
      %1439 = vst [vmem:[#allocation2 + $0x554] sm:$0xf] %v1429
      %1440 = vrot.lane.b32.xlu0 %v829, 60
      %v1441 = vpop.permute.xlu0 %1440
      %1442 = vrot.lane.b32.xlu0 %v830, 60
      %v1443 = vpop.permute.xlu0 %1442
      %1444 = vrot.lane.b32.xlu0 %v831, 60
      %v1445 = vpop.permute.xlu0 %1444
      %1446 = vrot.lane.b32.xlu0 %v832, 60
      %v1447 = vpop.permute.xlu0 %1446
      %1448 = vrot.lane.b32.xlu0 %v833, 60
      %v1449 = vpop.permute.xlu0 %1448
      %v1450 = vrot.slane %v1441, 4
      %v1451 = vrot.slane %v1443, 4
      %v1452 = vrot.slane %v1445, 4
      %v1453 = vrot.slane %v1447, 4
      %v1454 = vrot.slane %v1449, 4
      %v1455 = vsel %vm143, %v1450, %v1451
      %vm1456 = vcmask 490496
      %v1457 = vsel %vm1456, %v1441, %v1455
      %v1458 = vsel %vm143, %v1451, %v1452
      %v1459 = vsel %vm1456, %v1443, %v1458
      %v1460 = vsel %vm143, %v1452, %v1453
      %v1461 = vsel %vm1456, %v1445, %v1460
      %v1462 = vsel %vm143, %v1453, %v1454
      %v1463 = vsel %vm1456, %v1447, %v1462
      %v1464 = vsel %vm1456, %v1449, %v1454
      %1470 = vst [vmem:[#allocation2 + $0x558] sm:$0xff] %v1457
      %1471 = vst [vmem:[#allocation2 + $0x560] sm:$0xff] %v1459
      %1472 = vst [vmem:[#allocation2 + $0x568] sm:$0xff] %v1461
      %1473 = vst [vmem:[#allocation2 + $0x570] sm:$0xff] %v1463
      %1474 = vst [vmem:[#allocation2 + $0x578] sm:$0xf] %v1464
      %1475 = vrot.lane.b32.xlu0 %v829, 58
      %v1476 = vpop.permute.xlu0 %1475
      %1477 = vrot.lane.b32.xlu0 %v830, 58
      %v1478 = vpop.permute.xlu0 %1477
      %1479 = vrot.lane.b32.xlu0 %v831, 58
      %v1480 = vpop.permute.xlu0 %1479
      %1481 = vrot.lane.b32.xlu0 %v832, 58
      %v1482 = vpop.permute.xlu0 %1481
      %1483 = vrot.lane.b32.xlu0 %v833, 58
      %v1484 = vpop.permute.xlu0 %1483
      %v1485 = vrot.slane %v1476, 4
      %v1486 = vrot.slane %v1478, 4
      %v1487 = vrot.slane %v1480, 4
      %v1488 = vrot.slane %v1482, 4
      %v1489 = vrot.slane %v1484, 4
      %v1490 = vsel %vm143, %v1485, %v1486
      %vm1491 = vcmask 474112
      %v1492 = vsel %vm1491, %v1476, %v1490
      %v1493 = vsel %vm143, %v1486, %v1487
      %v1494 = vsel %vm1491, %v1478, %v1493
      %v1495 = vsel %vm143, %v1487, %v1488
      %v1496 = vsel %vm1491, %v1480, %v1495
      %v1497 = vsel %vm143, %v1488, %v1489
      %v1498 = vsel %vm1491, %v1482, %v1497
      %v1499 = vsel %vm1491, %v1484, %v1489
      %1505 = vst [vmem:[#allocation2 + $0x57c] sm:$0xff] %v1492
      %1506 = vst [vmem:[#allocation2 + $0x584] sm:$0xff] %v1494
      %1507 = vst [vmem:[#allocation2 + $0x58c] sm:$0xff] %v1496
      %1508 = vst [vmem:[#allocation2 + $0x594] sm:$0xff] %v1498
      %1509 = vst [vmem:[#allocation2 + $0x59c] sm:$0xf] %v1499
      %1510 = vrot.lane.b32.xlu0 %v829, 56
      %v1511 = vpop.permute.xlu0 %1510
      %1512 = vrot.lane.b32.xlu0 %v830, 56
      %v1513 = vpop.permute.xlu0 %1512
      %1514 = vrot.lane.b32.xlu0 %v831, 56
      %v1515 = vpop.permute.xlu0 %1514
      %1516 = vrot.lane.b32.xlu0 %v832, 56
      %v1517 = vpop.permute.xlu0 %1516
      %1518 = vrot.lane.b32.xlu0 %v833, 56
      %v1519 = vpop.permute.xlu0 %1518
      %v1520 = vrot.slane %v1511, 4
      %v1521 = vrot.slane %v1513, 4
      %v1522 = vrot.slane %v1515, 4
      %v1523 = vrot.slane %v1517, 4
      %v1524 = vrot.slane %v1519, 4
      %v1525 = vsel %vm143, %v1520, %v1521
      %vm1526 = vcmask 457728
      %v1527 = vsel %vm1526, %v1511, %v1525
      %v1528 = vsel %vm143, %v1521, %v1522
      %v1529 = vsel %vm1526, %v1513, %v1528
      %v1530 = vsel %vm143, %v1522, %v1523
      %v1531 = vsel %vm1526, %v1515, %v1530
      %v1532 = vsel %vm143, %v1523, %v1524
      %v1533 = vsel %vm1526, %v1517, %v1532
      %v1534 = vsel %vm1526, %v1519, %v1524
      %1540 = vst [vmem:[#allocation2 + $0x5a0] sm:$0xff] %v1527
      %1541 = vst [vmem:[#allocation2 + $0x5a8] sm:$0xff] %v1529
      %1542 = vst [vmem:[#allocation2 + $0x5b0] sm:$0xff] %v1531
      %1543 = vst [vmem:[#allocation2 + $0x5b8] sm:$0xff] %v1533
      %1544 = vst [vmem:[#allocation2 + $0x5c0] sm:$0xf] %v1534
    $region45: #{tpu_custom_call.1} parent=1 // pred_fallthru
      _
    %s1545 = smul.u32 0, 8
    %s1546 = sshra.s32 %s1545, 3
    %s1547 = sand.u32 %s1545, 7
    %s1548 = smul.u32 %s1546, 11
    %s1549 = smul.addr %s1548, 8
    %s1550 = scalar_lea.vmem [#allocation7], %s1549
    %v1551 = vld [vmem:[%s1550] sm:$0xff]
    %v1552 = vld [vmem:[%s1550 + $0x8] sm:$0xff]
    %v1553 = vld [vmem:[%s1550 + $0x10] sm:$0xff]
    %v1554 = vld [vmem:[%s1550 + $0x18] sm:$0xff]
    %v1555 = vld [vmem:[%s1550 + $0x20] sm:$0xff]
    %v1556 = vld [vmem:[%s1550 + $0x28] sm:$0xff]
    %v1557 = vld [vmem:[%s1550 + $0x30] sm:$0xff]
    %v1558 = vld [vmem:[%s1550 + $0x38] sm:$0xff]
    %v1559 = vld [vmem:[%s1550 + $0x40] sm:$0xff]
    %v1560 = vld [vmem:[%s1550 + $0x48] sm:$0xff]
    %v1561 = vld [vmem:[#allocation8] sm:$0xff]
    %v1562 = vld [vmem:[#allocation8 + $0x8] sm:$0x7]
    %s1563 = sld [smem:[#allocation3 + $0x3]]
    %v1564 = vstv %s1563
    %v1565 = vmul.f32 %v1564, %v1551
    %v1566 = vmul.f32 %v1564, %v1552
    %v1567 = vmul.f32 %v1564, %v1553
    %v1568 = vmul.f32 %v1564, %v1554
    %v1569 = vmul.f32 %v1564, %v1555
    %v1570 = vmul.f32 %v1564, %v1556
    %v1571 = vmul.f32 %v1564, %v1557
    %v1572 = vmul.f32 %v1564, %v1558
    %v1573 = vmul.f32 %v1564, %v1559
    %v1574 = vmul.f32 %v1564, %v1560
    %vm1575 = vcmp.gt.f32.partialorder %v1561, 0.5
    %vm1576 = vcmp.gt.f32.partialorder %v1562, 0.5
    %v1577 = vsel %vm1575, 1, 0
    %v1578 = vsel %vm1576, 1, 0
    %v1579 = vperm.slane %v1577, 0
    %v1580 = vperm.slane %v1577, 1
    %v1581 = vperm.slane %v1577, 2
    %v1582 = vperm.slane %v1577, 3
    %v1583 = vperm.slane %v1577, 4
    %v1584 = vperm.slane %v1577, 5
    %v1585 = vperm.slane %v1577, 6
    %v1586 = vperm.slane %v1577, 7
    %v1587 = vperm.slane %v1578, 0
    %v1588 = vperm.slane %v1578, 1
    %vm1589 = vcmp.eq.s32.totalorder %v1579, 1
    %vm1590 = vcmp.eq.s32.totalorder %v1580, 1
    %vm1591 = vcmp.eq.s32.totalorder %v1581, 1
    %vm1592 = vcmp.eq.s32.totalorder %v1582, 1
    %vm1593 = vcmp.eq.s32.totalorder %v1583, 1
    %vm1594 = vcmp.eq.s32.totalorder %v1584, 1
    %vm1595 = vcmp.eq.s32.totalorder %v1585, 1
    %vm1596 = vcmp.eq.s32.totalorder %v1586, 1
    %vm1597 = vcmp.eq.s32.totalorder %v1587, 1
    %vm1598 = vcmp.eq.s32.totalorder %v1588, 1
    %v1599 = vsel %vm1589, %v1551, -1e+30
    %v1600 = vsel %vm1590, %v1552, -1e+30
    %v1601 = vsel %vm1591, %v1553, -1e+30
    %v1602 = vsel %vm1592, %v1554, -1e+30
    %v1603 = vsel %vm1593, %v1555, -1e+30
    %v1604 = vsel %vm1594, %v1556, -1e+30
    %v1605 = vsel %vm1595, %v1557, -1e+30
    %v1606 = vsel %vm1596, %v1558, -1e+30
    %v1607 = vsel %vm1597, %v1559, -1e+30
    %v1608 = vsel %vm1598, %v1560, -1e+30
    %1619 = vrot.lane.b32.xlu0 %v1599, 127
    %v1620 = vpop.permute.xlu0 %1619
    %1621 = vrot.lane.b32.xlu0 %v1600, 127
    %v1622 = vpop.permute.xlu0 %1621
    %1623 = vrot.lane.b32.xlu0 %v1601, 127
    %v1624 = vpop.permute.xlu0 %1623
    %1625 = vrot.lane.b32.xlu0 %v1602, 127
    %v1626 = vpop.permute.xlu0 %1625
    %1627 = vrot.lane.b32.xlu0 %v1603, 127
    %v1628 = vpop.permute.xlu0 %1627
    %1629 = vrot.lane.b32.xlu0 %v1604, 127
    %v1630 = vpop.permute.xlu0 %1629
    %1631 = vrot.lane.b32.xlu0 %v1605, 127
    %v1632 = vpop.permute.xlu0 %1631
    %1633 = vrot.lane.b32.xlu0 %v1606, 127
    %v1634 = vpop.permute.xlu0 %1633
    %1635 = vrot.lane.b32.xlu0 %v1607, 127
    %v1636 = vpop.permute.xlu0 %1635
    %1637 = vrot.lane.b32.xlu0 %v1608, 127
    %v1638 = vpop.permute.xlu0 %1637
    %vm1639 = vcmask 1039360
    %v1640 = vsel %vm1639, %v1620, %v1622
    %v1641 = vsel %vm1639, %v1622, %v1624
    %v1642 = vsel %vm1639, %v1624, %v1626
    %v1643 = vsel %vm1639, %v1626, %v1628
    %v1644 = vsel %vm1639, %v1628, %v1630
    %v1645 = vsel %vm1639, %v1630, %v1632
    %v1646 = vsel %vm1639, %v1632, %v1634
    %v1647 = vsel %vm1639, %v1634, %v1636
    %v1648 = vsel %vm1639, %v1636, %v1638
    %v1659 = vmax.f32 %v1599, %v1640
    %v1660 = vmax.f32 %v1600, %v1641
    %v1661 = vmax.f32 %v1601, %v1642
    %v1662 = vmax.f32 %v1602, %v1643
    %v1663 = vmax.f32 %v1603, %v1644
    %v1664 = vmax.f32 %v1604, %v1645
    %v1665 = vmax.f32 %v1605, %v1646
    %v1666 = vmax.f32 %v1606, %v1647
    %v1667 = vmax.f32 %v1607, %v1648
    %v1668 = vmax.f32 %v1608, %v1638
    %1679 = vrot.lane.b32.xlu0 %v1551, 127
    %v1680 = vpop.permute.xlu0 %1679
    %1681 = vrot.lane.b32.xlu0 %v1552, 127
    %v1682 = vpop.permute.xlu0 %1681
    %1683 = vrot.lane.b32.xlu0 %v1553, 127
    %v1684 = vpop.permute.xlu0 %1683
    %1685 = vrot.lane.b32.xlu0 %v1554, 127
    %v1686 = vpop.permute.xlu0 %1685
    %1687 = vrot.lane.b32.xlu0 %v1555, 127
    %v1688 = vpop.permute.xlu0 %1687
    %1689 = vrot.lane.b32.xlu0 %v1556, 127
    %v1690 = vpop.permute.xlu0 %1689
    %1691 = vrot.lane.b32.xlu0 %v1557, 127
    %v1692 = vpop.permute.xlu0 %1691
    %1693 = vrot.lane.b32.xlu0 %v1558, 127
    %v1694 = vpop.permute.xlu0 %1693
    %1695 = vrot.lane.b32.xlu0 %v1559, 127
    %v1696 = vpop.permute.xlu0 %1695
    %1697 = vrot.lane.b32.xlu0 %v1560, 127
    %v1698 = vpop.permute.xlu0 %1697
    %v1699 = vsel %vm1639, %v1680, %v1682
    %v1700 = vsel %vm1639, %v1682, %v1684
    %v1701 = vsel %vm1639, %v1684, %v1686
    %v1702 = vsel %vm1639, %v1686, %v1688
    %v1703 = vsel %vm1639, %v1688, %v1690
    %v1704 = vsel %vm1639, %v1690, %v1692
    %v1705 = vsel %vm1639, %v1692, %v1694
    %v1706 = vsel %vm1639, %v1694, %v1696
    %v1707 = vsel %vm1639, %v1696, %v1698
    %v1718 = vadd.f32 %v1551, %v1699
    %v1719 = vadd.f32 %v1552, %v1700
    %v1720 = vadd.f32 %v1553, %v1701
    %v1721 = vadd.f32 %v1554, %v1702
    %v1722 = vadd.f32 %v1555, %v1703
    %v1723 = vadd.f32 %v1556, %v1704
    %v1724 = vadd.f32 %v1557, %v1705
    %v1725 = vadd.f32 %v1558, %v1706
    %v1726 = vadd.f32 %v1559, %v1707
    %v1727 = vadd.f32 %v1560, %v1698
    %1728 = vrot.lane.b32.xlu0 %v1599, 126
    %v1729 = vpop.permute.xlu0 %1728
    %1730 = vrot.lane.b32.xlu0 %v1600, 126
    %v1731 = vpop.permute.xlu0 %1730
    %1732 = vrot.lane.b32.xlu0 %v1601, 126
    %v1733 = vpop.permute.xlu0 %1732
    %1734 = vrot.lane.b32.xlu0 %v1602, 126
    %v1735 = vpop.permute.xlu0 %1734
    %1736 = vrot.lane.b32.xlu0 %v1603, 126
    %v1737 = vpop.permute.xlu0 %1736
    %1738 = vrot.lane.b32.xlu0 %v1604, 126
    %v1739 = vpop.permute.xlu0 %1738
    %1740 = vrot.lane.b32.xlu0 %v1605, 126
    %v1741 = vpop.permute.xlu0 %1740
    %1742 = vrot.lane.b32.xlu0 %v1606, 126
    %v1743 = vpop.permute.xlu0 %1742
    %1744 = vrot.lane.b32.xlu0 %v1607, 126
    %v1745 = vpop.permute.xlu0 %1744
    %1746 = vrot.lane.b32.xlu0 %v1608, 126
    %v1747 = vpop.permute.xlu0 %1746
    %vm1748 = vcmask 1031168
    %v1749 = vsel %vm1748, %v1729, %v1731
    %v1750 = vsel %vm1748, %v1731, %v1733
    %v1751 = vsel %vm1748, %v1733, %v1735
    %v1752 = vsel %vm1748, %v1735, %v1737
    %v1753 = vsel %vm1748, %v1737, %v1739
    %v1754 = vsel %vm1748, %v1739, %v1741
    %v1755 = vsel %vm1748, %v1741, %v1743
    %v1756 = vsel %vm1748, %v1743, %v1745
    %v1757 = vsel %vm1748, %v1745, %v1747
    %v1768 = vmax.f32 %v1659, %v1749
    %v1769 = vmax.f32 %v1660, %v1750
    %v1770 = vmax.f32 %v1661, %v1751
    %v1771 = vmax.f32 %v1662, %v1752
    %v1772 = vmax.f32 %v1663, %v1753
    %v1773 = vmax.f32 %v1664, %v1754
    %v1774 = vmax.f32 %v1665, %v1755
    %v1775 = vmax.f32 %v1666, %v1756
    %v1776 = vmax.f32 %v1667, %v1757
    %v1777 = vmax.f32 %v1668, %v1747
    %1778 = vrot.lane.b32.xlu0 %v1551, 126
    %v1779 = vpop.permute.xlu0 %1778
    %1780 = vrot.lane.b32.xlu0 %v1552, 126
    %v1781 = vpop.permute.xlu0 %1780
    %1782 = vrot.lane.b32.xlu0 %v1553, 126
    %v1783 = vpop.permute.xlu0 %1782
    %1784 = vrot.lane.b32.xlu0 %v1554, 126
    %v1785 = vpop.permute.xlu0 %1784
    %1786 = vrot.lane.b32.xlu0 %v1555, 126
    %v1787 = vpop.permute.xlu0 %1786
    %1788 = vrot.lane.b32.xlu0 %v1556, 126
    %v1789 = vpop.permute.xlu0 %1788
    %1790 = vrot.lane.b32.xlu0 %v1557, 126
    %v1791 = vpop.permute.xlu0 %1790
    %1792 = vrot.lane.b32.xlu0 %v1558, 126
    %v1793 = vpop.permute.xlu0 %1792
    %1794 = vrot.lane.b32.xlu0 %v1559, 126
    %v1795 = vpop.permute.xlu0 %1794
    %1796 = vrot.lane.b32.xlu0 %v1560, 126
    %v1797 = vpop.permute.xlu0 %1796
    %v1798 = vsel %vm1748, %v1779, %v1781
    %v1799 = vsel %vm1748, %v1781, %v1783
    %v1800 = vsel %vm1748, %v1783, %v1785
    %v1801 = vsel %vm1748, %v1785, %v1787
    %v1802 = vsel %vm1748, %v1787, %v1789
    %v1803 = vsel %vm1748, %v1789, %v1791
    %v1804 = vsel %vm1748, %v1791, %v1793
    %v1805 = vsel %vm1748, %v1793, %v1795
    %v1806 = vsel %vm1748, %v1795, %v1797
    %v1817 = vadd.f32 %v1718, %v1798
    %v1818 = vadd.f32 %v1719, %v1799
    %v1819 = vadd.f32 %v1720, %v1800
    %v1820 = vadd.f32 %v1721, %v1801
    %v1821 = vadd.f32 %v1722, %v1802
    %v1822 = vadd.f32 %v1723, %v1803
    %v1823 = vadd.f32 %v1724, %v1804
    %v1824 = vadd.f32 %v1725, %v1805
    %v1825 = vadd.f32 %v1726, %v1806
    %v1826 = vadd.f32 %v1727, %v1797
    %1827 = vrot.lane.b32.xlu0 %v1599, 104
    %v1828 = vpop.permute.xlu0 %1827
    %1829 = vrot.lane.b32.xlu0 %v1600, 104
    %v1830 = vpop.permute.xlu0 %1829
    %1831 = vrot.lane.b32.xlu0 %v1601, 104
    %v1832 = vpop.permute.xlu0 %1831
    %1833 = vrot.lane.b32.xlu0 %v1602, 104
    %v1834 = vpop.permute.xlu0 %1833
    %1835 = vrot.lane.b32.xlu0 %v1603, 104
    %v1836 = vpop.permute.xlu0 %1835
    %1837 = vrot.lane.b32.xlu0 %v1604, 104
    %v1838 = vpop.permute.xlu0 %1837
    %1839 = vrot.lane.b32.xlu0 %v1605, 104
    %v1840 = vpop.permute.xlu0 %1839
    %1841 = vrot.lane.b32.xlu0 %v1606, 104
    %v1842 = vpop.permute.xlu0 %1841
    %1843 = vrot.lane.b32.xlu0 %v1607, 104
    %v1844 = vpop.permute.xlu0 %1843
    %1845 = vrot.lane.b32.xlu0 %v1608, 104
    %v1846 = vpop.permute.xlu0 %1845
    %vm1847 = vcmask 850944
    %v1848 = vsel %vm1847, %v1828, %v1830
    %v1849 = vsel %vm1847, %v1830, %v1832
    %v1850 = vsel %vm1847, %v1832, %v1834
    %v1851 = vsel %vm1847, %v1834, %v1836
    %v1852 = vsel %vm1847, %v1836, %v1838
    %v1853 = vsel %vm1847, %v1838, %v1840
    %v1854 = vsel %vm1847, %v1840, %v1842
    %v1855 = vsel %vm1847, %v1842, %v1844
    %v1856 = vsel %vm1847, %v1844, %v1846
    %v1867 = vmax.f32 %v1768, %v1848
    %v1868 = vmax.f32 %v1769, %v1849
    %v1869 = vmax.f32 %v1770, %v1850
    %v1870 = vmax.f32 %v1771, %v1851
    %v1871 = vmax.f32 %v1772, %v1852
    %v1872 = vmax.f32 %v1773, %v1853
    %v1873 = vmax.f32 %v1774, %v1854
    %v1874 = vmax.f32 %v1775, %v1855
    %v1875 = vmax.f32 %v1776, %v1856
    %v1876 = vmax.f32 %v1777, %v1846
    %1877 = vrot.lane.b32.xlu0 %v1551, 104
    %v1878 = vpop.permute.xlu0 %1877
    %1879 = vrot.lane.b32.xlu0 %v1552, 104
    %v1880 = vpop.permute.xlu0 %1879
    %1881 = vrot.lane.b32.xlu0 %v1553, 104
    %v1882 = vpop.permute.xlu0 %1881
    %1883 = vrot.lane.b32.xlu0 %v1554, 104
    %v1884 = vpop.permute.xlu0 %1883
    %1885 = vrot.lane.b32.xlu0 %v1555, 104
    %v1886 = vpop.permute.xlu0 %1885
    %1887 = vrot.lane.b32.xlu0 %v1556, 104
    %v1888 = vpop.permute.xlu0 %1887
    %1889 = vrot.lane.b32.xlu0 %v1557, 104
    %v1890 = vpop.permute.xlu0 %1889
    %1891 = vrot.lane.b32.xlu0 %v1558, 104
    %v1892 = vpop.permute.xlu0 %1891
    %1893 = vrot.lane.b32.xlu0 %v1559, 104
    %v1894 = vpop.permute.xlu0 %1893
    %1895 = vrot.lane.b32.xlu0 %v1560, 104
    %v1896 = vpop.permute.xlu0 %1895
    %v1897 = vsel %vm1847, %v1878, %v1880
    %v1898 = vsel %vm1847, %v1880, %v1882
    %v1899 = vsel %vm1847, %v1882, %v1884
    %v1900 = vsel %vm1847, %v1884, %v1886
    %v1901 = vsel %vm1847, %v1886, %v1888
    %v1902 = vsel %vm1847, %v1888, %v1890
    %v1903 = vsel %vm1847, %v1890, %v1892
    %v1904 = vsel %vm1847, %v1892, %v1894
    %v1905 = vsel %vm1847, %v1894, %v1896
    %v1916 = vadd.f32 %v1817, %v1897
    %v1917 = vadd.f32 %v1818, %v1898
    %v1918 = vadd.f32 %v1819, %v1899
    %v1919 = vadd.f32 %v1820, %v1900
    %v1920 = vadd.f32 %v1821, %v1901
    %v1921 = vadd.f32 %v1822, %v1902
    %v1922 = vadd.f32 %v1823, %v1903
    %v1923 = vadd.f32 %v1824, %v1904
    %v1924 = vadd.f32 %v1825, %v1905
    %v1925 = vadd.f32 %v1826, %v1896
    %1926 = vrot.lane.b32.xlu0 %v1599, 103
    %v1927 = vpop.permute.xlu0 %1926
    %1928 = vrot.lane.b32.xlu0 %v1600, 103
    %v1929 = vpop.permute.xlu0 %1928
    %1930 = vrot.lane.b32.xlu0 %v1601, 103
    %v1931 = vpop.permute.xlu0 %1930
    %1932 = vrot.lane.b32.xlu0 %v1602, 103
    %v1933 = vpop.permute.xlu0 %1932
    %1934 = vrot.lane.b32.xlu0 %v1603, 103
    %v1935 = vpop.permute.xlu0 %1934
    %1936 = vrot.lane.b32.xlu0 %v1604, 103
    %v1937 = vpop.permute.xlu0 %1936
    %1938 = vrot.lane.b32.xlu0 %v1605, 103
    %v1939 = vpop.permute.xlu0 %1938
    %1940 = vrot.lane.b32.xlu0 %v1606, 103
    %v1941 = vpop.permute.xlu0 %1940
    %1942 = vrot.lane.b32.xlu0 %v1607, 103
    %v1943 = vpop.permute.xlu0 %1942
    %1944 = vrot.lane.b32.xlu0 %v1608, 103
    %v1945 = vpop.permute.xlu0 %1944
    %vm1946 = vcmask 842752
    %v1947 = vsel %vm1946, %v1927, %v1929
    %v1948 = vsel %vm1946, %v1929, %v1931
    %v1949 = vsel %vm1946, %v1931, %v1933
    %v1950 = vsel %vm1946, %v1933, %v1935
    %v1951 = vsel %vm1946, %v1935, %v1937
    %v1952 = vsel %vm1946, %v1937, %v1939
    %v1953 = vsel %vm1946, %v1939, %v1941
    %v1954 = vsel %vm1946, %v1941, %v1943
    %v1955 = vsel %vm1946, %v1943, %v1945
    %v1966 = vmax.f32 %v1867, %v1947
    %v1967 = vmax.f32 %v1868, %v1948
    %v1968 = vmax.f32 %v1869, %v1949
    %v1969 = vmax.f32 %v1870, %v1950
    %v1970 = vmax.f32 %v1871, %v1951
    %v1971 = vmax.f32 %v1872, %v1952
    %v1972 = vmax.f32 %v1873, %v1953
    %v1973 = vmax.f32 %v1874, %v1954
    %v1974 = vmax.f32 %v1875, %v1955
    %v1975 = vmax.f32 %v1876, %v1945
    %1976 = vrot.lane.b32.xlu0 %v1551, 103
    %v1977 = vpop.permute.xlu0 %1976
    %1978 = vrot.lane.b32.xlu0 %v1552, 103
    %v1979 = vpop.permute.xlu0 %1978
    %1980 = vrot.lane.b32.xlu0 %v1553, 103
    %v1981 = vpop.permute.xlu0 %1980
    %1982 = vrot.lane.b32.xlu0 %v1554, 103
    %v1983 = vpop.permute.xlu0 %1982
    %1984 = vrot.lane.b32.xlu0 %v1555, 103
    %v1985 = vpop.permute.xlu0 %1984
    %1986 = vrot.lane.b32.xlu0 %v1556, 103
    %v1987 = vpop.permute.xlu0 %1986
    %1988 = vrot.lane.b32.xlu0 %v1557, 103
    %v1989 = vpop.permute.xlu0 %1988
    %1990 = vrot.lane.b32.xlu0 %v1558, 103
    %v1991 = vpop.permute.xlu0 %1990
    %1992 = vrot.lane.b32.xlu0 %v1559, 103
    %v1993 = vpop.permute.xlu0 %1992
    %1994 = vrot.lane.b32.xlu0 %v1560, 103
    %v1995 = vpop.permute.xlu0 %1994
    %v1996 = vsel %vm1946, %v1977, %v1979
    %v1997 = vsel %vm1946, %v1979, %v1981
    %v1998 = vsel %vm1946, %v1981, %v1983
    %v1999 = vsel %vm1946, %v1983, %v1985
    %v2000 = vsel %vm1946, %v1985, %v1987
    %v2001 = vsel %vm1946, %v1987, %v1989
    %v2002 = vsel %vm1946, %v1989, %v1991
    %v2003 = vsel %vm1946, %v1991, %v1993
    %v2004 = vsel %vm1946, %v1993, %v1995
    %v2015 = vadd.f32 %v1916, %v1996
    %v2016 = vadd.f32 %v1917, %v1997
    %v2017 = vadd.f32 %v1918, %v1998
    %v2018 = vadd.f32 %v1919, %v1999
    %v2019 = vadd.f32 %v1920, %v2000
    %v2020 = vadd.f32 %v1921, %v2001
    %v2021 = vadd.f32 %v1922, %v2002
    %v2022 = vadd.f32 %v1923, %v2003
    %v2023 = vadd.f32 %v1924, %v2004
    %v2024 = vadd.f32 %v1925, %v1995
    %2025 = vrot.lane.b32.xlu0 %v1599, 102
    %v2026 = vpop.permute.xlu0 %2025
    %2027 = vrot.lane.b32.xlu0 %v1600, 102
    %v2028 = vpop.permute.xlu0 %2027
    %2029 = vrot.lane.b32.xlu0 %v1601, 102
    %v2030 = vpop.permute.xlu0 %2029
    %2031 = vrot.lane.b32.xlu0 %v1602, 102
    %v2032 = vpop.permute.xlu0 %2031
    %2033 = vrot.lane.b32.xlu0 %v1603, 102
    %v2034 = vpop.permute.xlu0 %2033
    %2035 = vrot.lane.b32.xlu0 %v1604, 102
    %v2036 = vpop.permute.xlu0 %2035
    %2037 = vrot.lane.b32.xlu0 %v1605, 102
    %v2038 = vpop.permute.xlu0 %2037
    %2039 = vrot.lane.b32.xlu0 %v1606, 102
    %v2040 = vpop.permute.xlu0 %2039
    %2041 = vrot.lane.b32.xlu0 %v1607, 102
    %v2042 = vpop.permute.xlu0 %2041
    %2043 = vrot.lane.b32.xlu0 %v1608, 102
    %v2044 = vpop.permute.xlu0 %2043
    %vm2045 = vcmask 834560
    %v2046 = vsel %vm2045, %v2026, %v2028
    %v2047 = vsel %vm2045, %v2028, %v2030
    %v2048 = vsel %vm2045, %v2030, %v2032
    %v2049 = vsel %vm2045, %v2032, %v2034
    %v2050 = vsel %vm2045, %v2034, %v2036
    %v2051 = vsel %vm2045, %v2036, %v2038
    %v2052 = vsel %vm2045, %v2038, %v2040
    %v2053 = vsel %vm2045, %v2040, %v2042
    %v2054 = vsel %vm2045, %v2042, %v2044
    %v2065 = vmax.f32 %v1966, %v2046
    %v2066 = vmax.f32 %v1967, %v2047
    %v2067 = vmax.f32 %v1968, %v2048
    %v2068 = vmax.f32 %v1969, %v2049
    %v2069 = vmax.f32 %v1970, %v2050
    %v2070 = vmax.f32 %v1971, %v2051
    %v2071 = vmax.f32 %v1972, %v2052
    %v2072 = vmax.f32 %v1973, %v2053
    %v2073 = vmax.f32 %v1974, %v2054
    %v2074 = vmax.f32 %v1975, %v2044
    %2075 = vrot.lane.b32.xlu0 %v1551, 102
    %v2076 = vpop.permute.xlu0 %2075
    %2077 = vrot.lane.b32.xlu0 %v1552, 102
    %v2078 = vpop.permute.xlu0 %2077
    %2079 = vrot.lane.b32.xlu0 %v1553, 102
    %v2080 = vpop.permute.xlu0 %2079
    %2081 = vrot.lane.b32.xlu0 %v1554, 102
    %v2082 = vpop.permute.xlu0 %2081
    %2083 = vrot.lane.b32.xlu0 %v1555, 102
    %v2084 = vpop.permute.xlu0 %2083
    %2085 = vrot.lane.b32.xlu0 %v1556, 102
    %v2086 = vpop.permute.xlu0 %2085
    %2087 = vrot.lane.b32.xlu0 %v1557, 102
    %v2088 = vpop.permute.xlu0 %2087
    %2089 = vrot.lane.b32.xlu0 %v1558, 102
    %v2090 = vpop.permute.xlu0 %2089
    %2091 = vrot.lane.b32.xlu0 %v1559, 102
    %v2092 = vpop.permute.xlu0 %2091
    %2093 = vrot.lane.b32.xlu0 %v1560, 102
    %v2094 = vpop.permute.xlu0 %2093
    %v2095 = vsel %vm2045, %v2076, %v2078
    %v2096 = vsel %vm2045, %v2078, %v2080
    %v2097 = vsel %vm2045, %v2080, %v2082
    %v2098 = vsel %vm2045, %v2082, %v2084
    %v2099 = vsel %vm2045, %v2084, %v2086
    %v2100 = vsel %vm2045, %v2086, %v2088
    %v2101 = vsel %vm2045, %v2088, %v2090
    %v2102 = vsel %vm2045, %v2090, %v2092
    %v2103 = vsel %vm2045, %v2092, %v2094
    %v2114 = vadd.f32 %v2015, %v2095
    %v2115 = vadd.f32 %v2016, %v2096
    %v2116 = vadd.f32 %v2017, %v2097
    %v2117 = vadd.f32 %v2018, %v2098
    %v2118 = vadd.f32 %v2019, %v2099
    %v2119 = vadd.f32 %v2020, %v2100
    %v2120 = vadd.f32 %v2021, %v2101
    %v2121 = vadd.f32 %v2022, %v2102
    %v2122 = vadd.f32 %v2023, %v2103
    %v2123 = vadd.f32 %v2024, %v2094
    %2124 = vrot.lane.b32.xlu0 %v1599, 80
    %v2125 = vpop.permute.xlu0 %2124
    %2126 = vrot.lane.b32.xlu0 %v1600, 80
    %v2127 = vpop.permute.xlu0 %2126
    %2128 = vrot.lane.b32.xlu0 %v1601, 80
    %v2129 = vpop.permute.xlu0 %2128
    %2130 = vrot.lane.b32.xlu0 %v1602, 80
    %v2131 = vpop.permute.xlu0 %2130
    %2132 = vrot.lane.b32.xlu0 %v1603, 80
    %v2133 = vpop.permute.xlu0 %2132
    %2134 = vrot.lane.b32.xlu0 %v1604, 80
    %v2135 = vpop.permute.xlu0 %2134
    %2136 = vrot.lane.b32.xlu0 %v1605, 80
    %v2137 = vpop.permute.xlu0 %2136
    %2138 = vrot.lane.b32.xlu0 %v1606, 80
    %v2139 = vpop.permute.xlu0 %2138
    %2140 = vrot.lane.b32.xlu0 %v1607, 80
    %v2141 = vpop.permute.xlu0 %2140
    %2142 = vrot.lane.b32.xlu0 %v1608, 80
    %v2143 = vpop.permute.xlu0 %2142
    %vm2144 = vcmask 654336
    %v2145 = vsel %vm2144, %v2125, %v2127
    %v2146 = vsel %vm2144, %v2127, %v2129
    %v2147 = vsel %vm2144, %v2129, %v2131
    %v2148 = vsel %vm2144, %v2131, %v2133
    %v2149 = vsel %vm2144, %v2133, %v2135
    %v2150 = vsel %vm2144, %v2135, %v2137
    %v2151 = vsel %vm2144, %v2137, %v2139
    %v2152 = vsel %vm2144, %v2139, %v2141
    %v2153 = vsel %vm2144, %v2141, %v2143
    %v2164 = vmax.f32 %v2065, %v2145
    %v2165 = vmax.f32 %v2066, %v2146
    %v2166 = vmax.f32 %v2067, %v2147
    %v2167 = vmax.f32 %v2068, %v2148
    %v2168 = vmax.f32 %v2069, %v2149
    %v2169 = vmax.f32 %v2070, %v2150
    %v2170 = vmax.f32 %v2071, %v2151
    %v2171 = vmax.f32 %v2072, %v2152
    %v2172 = vmax.f32 %v2073, %v2153
    %v2173 = vmax.f32 %v2074, %v2143
    %2174 = vrot.lane.b32.xlu0 %v1551, 80
    %v2175 = vpop.permute.xlu0 %2174
    %2176 = vrot.lane.b32.xlu0 %v1552, 80
    %v2177 = vpop.permute.xlu0 %2176
    %2178 = vrot.lane.b32.xlu0 %v1553, 80
    %v2179 = vpop.permute.xlu0 %2178
    %2180 = vrot.lane.b32.xlu0 %v1554, 80
    %v2181 = vpop.permute.xlu0 %2180
    %2182 = vrot.lane.b32.xlu0 %v1555, 80
    %v2183 = vpop.permute.xlu0 %2182
    %2184 = vrot.lane.b32.xlu0 %v1556, 80
    %v2185 = vpop.permute.xlu0 %2184
    %2186 = vrot.lane.b32.xlu0 %v1557, 80
    %v2187 = vpop.permute.xlu0 %2186
    %2188 = vrot.lane.b32.xlu0 %v1558, 80
    %v2189 = vpop.permute.xlu0 %2188
    %2190 = vrot.lane.b32.xlu0 %v1559, 80
    %v2191 = vpop.permute.xlu0 %2190
    %2192 = vrot.lane.b32.xlu0 %v1560, 80
    %v2193 = vpop.permute.xlu0 %2192
    %v2194 = vsel %vm2144, %v2175, %v2177
    %v2195 = vsel %vm2144, %v2177, %v2179
    %v2196 = vsel %vm2144, %v2179, %v2181
    %v2197 = vsel %vm2144, %v2181, %v2183
    %v2198 = vsel %vm2144, %v2183, %v2185
    %v2199 = vsel %vm2144, %v2185, %v2187
    %v2200 = vsel %vm2144, %v2187, %v2189
    %v2201 = vsel %vm2144, %v2189, %v2191
    %v2202 = vsel %vm2144, %v2191, %v2193
    %v2213 = vadd.f32 %v2114, %v2194
    %v2214 = vadd.f32 %v2115, %v2195
    %v2215 = vadd.f32 %v2116, %v2196
    %v2216 = vadd.f32 %v2117, %v2197
    %v2217 = vadd.f32 %v2118, %v2198
    %v2218 = vadd.f32 %v2119, %v2199
    %v2219 = vadd.f32 %v2120, %v2200
    %v2220 = vadd.f32 %v2121, %v2201
    %v2221 = vadd.f32 %v2122, %v2202
    %v2222 = vadd.f32 %v2123, %v2193
    %2223 = vrot.lane.b32.xlu0 %v1599, 79
    %v2224 = vpop.permute.xlu0 %2223
    %2225 = vrot.lane.b32.xlu0 %v1600, 79
    %v2226 = vpop.permute.xlu0 %2225
    %2227 = vrot.lane.b32.xlu0 %v1601, 79
    %v2228 = vpop.permute.xlu0 %2227
    %2229 = vrot.lane.b32.xlu0 %v1602, 79
    %v2230 = vpop.permute.xlu0 %2229
    %2231 = vrot.lane.b32.xlu0 %v1603, 79
    %v2232 = vpop.permute.xlu0 %2231
    %2233 = vrot.lane.b32.xlu0 %v1604, 79
    %v2234 = vpop.permute.xlu0 %2233
    %2235 = vrot.lane.b32.xlu0 %v1605, 79
    %v2236 = vpop.permute.xlu0 %2235
    %2237 = vrot.lane.b32.xlu0 %v1606, 79
    %v2238 = vpop.permute.xlu0 %2237
    %2239 = vrot.lane.b32.xlu0 %v1607, 79
    %v2240 = vpop.permute.xlu0 %2239
    %2241 = vrot.lane.b32.xlu0 %v1608, 79
    %v2242 = vpop.permute.xlu0 %2241
    %vm2243 = vcmask 646144
    %v2244 = vsel %vm2243, %v2224, %v2226
    %v2245 = vsel %vm2243, %v2226, %v2228
    %v2246 = vsel %vm2243, %v2228, %v2230
    %v2247 = vsel %vm2243, %v2230, %v2232
    %v2248 = vsel %vm2243, %v2232, %v2234
    %v2249 = vsel %vm2243, %v2234, %v2236
    %v2250 = vsel %vm2243, %v2236, %v2238
    %v2251 = vsel %vm2243, %v2238, %v2240
    %v2252 = vsel %vm2243, %v2240, %v2242
    %v2263 = vmax.f32 %v2164, %v2244
    %v2264 = vmax.f32 %v2165, %v2245
    %v2265 = vmax.f32 %v2166, %v2246
    %v2266 = vmax.f32 %v2167, %v2247
    %v2267 = vmax.f32 %v2168, %v2248
    %v2268 = vmax.f32 %v2169, %v2249
    %v2269 = vmax.f32 %v2170, %v2250
    %v2270 = vmax.f32 %v2171, %v2251
    %v2271 = vmax.f32 %v2172, %v2252
    %v2272 = vmax.f32 %v2173, %v2242
    %2273 = vrot.lane.b32.xlu0 %v1551, 79
    %v2274 = vpop.permute.xlu0 %2273
    %2275 = vrot.lane.b32.xlu0 %v1552, 79
    %v2276 = vpop.permute.xlu0 %2275
    %2277 = vrot.lane.b32.xlu0 %v1553, 79
    %v2278 = vpop.permute.xlu0 %2277
    %2279 = vrot.lane.b32.xlu0 %v1554, 79
    %v2280 = vpop.permute.xlu0 %2279
    %2281 = vrot.lane.b32.xlu0 %v1555, 79
    %v2282 = vpop.permute.xlu0 %2281
    %2283 = vrot.lane.b32.xlu0 %v1556, 79
    %v2284 = vpop.permute.xlu0 %2283
    %2285 = vrot.lane.b32.xlu0 %v1557, 79
    %v2286 = vpop.permute.xlu0 %2285
    %2287 = vrot.lane.b32.xlu0 %v1558, 79
    %v2288 = vpop.permute.xlu0 %2287
    %2289 = vrot.lane.b32.xlu0 %v1559, 79
    %v2290 = vpop.permute.xlu0 %2289
    %2291 = vrot.lane.b32.xlu0 %v1560, 79
    %v2292 = vpop.permute.xlu0 %2291
    %v2293 = vsel %vm2243, %v2274, %v2276
    %v2294 = vsel %vm2243, %v2276, %v2278
    %v2295 = vsel %vm2243, %v2278, %v2280
    %v2296 = vsel %vm2243, %v2280, %v2282
    %v2297 = vsel %vm2243, %v2282, %v2284
    %v2298 = vsel %vm2243, %v2284, %v2286
    %v2299 = vsel %vm2243, %v2286, %v2288
    %v2300 = vsel %vm2243, %v2288, %v2290
    %v2301 = vsel %vm2243, %v2290, %v2292
    %v2312 = vadd.f32 %v2213, %v2293
    %v2313 = vadd.f32 %v2214, %v2294
    %v2314 = vadd.f32 %v2215, %v2295
    %v2315 = vadd.f32 %v2216, %v2296
    %v2316 = vadd.f32 %v2217, %v2297
    %v2317 = vadd.f32 %v2218, %v2298
    %v2318 = vadd.f32 %v2219, %v2299
    %v2319 = vadd.f32 %v2220, %v2300
    %v2320 = vadd.f32 %v2221, %v2301
    %v2321 = vadd.f32 %v2222, %v2292
    %2322 = vrot.lane.b32.xlu0 %v1599, 78
    %v2323 = vpop.permute.xlu0 %2322
    %2324 = vrot.lane.b32.xlu0 %v1600, 78
    %v2325 = vpop.permute.xlu0 %2324
    %2326 = vrot.lane.b32.xlu0 %v1601, 78
    %v2327 = vpop.permute.xlu0 %2326
    %2328 = vrot.lane.b32.xlu0 %v1602, 78
    %v2329 = vpop.permute.xlu0 %2328
    %2330 = vrot.lane.b32.xlu0 %v1603, 78
    %v2331 = vpop.permute.xlu0 %2330
    %2332 = vrot.lane.b32.xlu0 %v1604, 78
    %v2333 = vpop.permute.xlu0 %2332
    %2334 = vrot.lane.b32.xlu0 %v1605, 78
    %v2335 = vpop.permute.xlu0 %2334
    %2336 = vrot.lane.b32.xlu0 %v1606, 78
    %v2337 = vpop.permute.xlu0 %2336
    %2338 = vrot.lane.b32.xlu0 %v1607, 78
    %v2339 = vpop.permute.xlu0 %2338
    %2340 = vrot.lane.b32.xlu0 %v1608, 78
    %v2341 = vpop.permute.xlu0 %2340
    %vm2342 = vcmask 637952
    %v2343 = vsel %vm2342, %v2323, %v2325
    %v2344 = vsel %vm2342, %v2325, %v2327
    %v2345 = vsel %vm2342, %v2327, %v2329
    %v2346 = vsel %vm2342, %v2329, %v2331
    %v2347 = vsel %vm2342, %v2331, %v2333
    %v2348 = vsel %vm2342, %v2333, %v2335
    %v2349 = vsel %vm2342, %v2335, %v2337
    %v2350 = vsel %vm2342, %v2337, %v2339
    %v2351 = vsel %vm2342, %v2339, %v2341
    %v2362 = vmax.f32 %v2263, %v2343
    %v2363 = vmax.f32 %v2264, %v2344
    %v2364 = vmax.f32 %v2265, %v2345
    %v2365 = vmax.f32 %v2266, %v2346
    %v2366 = vmax.f32 %v2267, %v2347
    %v2367 = vmax.f32 %v2268, %v2348
    %v2368 = vmax.f32 %v2269, %v2349
    %v2369 = vmax.f32 %v2270, %v2350
    %v2370 = vmax.f32 %v2271, %v2351
    %v2371 = vmax.f32 %v2272, %v2341
    %2372 = vrot.lane.b32.xlu0 %v1551, 78
    %v2373 = vpop.permute.xlu0 %2372
    %2374 = vrot.lane.b32.xlu0 %v1552, 78
    %v2375 = vpop.permute.xlu0 %2374
    %2376 = vrot.lane.b32.xlu0 %v1553, 78
    %v2377 = vpop.permute.xlu0 %2376
    %2378 = vrot.lane.b32.xlu0 %v1554, 78
    %v2379 = vpop.permute.xlu0 %2378
    %2380 = vrot.lane.b32.xlu0 %v1555, 78
    %v2381 = vpop.permute.xlu0 %2380
    %2382 = vrot.lane.b32.xlu0 %v1556, 78
    %v2383 = vpop.permute.xlu0 %2382
    %2384 = vrot.lane.b32.xlu0 %v1557, 78
    %v2385 = vpop.permute.xlu0 %2384
    %2386 = vrot.lane.b32.xlu0 %v1558, 78
    %v2387 = vpop.permute.xlu0 %2386
    %2388 = vrot.lane.b32.xlu0 %v1559, 78
    %v2389 = vpop.permute.xlu0 %2388
    %2390 = vrot.lane.b32.xlu0 %v1560, 78
    %v2391 = vpop.permute.xlu0 %2390
    %v2392 = vsel %vm2342, %v2373, %v2375
    %v2393 = vsel %vm2342, %v2375, %v2377
    %v2394 = vsel %vm2342, %v2377, %v2379
    %v2395 = vsel %vm2342, %v2379, %v2381
    %v2396 = vsel %vm2342, %v2381, %v2383
    %v2397 = vsel %vm2342, %v2383, %v2385
    %v2398 = vsel %vm2342, %v2385, %v2387
    %v2399 = vsel %vm2342, %v2387, %v2389
    %v2400 = vsel %vm2342, %v2389, %v2391
    %v2411 = vadd.f32 %v2312, %v2392
    %v2412 = vadd.f32 %v2313, %v2393
    %v2413 = vadd.f32 %v2314, %v2394
    %v2414 = vadd.f32 %v2315, %v2395
    %v2415 = vadd.f32 %v2316, %v2396
    %v2416 = vadd.f32 %v2317, %v2397
    %v2417 = vadd.f32 %v2318, %v2398
    %v2418 = vadd.f32 %v2319, %v2399
    %v2419 = vadd.f32 %v2320, %v2400
    %v2420 = vadd.f32 %v2321, %v2391
    %v2421 = vld [vmem:[#allocation10] sm:$0xff]
    %v2422 = vld [vmem:[#allocation10 + $0x8] sm:$0x1]
    %v2425 = vperm.slane %v2421, 0
    %v2426 = vperm.slane %v2421, 1
    %v2427 = vperm.slane %v2421, 2
    %v2428 = vperm.slane %v2421, 3
    %v2429 = vperm.slane %v2421, 4
    %v2430 = vperm.slane %v2421, 5
    %v2431 = vperm.slane %v2421, 6
    %v2432 = vperm.slane %v2421, 7
    %v2433 = vperm.slane %v2422, 0
    %2434 = vrot.lane.b32.xlu0 %v2425, 75
    %v2435 = vpop.permute.xlu0 %2434
    %2436 = vrot.lane.b32.xlu0 %v2426, 75
    %v2437 = vpop.permute.xlu0 %2436
    %2438 = vrot.lane.b32.xlu0 %v2427, 75
    %v2439 = vpop.permute.xlu0 %2438
    %2440 = vrot.lane.b32.xlu0 %v2428, 75
    %v2441 = vpop.permute.xlu0 %2440
    %2442 = vrot.lane.b32.xlu0 %v2429, 75
    %v2443 = vpop.permute.xlu0 %2442
    %2444 = vrot.lane.b32.xlu0 %v2430, 75
    %v2445 = vpop.permute.xlu0 %2444
    %2446 = vrot.lane.b32.xlu0 %v2431, 75
    %v2447 = vpop.permute.xlu0 %2446
    %2448 = vrot.lane.b32.xlu0 %v2432, 75
    %v2449 = vpop.permute.xlu0 %2448
    %2450 = vrot.lane.b32.xlu0 %v2433, 75
    %v2451 = vpop.permute.xlu0 %2450
    %vm2452 = vcmask 613376
    %v2453 = vsel %vm2452, %v2435, %v2437
    %v2454 = vsel %vm2452, %v2437, %v2439
    %v2455 = vsel %vm2452, %v2439, %v2441
    %v2456 = vsel %vm2452, %v2441, %v2443
    %v2457 = vsel %vm2452, %v2443, %v2445
    %v2458 = vsel %vm2452, %v2445, %v2447
    %v2459 = vsel %vm2452, %v2447, %v2449
    %v2460 = vsel %vm2452, %v2449, %v2451
    %v2471 = vmul.f32 %v2411, %v2435
    %v2472 = vmul.f32 %v2412, %v2453
    %v2473 = vmul.f32 %v2413, %v2454
    %v2474 = vmul.f32 %v2414, %v2455
    %v2475 = vmul.f32 %v2415, %v2456
    %v2476 = vmul.f32 %v2416, %v2457
    %v2477 = vmul.f32 %v2417, %v2458
    %v2478 = vmul.f32 %v2418, %v2459
    %v2479 = vmul.f32 %v2419, %v2460
    %v2480 = vmul.f32 %v2420, %v2451
    %s2481 = sld [smem:[#allocation3 + $0x1]]
    %v2484 = vperm.slane %v1561, 0
    %v2485 = vperm.slane %v1561, 1
    %v2486 = vperm.slane %v1561, 2
    %v2487 = vperm.slane %v1561, 3
    %v2488 = vperm.slane %v1561, 4
    %v2489 = vperm.slane %v1561, 5
    %v2490 = vperm.slane %v1561, 6
    %v2491 = vperm.slane %v1561, 7
    %v2492 = vperm.slane %v1562, 0
    %v2493 = vperm.slane %v1562, 1
    %2494 = vrot.lane.b32.xlu0 %v2484, 103
    %v2495 = vpop.permute.xlu0 %2494
    %2496 = vrot.lane.b32.xlu0 %v2485, 103
    %v2497 = vpop.permute.xlu0 %2496
    %2498 = vrot.lane.b32.xlu0 %v2486, 103
    %v2499 = vpop.permute.xlu0 %2498
    %2500 = vrot.lane.b32.xlu0 %v2487, 103
    %v2501 = vpop.permute.xlu0 %2500
    %2502 = vrot.lane.b32.xlu0 %v2488, 103
    %v2503 = vpop.permute.xlu0 %2502
    %2504 = vrot.lane.b32.xlu0 %v2489, 103
    %v2505 = vpop.permute.xlu0 %2504
    %2506 = vrot.lane.b32.xlu0 %v2490, 103
    %v2507 = vpop.permute.xlu0 %2506
    %2508 = vrot.lane.b32.xlu0 %v2491, 103
    %v2509 = vpop.permute.xlu0 %2508
    %2510 = vrot.lane.b32.xlu0 %v2492, 103
    %v2511 = vpop.permute.xlu0 %2510
    %2512 = vrot.lane.b32.xlu0 %v2493, 103
    %v2513 = vpop.permute.xlu0 %2512
    %v2514 = vsel %vm1946, %v2495, %v2497
    %v2515 = vsel %vm1946, %v2497, %v2499
    %v2516 = vsel %vm1946, %v2499, %v2501
    %v2517 = vsel %vm1946, %v2501, %v2503
    %v2518 = vsel %vm1946, %v2503, %v2505
    %v2519 = vsel %vm1946, %v2505, %v2507
    %v2520 = vsel %vm1946, %v2507, %v2509
    %v2521 = vsel %vm1946, %v2509, %v2511
    %v2522 = vsel %vm1946, %v2511, %v2513
    %v2533 = vmul.f32 %v2362, %v2514
    %v2534 = vmul.f32 %v2363, %v2515
    %v2535 = vmul.f32 %v2364, %v2516
    %v2536 = vmul.f32 %v2365, %v2517
    %v2537 = vmul.f32 %v2366, %v2518
    %v2538 = vmul.f32 %v2367, %v2519
    %v2539 = vmul.f32 %v2368, %v2520
    %v2540 = vmul.f32 %v2369, %v2521
    %v2541 = vmul.f32 %v2370, %v2522
    %v2542 = vmul.f32 %v2371, %v2513
    %2553 = vrot.lane.b32.xlu0 %v2533, 53
    %v2554 = vpop.permute.xlu0 %2553
    %2555 = vrot.lane.b32.xlu0 %v2534, 53
    %v2556 = vpop.permute.xlu0 %2555
    %2557 = vrot.lane.b32.xlu0 %v2535, 53
    %v2558 = vpop.permute.xlu0 %2557
    %2559 = vrot.lane.b32.xlu0 %v2536, 53
    %v2560 = vpop.permute.xlu0 %2559
    %2561 = vrot.lane.b32.xlu0 %v2537, 53
    %v2562 = vpop.permute.xlu0 %2561
    %2563 = vrot.lane.b32.xlu0 %v2538, 53
    %v2564 = vpop.permute.xlu0 %2563
    %2565 = vrot.lane.b32.xlu0 %v2539, 53
    %v2566 = vpop.permute.xlu0 %2565
    %2567 = vrot.lane.b32.xlu0 %v2540, 53
    %v2568 = vpop.permute.xlu0 %2567
    %2569 = vrot.lane.b32.xlu0 %v2541, 53
    %v2570 = vpop.permute.xlu0 %2569
    %2571 = vrot.lane.b32.xlu0 %v2542, 53
    %v2572 = vpop.permute.xlu0 %2571
    %vm2573 = vcmask 433152
    %v2574 = vsel %vm2573, %v2554, %v2556
    %v2575 = vsel %vm2573, %v2556, %v2558
    %v2576 = vsel %vm2573, %v2558, %v2560
    %v2577 = vsel %vm2573, %v2560, %v2562
    %v2578 = vsel %vm2573, %v2562, %v2564
    %v2579 = vsel %vm2573, %v2564, %v2566
    %v2580 = vsel %vm2573, %v2566, %v2568
    %v2581 = vsel %vm2573, %v2568, %v2570
    %v2582 = vsel %vm2573, %v2570, %v2572
    %v2592 = vadd.f32 %v2574, %v2575
    %v2593 = vadd.f32 %v2592, %v2576
    %v2594 = vadd.f32 %v2593, %v2577
    %v2595 = vadd.f32 %v2594, %v2578
    %v2596 = vadd.f32 %v2595, %v2579
    %v2597 = vadd.f32 %v2596, %v2580
    %v2598 = vadd.f32 %v2597, %v2581
    %v2599 = vadd.f32 %v2598, %v2582
    %2600 = vadd.xlane.f32.xlu0 %v2599
    %v2601 = vpop.xlane.xlu0 %2600
    %v2602 = vmul.f32 %v2533, %v2533
    %v2603 = vmul.f32 %v2534, %v2534
    %v2604 = vmul.f32 %v2535, %v2535
    %v2605 = vmul.f32 %v2536, %v2536
    %v2606 = vmul.f32 %v2537, %v2537
    %v2607 = vmul.f32 %v2538, %v2538
    %v2608 = vmul.f32 %v2539, %v2539
    %v2609 = vmul.f32 %v2540, %v2540
    %v2610 = vmul.f32 %v2541, %v2541
    %v2611 = vmul.f32 %v2542, %v2542
    %2622 = vrot.lane.b32.xlu0 %v2602, 53
    %v2623 = vpop.permute.xlu0 %2622
    %2624 = vrot.lane.b32.xlu0 %v2603, 53
    %v2625 = vpop.permute.xlu0 %2624
    %2626 = vrot.lane.b32.xlu0 %v2604, 53
    %v2627 = vpop.permute.xlu0 %2626
    %2628 = vrot.lane.b32.xlu0 %v2605, 53
    %v2629 = vpop.permute.xlu0 %2628
    %2630 = vrot.lane.b32.xlu0 %v2606, 53
    %v2631 = vpop.permute.xlu0 %2630
    %2632 = vrot.lane.b32.xlu0 %v2607, 53
    %v2633 = vpop.permute.xlu0 %2632
    %2634 = vrot.lane.b32.xlu0 %v2608, 53
    %v2635 = vpop.permute.xlu0 %2634
    %2636 = vrot.lane.b32.xlu0 %v2609, 53
    %v2637 = vpop.permute.xlu0 %2636
    %2638 = vrot.lane.b32.xlu0 %v2610, 53
    %v2639 = vpop.permute.xlu0 %2638
    %2640 = vrot.lane.b32.xlu0 %v2611, 53
    %v2641 = vpop.permute.xlu0 %2640
    %v2642 = vsel %vm2573, %v2623, %v2625
    %v2643 = vsel %vm2573, %v2625, %v2627
    %v2644 = vsel %vm2573, %v2627, %v2629
    %v2645 = vsel %vm2573, %v2629, %v2631
    %v2646 = vsel %vm2573, %v2631, %v2633
    %v2647 = vsel %vm2573, %v2633, %v2635
    %v2648 = vsel %vm2573, %v2635, %v2637
    %v2649 = vsel %vm2573, %v2637, %v2639
    %v2650 = vsel %vm2573, %v2639, %v2641
    %v2660 = vadd.f32 %v2642, %v2643
    %v2661 = vadd.f32 %v2660, %v2644
    %v2662 = vadd.f32 %v2661, %v2645
    %v2663 = vadd.f32 %v2662, %v2646
    %v2664 = vadd.f32 %v2663, %v2647
    %v2665 = vadd.f32 %v2664, %v2648
    %v2666 = vadd.f32 %v2665, %v2649
    %v2667 = vadd.f32 %v2666, %v2650
    %2668 = vadd.xlane.f32.xlu0 %v2667
    %v2669 = vpop.xlane.xlu0 %2668
    %v2670 = vmul.f32 %v2601, 0.001953125
    %v2671 = vmul.f32 %v2669, 0.001953125
    %v2672 = vmul.f32 %v2670, %v2670
    %v2673 = vsub.f32 %v2671, %v2672
    %v2674 = vadd.f32 %v2673, 1e-05
    %v2675 = vrsqrt.pop %v2674
    %v2676 = vmul.f32 %v2675, %v2674
    %v2677 = vmul.f32 %v2676, %v2675
    %v2678 = vmul.f32 0.5, %v2677
    %v2679 = vsub.f32 1.5, %v2678
    %v2680 = vmul.f32 %v2675, %v2679
    %vm2681 = vweird.f32 %v2674
    %vm2682 = vweird.f32 %v2675
    %vm2683 = vmor %vm2681, %vm2682
    %v2684 = vsel %vm2683, %v2675, %v2680
    %v2685 = vstv %s2481
    %v2686 = vmul.f32 %v2685, %v2684
    %v2687 = vsub.f32 %v2533, %v2670
    %v2688 = vsub.f32 %v2534, %v2670
    %v2689 = vsub.f32 %v2535, %v2670
    %v2690 = vsub.f32 %v2536, %v2670
    %v2691 = vsub.f32 %v2537, %v2670
    %v2692 = vsub.f32 %v2538, %v2670
    %v2693 = vsub.f32 %v2539, %v2670
    %v2694 = vsub.f32 %v2540, %v2670
    %v2695 = vsub.f32 %v2541, %v2670
    %v2696 = vsub.f32 %v2542, %v2670
    %v2697 = vmul.f32 %v2686, %v2687
    %v2698 = vmul.f32 %v2686, %v2688
    %v2699 = vmul.f32 %v2686, %v2689
    %v2700 = vmul.f32 %v2686, %v2690
    %v2701 = vmul.f32 %v2686, %v2691
    %v2702 = vmul.f32 %v2686, %v2692
    %v2703 = vmul.f32 %v2686, %v2693
    %v2704 = vmul.f32 %v2686, %v2694
    %v2705 = vmul.f32 %v2686, %v2695
    %v2706 = vmul.f32 %v2686, %v2696
    %2717 = vrot.lane.b32.xlu0 %v2697, 25
    %v2718 = vpop.permute.xlu0 %2717
    %2719 = vrot.lane.b32.xlu0 %v2698, 25
    %v2720 = vpop.permute.xlu0 %2719
    %2721 = vrot.lane.b32.xlu0 %v2699, 25
    %v2722 = vpop.permute.xlu0 %2721
    %2723 = vrot.lane.b32.xlu0 %v2700, 25
    %v2724 = vpop.permute.xlu0 %2723
    %2725 = vrot.lane.b32.xlu0 %v2701, 25
    %v2726 = vpop.permute.xlu0 %2725
    %2727 = vrot.lane.b32.xlu0 %v2702, 25
    %v2728 = vpop.permute.xlu0 %2727
    %2729 = vrot.lane.b32.xlu0 %v2703, 25
    %v2730 = vpop.permute.xlu0 %2729
    %2731 = vrot.lane.b32.xlu0 %v2704, 25
    %v2732 = vpop.permute.xlu0 %2731
    %2733 = vrot.lane.b32.xlu0 %v2705, 25
    %v2734 = vpop.permute.xlu0 %2733
    %2735 = vrot.lane.b32.xlu0 %v2706, 25
    %v2736 = vpop.permute.xlu0 %2735
    %vm2737 = vcmask 203776
    %v2738 = vsel %vm2737, %v2718, %v2720
    %v2739 = vsel %vm2737, %v2720, %v2722
    %v2740 = vsel %vm2737, %v2722, %v2724
    %v2741 = vsel %vm2737, %v2724, %v2726
    %v2742 = vsel %vm2737, %v2726, %v2728
    %v2743 = vsel %vm2737, %v2728, %v2730
    %v2744 = vsel %vm2737, %v2730, %v2732
    %v2745 = vsel %vm2737, %v2732, %v2734
    %v2746 = vsel %vm2737, %v2734, %v2736
    %v2757 = vadd.f32 %v1565, %v2718
    %v2758 = vadd.f32 %v1566, %v2738
    %v2759 = vadd.f32 %v1567, %v2739
    %v2760 = vadd.f32 %v1568, %v2740
    %v2761 = vadd.f32 %v1569, %v2741
    %v2762 = vadd.f32 %v1570, %v2742
    %v2763 = vadd.f32 %v1571, %v2743
    %v2764 = vadd.f32 %v1572, %v2744
    %v2765 = vadd.f32 %v1573, %v2745
    %v2766 = vadd.f32 %v1574, %v2746
    %s2767 = sld [smem:[#allocation3 + $0x2]]
    %v2768 = vmul.f32 %v2471, %v2514
    %v2769 = vmul.f32 %v2472, %v2515
    %v2770 = vmul.f32 %v2473, %v2516
    %v2771 = vmul.f32 %v2474, %v2517
    %v2772 = vmul.f32 %v2475, %v2518
    %v2773 = vmul.f32 %v2476, %v2519
    %v2774 = vmul.f32 %v2477, %v2520
    %v2775 = vmul.f32 %v2478, %v2521
    %v2776 = vmul.f32 %v2479, %v2522
    %v2777 = vmul.f32 %v2480, %v2513
    %2788 = vrot.lane.b32.xlu0 %v2768, 53
    %v2789 = vpop.permute.xlu0 %2788
    %2790 = vrot.lane.b32.xlu0 %v2769, 53
    %v2791 = vpop.permute.xlu0 %2790
    %2792 = vrot.lane.b32.xlu0 %v2770, 53
    %v2793 = vpop.permute.xlu0 %2792
    %2794 = vrot.lane.b32.xlu0 %v2771, 53
    %v2795 = vpop.permute.xlu0 %2794
    %2796 = vrot.lane.b32.xlu0 %v2772, 53
    %v2797 = vpop.permute.xlu0 %2796
    %2798 = vrot.lane.b32.xlu0 %v2773, 53
    %v2799 = vpop.permute.xlu0 %2798
    %2800 = vrot.lane.b32.xlu0 %v2774, 53
    %v2801 = vpop.permute.xlu0 %2800
    %2802 = vrot.lane.b32.xlu0 %v2775, 53
    %v2803 = vpop.permute.xlu0 %2802
    %2804 = vrot.lane.b32.xlu0 %v2776, 53
    %v2805 = vpop.permute.xlu0 %2804
    %2806 = vrot.lane.b32.xlu0 %v2777, 53
    %v2807 = vpop.permute.xlu0 %2806
    %v2808 = vsel %vm2573, %v2789, %v2791
    %v2809 = vsel %vm2573, %v2791, %v2793
    %v2810 = vsel %vm2573, %v2793, %v2795
    %v2811 = vsel %vm2573, %v2795, %v2797
    %v2812 = vsel %vm2573, %v2797, %v2799
    %v2813 = vsel %vm2573, %v2799, %v2801
    %v2814 = vsel %vm2573, %v2801, %v2803
    %v2815 = vsel %vm2573, %v2803, %v2805
    %v2816 = vsel %vm2573, %v2805, %v2807
    %v2826 = vadd.f32 %v2808, %v2809
    %v2827 = vadd.f32 %v2826, %v2810
    %v2828 = vadd.f32 %v2827, %v2811
    %v2829 = vadd.f32 %v2828, %v2812
    %v2830 = vadd.f32 %v2829, %v2813
    %v2831 = vadd.f32 %v2830, %v2814
    %v2832 = vadd.f32 %v2831, %v2815
    %v2833 = vadd.f32 %v2832, %v2816
    %2834 = vadd.xlane.f32.xlu0 %v2833
    %v2835 = vpop.xlane.xlu0 %2834
    %v2836 = vmul.f32 %v2768, %v2768
    %v2837 = vmul.f32 %v2769, %v2769
    %v2838 = vmul.f32 %v2770, %v2770
    %v2839 = vmul.f32 %v2771, %v2771
    %v2840 = vmul.f32 %v2772, %v2772
    %v2841 = vmul.f32 %v2773, %v2773
    %v2842 = vmul.f32 %v2774, %v2774
    %v2843 = vmul.f32 %v2775, %v2775
    %v2844 = vmul.f32 %v2776, %v2776
    %v2845 = vmul.f32 %v2777, %v2777
    %2856 = vrot.lane.b32.xlu0 %v2836, 53
    %v2857 = vpop.permute.xlu0 %2856
    %2858 = vrot.lane.b32.xlu0 %v2837, 53
    %v2859 = vpop.permute.xlu0 %2858
    %2860 = vrot.lane.b32.xlu0 %v2838, 53
    %v2861 = vpop.permute.xlu0 %2860
    %2862 = vrot.lane.b32.xlu0 %v2839, 53
    %v2863 = vpop.permute.xlu0 %2862
    %2864 = vrot.lane.b32.xlu0 %v2840, 53
    %v2865 = vpop.permute.xlu0 %2864
    %2866 = vrot.lane.b32.xlu0 %v2841, 53
    %v2867 = vpop.permute.xlu0 %2866
    %2868 = vrot.lane.b32.xlu0 %v2842, 53
    %v2869 = vpop.permute.xlu0 %2868
    %2870 = vrot.lane.b32.xlu0 %v2843, 53
    %v2871 = vpop.permute.xlu0 %2870
    %2872 = vrot.lane.b32.xlu0 %v2844, 53
    %v2873 = vpop.permute.xlu0 %2872
    %2874 = vrot.lane.b32.xlu0 %v2845, 53
    %v2875 = vpop.permute.xlu0 %2874
    %v2876 = vsel %vm2573, %v2857, %v2859
    %v2877 = vsel %vm2573, %v2859, %v2861
    %v2878 = vsel %vm2573, %v2861, %v2863
    %v2879 = vsel %vm2573, %v2863, %v2865
    %v2880 = vsel %vm2573, %v2865, %v2867
    %v2881 = vsel %vm2573, %v2867, %v2869
    %v2882 = vsel %vm2573, %v2869, %v2871
    %v2883 = vsel %vm2573, %v2871, %v2873
    %v2884 = vsel %vm2573, %v2873, %v2875
    %v2894 = vadd.f32 %v2876, %v2877
    %v2895 = vadd.f32 %v2894, %v2878
    %v2896 = vadd.f32 %v2895, %v2879
    %v2897 = vadd.f32 %v2896, %v2880
    %v2898 = vadd.f32 %v2897, %v2881
    %v2899 = vadd.f32 %v2898, %v2882
    %v2900 = vadd.f32 %v2899, %v2883
    %v2901 = vadd.f32 %v2900, %v2884
    %2902 = vadd.xlane.f32.xlu0 %v2901
    %v2903 = vpop.xlane.xlu0 %2902
    %v2904 = vmul.f32 %v2835, 0.001953125
    %v2905 = vmul.f32 %v2903, 0.001953125
    %v2906 = vmul.f32 %v2904, %v2904
    %v2907 = vsub.f32 %v2905, %v2906
    %v2908 = vadd.f32 %v2907, 1e-05
    %v2909 = vrsqrt.pop %v2908
    %v2910 = vmul.f32 %v2909, %v2908
    %v2911 = vmul.f32 %v2910, %v2909
    %v2912 = vmul.f32 0.5, %v2911
    %v2913 = vsub.f32 1.5, %v2912
    %v2914 = vmul.f32 %v2909, %v2913
    %vm2915 = vweird.f32 %v2908
    %vm2916 = vweird.f32 %v2909
    %vm2917 = vmor %vm2915, %vm2916
    %v2918 = vsel %vm2917, %v2909, %v2914
    %v2919 = vstv %s2767
    %v2920 = vmul.f32 %v2919, %v2918
    %v2921 = vsub.f32 %v2768, %v2904
    %v2922 = vsub.f32 %v2769, %v2904
    %v2923 = vsub.f32 %v2770, %v2904
    %v2924 = vsub.f32 %v2771, %v2904
    %v2925 = vsub.f32 %v2772, %v2904
    %v2926 = vsub.f32 %v2773, %v2904
    %v2927 = vsub.f32 %v2774, %v2904
    %v2928 = vsub.f32 %v2775, %v2904
    %v2929 = vsub.f32 %v2776, %v2904
    %v2930 = vsub.f32 %v2777, %v2904
    %v2931 = vmul.f32 %v2920, %v2921
    %v2932 = vmul.f32 %v2920, %v2922
    %v2933 = vmul.f32 %v2920, %v2923
    %v2934 = vmul.f32 %v2920, %v2924
    %v2935 = vmul.f32 %v2920, %v2925
    %v2936 = vmul.f32 %v2920, %v2926
    %v2937 = vmul.f32 %v2920, %v2927
    %v2938 = vmul.f32 %v2920, %v2928
    %v2939 = vmul.f32 %v2920, %v2929
    %v2940 = vmul.f32 %v2920, %v2930
    %2951 = vrot.lane.b32.xlu0 %v2931, 25
    %v2952 = vpop.permute.xlu0 %2951
    %2953 = vrot.lane.b32.xlu0 %v2932, 25
    %v2954 = vpop.permute.xlu0 %2953
    %2955 = vrot.lane.b32.xlu0 %v2933, 25
    %v2956 = vpop.permute.xlu0 %2955
    %2957 = vrot.lane.b32.xlu0 %v2934, 25
    %v2958 = vpop.permute.xlu0 %2957
    %2959 = vrot.lane.b32.xlu0 %v2935, 25
    %v2960 = vpop.permute.xlu0 %2959
    %2961 = vrot.lane.b32.xlu0 %v2936, 25
    %v2962 = vpop.permute.xlu0 %2961
    %2963 = vrot.lane.b32.xlu0 %v2937, 25
    %v2964 = vpop.permute.xlu0 %2963
    %2965 = vrot.lane.b32.xlu0 %v2938, 25
    %v2966 = vpop.permute.xlu0 %2965
    %2967 = vrot.lane.b32.xlu0 %v2939, 25
    %v2968 = vpop.permute.xlu0 %2967
    %2969 = vrot.lane.b32.xlu0 %v2940, 25
    %v2970 = vpop.permute.xlu0 %2969
    %v2971 = vsel %vm2737, %v2952, %v2954
    %v2972 = vsel %vm2737, %v2954, %v2956
    %v2973 = vsel %vm2737, %v2956, %v2958
    %v2974 = vsel %vm2737, %v2958, %v2960
    %v2975 = vsel %vm2737, %v2960, %v2962
    %v2976 = vsel %vm2737, %v2962, %v2964
    %v2977 = vsel %vm2737, %v2964, %v2966
    %v2978 = vsel %vm2737, %v2966, %v2968
    %v2979 = vsel %vm2737, %v2968, %v2970
    %v2990 = vadd.f32 %v2757, %v2952
    %v2991 = vadd.f32 %v2758, %v2971
    %v2992 = vadd.f32 %v2759, %v2972
    %v2993 = vadd.f32 %v2760, %v2973
    %v2994 = vadd.f32 %v2761, %v2974
    %v2995 = vadd.f32 %v2762, %v2975
    %v2996 = vadd.f32 %v2763, %v2976
    %v2997 = vadd.f32 %v2764, %v2977
    %v2998 = vadd.f32 %v2765, %v2978
    %v2999 = vadd.f32 %v2766, %v2979
    %v3000 = vld [vmem:[#allocation11] sm:$0xff]
    %v3001 = vld [vmem:[#allocation11 + $0x8] sm:$0xf]
    %v3002 = vld [vmem:[#allocation11 + $0xc] sm:$0xff]
    %v3003 = vld [vmem:[#allocation11 + $0x14] sm:$0xf]
    %v3004 = vld [vmem:[#allocation11 + $0x18] sm:$0xff]
    %v3005 = vld [vmem:[#allocation11 + $0x20] sm:$0xf]
    %v3006 = vld [vmem:[#allocation11 + $0x24] sm:$0xff]
    %v3007 = vld [vmem:[#allocation11 + $0x2c] sm:$0xf]
    %v3008 = vld [vmem:[#allocation2] sm:$0xff]
    %v3009 = vld [vmem:[#allocation2 + $0x8] sm:$0xff]
    %v3010 = vld [vmem:[#allocation2 + $0x10] sm:$0xff]
    %v3011 = vld [vmem:[#allocation2 + $0x18] sm:$0xff]
    %v3012 = vld [vmem:[#allocation2 + $0x20] sm:$0xf]
    %v3013 = vld [vmem:[#allocation2 + $0x24] sm:$0xff]
    %v3014 = vld [vmem:[#allocation2 + $0x2c] sm:$0xff]
    %v3015 = vld [vmem:[#allocation2 + $0x34] sm:$0xff]
    %v3016 = vld [vmem:[#allocation2 + $0x3c] sm:$0xff]
    %v3017 = vld [vmem:[#allocation2 + $0x44] sm:$0xf]
    %v3018 = vld [vmem:[#allocation2 + $0x48] sm:$0xff]
    %v3019 = vld [vmem:[#allocation2 + $0x50] sm:$0xff]
    %v3020 = vld [vmem:[#allocation2 + $0x58] sm:$0xff]
    %v3021 = vld [vmem:[#allocation2 + $0x60] sm:$0xff]
    %v3022 = vld [vmem:[#allocation2 + $0x68] sm:$0xf]
    %v3023 = vld [vmem:[#allocation2 + $0x6c] sm:$0xff]
    %v3024 = vld [vmem:[#allocation2 + $0x74] sm:$0xff]
    %v3025 = vld [vmem:[#allocation2 + $0x7c] sm:$0xff]
    %v3026 = vld [vmem:[#allocation2 + $0x84] sm:$0xff]
    %v3027 = vld [vmem:[#allocation2 + $0x8c] sm:$0xf]
    %v3028 = vld [vmem:[#allocation2 + $0x90] sm:$0xff]
    %v3029 = vld [vmem:[#allocation2 + $0x98] sm:$0xff]
    %v3030 = vld [vmem:[#allocation2 + $0xa0] sm:$0xff]
    %v3031 = vld [vmem:[#allocation2 + $0xa8] sm:$0xff]
    %v3032 = vld [vmem:[#allocation2 + $0xb0] sm:$0xf]
    %v3033 = vld [vmem:[#allocation2 + $0xb4] sm:$0xff]
    %v3034 = vld [vmem:[#allocation2 + $0xbc] sm:$0xff]
    %v3035 = vld [vmem:[#allocation2 + $0xc4] sm:$0xff]
    %v3036 = vld [vmem:[#allocation2 + $0xcc] sm:$0xff]
    %v3037 = vld [vmem:[#allocation2 + $0xd4] sm:$0xf]
    %v3038 = vld [vmem:[#allocation2 + $0xd8] sm:$0xff]
    %v3039 = vld [vmem:[#allocation2 + $0xe0] sm:$0xff]
    %v3040 = vld [vmem:[#allocation2 + $0xe8] sm:$0xff]
    %v3041 = vld [vmem:[#allocation2 + $0xf0] sm:$0xff]
    %v3042 = vld [vmem:[#allocation2 + $0xf8] sm:$0xf]
    %v3043 = vld [vmem:[#allocation2 + $0xfc] sm:$0xff]
    %v3044 = vld [vmem:[#allocation2 + $0x104] sm:$0xff]
    %v3045 = vld [vmem:[#allocation2 + $0x10c] sm:$0xff]
    %v3046 = vld [vmem:[#allocation2 + $0x114] sm:$0xff]
    %v3047 = vld [vmem:[#allocation2 + $0x11c] sm:$0xf]
    %v3048 = vld [vmem:[#allocation2 + $0x120] sm:$0xff]
    %v3049 = vld [vmem:[#allocation2 + $0x128] sm:$0xff]
    %v3050 = vld [vmem:[#allocation2 + $0x130] sm:$0xff]
    %v3051 = vld [vmem:[#allocation2 + $0x138] sm:$0xff]
    %v3052 = vld [vmem:[#allocation2 + $0x140] sm:$0xf]
    %v3053 = vld [vmem:[#allocation2 + $0x144] sm:$0xff]
    %v3054 = vld [vmem:[#allocation2 + $0x14c] sm:$0xff]
    %v3055 = vld [vmem:[#allocation2 + $0x154] sm:$0xff]
    %v3056 = vld [vmem:[#allocation2 + $0x15c] sm:$0xff]
    %v3057 = vld [vmem:[#allocation2 + $0x164] sm:$0xf]
    %v3058 = vld [vmem:[#allocation2 + $0x168] sm:$0xff]
    %v3059 = vld [vmem:[#allocation2 + $0x170] sm:$0xff]
    %v3060 = vld [vmem:[#allocation2 + $0x178] sm:$0xff]
    %v3061 = vld [vmem:[#allocation2 + $0x180] sm:$0xff]
    %v3062 = vld [vmem:[#allocation2 + $0x188] sm:$0xf]
    %v3063 = vld [vmem:[#allocation2 + $0x18c] sm:$0xff]
    %v3064 = vld [vmem:[#allocation2 + $0x194] sm:$0xff]
    %v3065 = vld [vmem:[#allocation2 + $0x19c] sm:$0xff]
    %v3066 = vld [vmem:[#allocation2 + $0x1a4] sm:$0xff]
    %v3067 = vld [vmem:[#allocation2 + $0x1ac] sm:$0xf]
    %v3068 = vld [vmem:[#allocation2 + $0x1b0] sm:$0xff]
    %v3069 = vld [vmem:[#allocation2 + $0x1b8] sm:$0xff]
    %v3070 = vld [vmem:[#allocation2 + $0x1c0] sm:$0xff]
    %v3071 = vld [vmem:[#allocation2 + $0x1c8] sm:$0xff]
    %v3072 = vld [vmem:[#allocation2 + $0x1d0] sm:$0xf]
    %v3073 = vld [vmem:[#allocation2 + $0x1d4] sm:$0xff]
    %v3074 = vld [vmem:[#allocation2 + $0x1dc] sm:$0xff]
    %v3075 = vld [vmem:[#allocation2 + $0x1e4] sm:$0xff]
    %v3076 = vld [vmem:[#allocation2 + $0x1ec] sm:$0xff]
    %v3077 = vld [vmem:[#allocation2 + $0x1f4] sm:$0xf]
    %v3078 = vld [vmem:[#allocation2 + $0x1f8] sm:$0xff]
    %v3079 = vld [vmem:[#allocation2 + $0x200] sm:$0xff]
    %v3080 = vld [vmem:[#allocation2 + $0x208] sm:$0xff]
    %v3081 = vld [vmem:[#allocation2 + $0x210] sm:$0xff]
    %v3082 = vld [vmem:[#allocation2 + $0x218] sm:$0xf]
    %v3083 = vld [vmem:[#allocation2 + $0x21c] sm:$0xff]
    %v3084 = vld [vmem:[#allocation2 + $0x224] sm:$0xff]
    %v3085 = vld [vmem:[#allocation2 + $0x22c] sm:$0xff]
    %v3086 = vld [vmem:[#allocation2 + $0x234] sm:$0xff]
    %v3087 = vld [vmem:[#allocation2 + $0x23c] sm:$0xf]
    %v3088 = vld [vmem:[#allocation2 + $0x240] sm:$0xff]
    %v3089 = vld [vmem:[#allocation2 + $0x248] sm:$0xff]
    %v3090 = vld [vmem:[#allocation2 + $0x250] sm:$0xff]
    %v3091 = vld [vmem:[#allocation2 + $0x258] sm:$0xff]
    %v3092 = vld [vmem:[#allocation2 + $0x260] sm:$0xf]
    %v3093 = vld [vmem:[#allocation2 + $0x264] sm:$0xff]
    %v3094 = vld [vmem:[#allocation2 + $0x26c] sm:$0xff]
    %v3095 = vld [vmem:[#allocation2 + $0x274] sm:$0xff]
    %v3096 = vld [vmem:[#allocation2 + $0x27c] sm:$0xff]
    %v3097 = vld [vmem:[#allocation2 + $0x284] sm:$0xf]
    %v3098 = vld [vmem:[#allocation2 + $0x288] sm:$0xff]
    %v3099 = vld [vmem:[#allocation2 + $0x290] sm:$0xff]
    %v3100 = vld [vmem:[#allocation2 + $0x298] sm:$0xff]
    %v3101 = vld [vmem:[#allocation2 + $0x2a0] sm:$0xff]
    %v3102 = vld [vmem:[#allocation2 + $0x2a8] sm:$0xf]
    %v3103 = vld [vmem:[#allocation2 + $0x2ac] sm:$0xff]
    %v3104 = vld [vmem:[#allocation2 + $0x2b4] sm:$0xff]
    %v3105 = vld [vmem:[#allocation2 + $0x2bc] sm:$0xff]
    %v3106 = vld [vmem:[#allocation2 + $0x2c4] sm:$0xff]
    %v3107 = vld [vmem:[#allocation2 + $0x2cc] sm:$0xf]
    %v3108 = vld [vmem:[#allocation2 + $0x2d0] sm:$0xff]
    %v3109 = vld [vmem:[#allocation2 + $0x2d8] sm:$0xff]
    %v3110 = vld [vmem:[#allocation2 + $0x2e0] sm:$0xff]
    %v3111 = vld [vmem:[#allocation2 + $0x2e8] sm:$0xff]
    %v3112 = vld [vmem:[#allocation2 + $0x2f0] sm:$0xf]
    %v3113 = vld [vmem:[#allocation2 + $0x2f4] sm:$0xff]
    %v3114 = vld [vmem:[#allocation2 + $0x2fc] sm:$0xff]
    %v3115 = vld [vmem:[#allocation2 + $0x304] sm:$0xff]
    %v3116 = vld [vmem:[#allocation2 + $0x30c] sm:$0xff]
    %v3117 = vld [vmem:[#allocation2 + $0x314] sm:$0xf]
    %v3118 = vld [vmem:[#allocation2 + $0x318] sm:$0xff]
    %v3119 = vld [vmem:[#allocation2 + $0x320] sm:$0xff]
    %v3120 = vld [vmem:[#allocation2 + $0x328] sm:$0xff]
    %v3121 = vld [vmem:[#allocation2 + $0x330] sm:$0xff]
    %v3122 = vld [vmem:[#allocation2 + $0x338] sm:$0xf]
    %v3123 = vld [vmem:[#allocation2 + $0x33c] sm:$0xff]
    %v3124 = vld [vmem:[#allocation2 + $0x344] sm:$0xff]
    %v3125 = vld [vmem:[#allocation2 + $0x34c] sm:$0xff]
    %v3126 = vld [vmem:[#allocation2 + $0x354] sm:$0xff]
    %v3127 = vld [vmem:[#allocation2 + $0x35c] sm:$0xf]
    %v3128 = vld [vmem:[#allocation2 + $0x360] sm:$0xff]
    %v3129 = vld [vmem:[#allocation2 + $0x368] sm:$0xff]
    %v3130 = vld [vmem:[#allocation2 + $0x370] sm:$0xff]
    %v3131 = vld [vmem:[#allocation2 + $0x378] sm:$0xff]
    %v3132 = vld [vmem:[#allocation2 + $0x380] sm:$0xf]
    %v3133 = vld [vmem:[#allocation2 + $0x384] sm:$0xff]
    %v3134 = vld [vmem:[#allocation2 + $0x38c] sm:$0xff]
    %v3135 = vld [vmem:[#allocation2 + $0x394] sm:$0xff]
    %v3136 = vld [vmem:[#allocation2 + $0x39c] sm:$0xff]
    %v3137 = vld [vmem:[#allocation2 + $0x3a4] sm:$0xf]
    %v3138 = vld [vmem:[#allocation2 + $0x3a8] sm:$0xff]
    %v3139 = vld [vmem:[#allocation2 + $0x3b0] sm:$0xff]
    %v3140 = vld [vmem:[#allocation2 + $0x3b8] sm:$0xff]
    %v3141 = vld [vmem:[#allocation2 + $0x3c0] sm:$0xff]
    %v3142 = vld [vmem:[#allocation2 + $0x3c8] sm:$0xf]
    %v3143 = vld [vmem:[#allocation2 + $0x3cc] sm:$0xff]
    %v3144 = vld [vmem:[#allocation2 + $0x3d4] sm:$0xff]
    %v3145 = vld [vmem:[#allocation2 + $0x3dc] sm:$0xff]
    %v3146 = vld [vmem:[#allocation2 + $0x3e4] sm:$0xff]
    %v3147 = vld [vmem:[#allocation2 + $0x3ec] sm:$0xf]
    %v3148 = vld [vmem:[#allocation2 + $0x3f0] sm:$0xff]
    %v3149 = vld [vmem:[#allocation2 + $0x3f8] sm:$0xff]
    %v3150 = vld [vmem:[#allocation2 + $0x400] sm:$0xff]
    %v3151 = vld [vmem:[#allocation2 + $0x408] sm:$0xff]
    %v3152 = vld [vmem:[#allocation2 + $0x410] sm:$0xf]
    %v3153 = vld [vmem:[#allocation2 + $0x414] sm:$0xff]
    %v3154 = vld [vmem:[#allocation2 + $0x41c] sm:$0xff]
    %v3155 = vld [vmem:[#allocation2 + $0x424] sm:$0xff]
    %v3156 = vld [vmem:[#allocation2 + $0x42c] sm:$0xff]
    %v3157 = vld [vmem:[#allocation2 + $0x434] sm:$0xf]
    %v3158 = vld [vmem:[#allocation2 + $0x438] sm:$0xff]
    %v3159 = vld [vmem:[#allocation2 + $0x440] sm:$0xff]
    %v3160 = vld [vmem:[#allocation2 + $0x448] sm:$0xff]
    %v3161 = vld [vmem:[#allocation2 + $0x450] sm:$0xff]
    %v3162 = vld [vmem:[#allocation2 + $0x458] sm:$0xf]
    %v3163 = vld [vmem:[#allocation2 + $0x45c] sm:$0xff]
    %v3164 = vld [vmem:[#allocation2 + $0x464] sm:$0xff]
    %v3165 = vld [vmem:[#allocation2 + $0x46c] sm:$0xff]
    %v3166 = vld [vmem:[#allocation2 + $0x474] sm:$0xff]
    %v3167 = vld [vmem:[#allocation2 + $0x47c] sm:$0xf]
    %v3168 = vld [vmem:[#allocation2 + $0x480] sm:$0xff]
    %v3169 = vld [vmem:[#allocation2 + $0x488] sm:$0xff]
    %v3170 = vld [vmem:[#allocation2 + $0x490] sm:$0xff]
    %v3171 = vld [vmem:[#allocation2 + $0x498] sm:$0xff]
    %v3172 = vld [vmem:[#allocation2 + $0x4a0] sm:$0xf]
    %v3173 = vld [vmem:[#allocation2 + $0x4a4] sm:$0xff]
    %v3174 = vld [vmem:[#allocation2 + $0x4ac] sm:$0xff]
    %v3175 = vld [vmem:[#allocation2 + $0x4b4] sm:$0xff]
    %v3176 = vld [vmem:[#allocation2 + $0x4bc] sm:$0xff]
    %v3177 = vld [vmem:[#allocation2 + $0x4c4] sm:$0xf]
    %v3178 = vld [vmem:[#allocation2 + $0x4c8] sm:$0xff]
    %v3179 = vld [vmem:[#allocation2 + $0x4d0] sm:$0xff]
    %v3180 = vld [vmem:[#allocation2 + $0x4d8] sm:$0xff]
    %v3181 = vld [vmem:[#allocation2 + $0x4e0] sm:$0xff]
    %v3182 = vld [vmem:[#allocation2 + $0x4e8] sm:$0xf]
    %v3183 = vld [vmem:[#allocation2 + $0x4ec] sm:$0xff]
    %v3184 = vld [vmem:[#allocation2 + $0x4f4] sm:$0xff]
    %v3185 = vld [vmem:[#allocation2 + $0x4fc] sm:$0xff]
    %v3186 = vld [vmem:[#allocation2 + $0x504] sm:$0xff]
    %v3187 = vld [vmem:[#allocation2 + $0x50c] sm:$0xf]
    %v3188 = vld [vmem:[#allocation2 + $0x510] sm:$0xff]
    %v3189 = vld [vmem:[#allocation2 + $0x518] sm:$0xff]
    %v3190 = vld [vmem:[#allocation2 + $0x520] sm:$0xff]
    %v3191 = vld [vmem:[#allocation2 + $0x528] sm:$0xff]
    %v3192 = vld [vmem:[#allocation2 + $0x530] sm:$0xf]
    %v3193 = vld [vmem:[#allocation2 + $0x534] sm:$0xff]
    %v3194 = vld [vmem:[#allocation2 + $0x53c] sm:$0xff]
    %v3195 = vld [vmem:[#allocation2 + $0x544] sm:$0xff]
    %v3196 = vld [vmem:[#allocation2 + $0x54c] sm:$0xff]
    %v3197 = vld [vmem:[#allocation2 + $0x554] sm:$0xf]
    %v3198 = vld [vmem:[#allocation2 + $0x558] sm:$0xff]
    %v3199 = vld [vmem:[#allocation2 + $0x560] sm:$0xff]
    %v3200 = vld [vmem:[#allocation2 + $0x568] sm:$0xff]
    %v3201 = vld [vmem:[#allocation2 + $0x570] sm:$0xff]
    %v3202 = vld [vmem:[#allocation2 + $0x578] sm:$0xf]
    %v3203 = vld [vmem:[#allocation2 + $0x57c] sm:$0xff]
    %v3204 = vld [vmem:[#allocation2 + $0x584] sm:$0xff]
    %v3205 = vld [vmem:[#allocation2 + $0x58c] sm:$0xff]
    %v3206 = vld [vmem:[#allocation2 + $0x594] sm:$0xff]
    %v3207 = vld [vmem:[#allocation2 + $0x59c] sm:$0xf]
    %v3208 = vld [vmem:[#allocation2 + $0x5a0] sm:$0xff]
    %v3209 = vld [vmem:[#allocation2 + $0x5a8] sm:$0xff]
    %v3210 = vld [vmem:[#allocation2 + $0x5b0] sm:$0xff]
    %v3211 = vld [vmem:[#allocation2 + $0x5b8] sm:$0xff]
    %v3212 = vld [vmem:[#allocation2 + $0x5c0] sm:$0xf]
    %v3221 = vunpack.c.l.b16 %v3000
    %v3222 = vunpack.c.h.b16 %v3000
    %v3223 = vunpack.c.l.b16 %v3001
    %v3224 = vunpack.c.l.b16 %v3002
    %v3225 = vunpack.c.h.b16 %v3002
    %v3226 = vunpack.c.l.b16 %v3003
    %v3227 = vunpack.c.l.b16 %v3004
    %v3228 = vunpack.c.h.b16 %v3004
    %v3229 = vunpack.c.l.b16 %v3005
    %v3230 = vunpack.c.l.b16 %v3006
    %v3231 = vunpack.c.h.b16 %v3006
    %v3232 = vunpack.c.l.b16 %v3007
    %v3233 = vpack.c.b16 %v3224, %v3221
    %v3234 = vpack.c.b16 %v3225, %v3222
    %v3235 = vpack.c.b16 %v3226, %v3223
    %v3236 = vpack.c.b16 %v3230, %v3227
    %v3237 = vpack.c.b16 %v3231, %v3228
    %v3238 = vpack.c.b16 %v3232, %v3229
    %v3448 = vunpack.c.l.b16 %v3008
    %v3449 = vunpack.c.h.b16 %v3008
    %v3450 = vunpack.c.l.b16 %v3009
    %v3451 = vunpack.c.h.b16 %v3009
    %v3452 = vunpack.c.l.b16 %v3010
    %v3453 = vunpack.c.h.b16 %v3010
    %v3454 = vunpack.c.l.b16 %v3011
    %v3455 = vunpack.c.h.b16 %v3011
    %v3456 = vunpack.c.l.b16 %v3012
    %v3457 = vunpack.c.l.b16 %v3013
    %v3458 = vunpack.c.h.b16 %v3013
    %v3459 = vunpack.c.l.b16 %v3014
    %v3460 = vunpack.c.h.b16 %v3014
    %v3461 = vunpack.c.l.b16 %v3015
    %v3462 = vunpack.c.h.b16 %v3015
    %v3463 = vunpack.c.l.b16 %v3016
    %v3464 = vunpack.c.h.b16 %v3016
    %v3465 = vunpack.c.l.b16 %v3017
    %v3466 = vunpack.c.l.b16 %v3018
    %v3467 = vunpack.c.h.b16 %v3018
    %v3468 = vunpack.c.l.b16 %v3019
    %v3469 = vunpack.c.h.b16 %v3019
    %v3470 = vunpack.c.l.b16 %v3020
    %v3471 = vunpack.c.h.b16 %v3020
    %v3472 = vunpack.c.l.b16 %v3021
    %v3473 = vunpack.c.h.b16 %v3021
    %v3474 = vunpack.c.l.b16 %v3022
    %v3475 = vunpack.c.l.b16 %v3023
    %v3476 = vunpack.c.h.b16 %v3023
    %v3477 = vunpack.c.l.b16 %v3024
    %v3478 = vunpack.c.h.b16 %v3024
    %v3479 = vunpack.c.l.b16 %v3025
    %v3480 = vunpack.c.h.b16 %v3025
    %v3481 = vunpack.c.l.b16 %v3026
    %v3482 = vunpack.c.h.b16 %v3026
    %v3483 = vunpack.c.l.b16 %v3027
    %v3484 = vunpack.c.l.b16 %v3028
    %v3485 = vunpack.c.h.b16 %v3028
    %v3486 = vunpack.c.l.b16 %v3029
    %v3487 = vunpack.c.h.b16 %v3029
    %v3488 = vunpack.c.l.b16 %v3030
    %v3489 = vunpack.c.h.b16 %v3030
    %v3490 = vunpack.c.l.b16 %v3031
    %v3491 = vunpack.c.h.b16 %v3031
    %v3492 = vunpack.c.l.b16 %v3032
    %v3493 = vunpack.c.l.b16 %v3033
    %v3494 = vunpack.c.h.b16 %v3033
    %v3495 = vunpack.c.l.b16 %v3034
    %v3496 = vunpack.c.h.b16 %v3034
    %v3497 = vunpack.c.l.b16 %v3035
    %v3498 = vunpack.c.h.b16 %v3035
    %v3499 = vunpack.c.l.b16 %v3036
    %v3500 = vunpack.c.h.b16 %v3036
    %v3501 = vunpack.c.l.b16 %v3037
    %v3502 = vunpack.c.l.b16 %v3038
    %v3503 = vunpack.c.h.b16 %v3038
    %v3504 = vunpack.c.l.b16 %v3039
    %v3505 = vunpack.c.h.b16 %v3039
    %v3506 = vunpack.c.l.b16 %v3040
    %v3507 = vunpack.c.h.b16 %v3040
    %v3508 = vunpack.c.l.b16 %v3041
    %v3509 = vunpack.c.h.b16 %v3041
    %v3510 = vunpack.c.l.b16 %v3042
    %v3511 = vunpack.c.l.b16 %v3043
    %v3512 = vunpack.c.h.b16 %v3043
    %v3513 = vunpack.c.l.b16 %v3044
    %v3514 = vunpack.c.h.b16 %v3044
    %v3515 = vunpack.c.l.b16 %v3045
    %v3516 = vunpack.c.h.b16 %v3045
    %v3517 = vunpack.c.l.b16 %v3046
    %v3518 = vunpack.c.h.b16 %v3046
    %v3519 = vunpack.c.l.b16 %v3047
    %v3520 = vunpack.c.l.b16 %v3048
    %v3521 = vunpack.c.h.b16 %v3048
    %v3522 = vunpack.c.l.b16 %v3049
    %v3523 = vunpack.c.h.b16 %v3049
    %v3524 = vunpack.c.l.b16 %v3050
    %v3525 = vunpack.c.h.b16 %v3050
    %v3526 = vunpack.c.l.b16 %v3051
    %v3527 = vunpack.c.h.b16 %v3051
    %v3528 = vunpack.c.l.b16 %v3052
    %v3529 = vunpack.c.l.b16 %v3053
    %v3530 = vunpack.c.h.b16 %v3053
    %v3531 = vunpack.c.l.b16 %v3054
    %v3532 = vunpack.c.h.b16 %v3054
    %v3533 = vunpack.c.l.b16 %v3055
    %v3534 = vunpack.c.h.b16 %v3055
    %v3535 = vunpack.c.l.b16 %v3056
    %v3536 = vunpack.c.h.b16 %v3056
    %v3537 = vunpack.c.l.b16 %v3057
    %v3538 = vunpack.c.l.b16 %v3058
    %v3539 = vunpack.c.h.b16 %v3058
    %v3540 = vunpack.c.l.b16 %v3059
    %v3541 = vunpack.c.h.b16 %v3059
    %v3542 = vunpack.c.l.b16 %v3060
    %v3543 = vunpack.c.h.b16 %v3060
    %v3544 = vunpack.c.l.b16 %v3061
    %v3545 = vunpack.c.h.b16 %v3061
    %v3546 = vunpack.c.l.b16 %v3062
    %v3547 = vunpack.c.l.b16 %v3063
    %v3548 = vunpack.c.h.b16 %v3063
    %v3549 = vunpack.c.l.b16 %v3064
    %v3550 = vunpack.c.h.b16 %v3064
    %v3551 = vunpack.c.l.b16 %v3065
    %v3552 = vunpack.c.h.b16 %v3065
    %v3553 = vunpack.c.l.b16 %v3066
    %v3554 = vunpack.c.h.b16 %v3066
    %v3555 = vunpack.c.l.b16 %v3067
    %v3556 = vunpack.c.l.b16 %v3068
    %v3557 = vunpack.c.h.b16 %v3068
    %v3558 = vunpack.c.l.b16 %v3069
    %v3559 = vunpack.c.h.b16 %v3069
    %v3560 = vunpack.c.l.b16 %v3070
    %v3561 = vunpack.c.h.b16 %v3070
    %v3562 = vunpack.c.l.b16 %v3071
    %v3563 = vunpack.c.h.b16 %v3071
    %v3564 = vunpack.c.l.b16 %v3072
    %v3565 = vunpack.c.l.b16 %v3073
    %v3566 = vunpack.c.h.b16 %v3073
    %v3567 = vunpack.c.l.b16 %v3074
    %v3568 = vunpack.c.h.b16 %v3074
    %v3569 = vunpack.c.l.b16 %v3075
    %v3570 = vunpack.c.h.b16 %v3075
    %v3571 = vunpack.c.l.b16 %v3076
    %v3572 = vunpack.c.h.b16 %v3076
    %v3573 = vunpack.c.l.b16 %v3077
    %v3574 = vunpack.c.l.b16 %v3078
    %v3575 = vunpack.c.h.b16 %v3078
    %v3576 = vunpack.c.l.b16 %v3079
    %v3577 = vunpack.c.h.b16 %v3079
    %v3578 = vunpack.c.l.b16 %v3080
    %v3579 = vunpack.c.h.b16 %v3080
    %v3580 = vunpack.c.l.b16 %v3081
    %v3581 = vunpack.c.h.b16 %v3081
    %v3582 = vunpack.c.l.b16 %v3082
    %v3583 = vunpack.c.l.b16 %v3083
    %v3584 = vunpack.c.h.b16 %v3083
    %v3585 = vunpack.c.l.b16 %v3084
    %v3586 = vunpack.c.h.b16 %v3084
    %v3587 = vunpack.c.l.b16 %v3085
    %v3588 = vunpack.c.h.b16 %v3085
    %v3589 = vunpack.c.l.b16 %v3086
    %v3590 = vunpack.c.h.b16 %v3086
    %v3591 = vunpack.c.l.b16 %v3087
    %v3592 = vunpack.c.l.b16 %v3088
    %v3593 = vunpack.c.h.b16 %v3088
    %v3594 = vunpack.c.l.b16 %v3089
    %v3595 = vunpack.c.h.b16 %v3089
    %v3596 = vunpack.c.l.b16 %v3090
    %v3597 = vunpack.c.h.b16 %v3090
    %v3598 = vunpack.c.l.b16 %v3091
    %v3599 = vunpack.c.h.b16 %v3091
    %v3600 = vunpack.c.l.b16 %v3092
    %v3601 = vunpack.c.l.b16 %v3093
    %v3602 = vunpack.c.h.b16 %v3093
    %v3603 = vunpack.c.l.b16 %v3094
    %v3604 = vunpack.c.h.b16 %v3094
    %v3605 = vunpack.c.l.b16 %v3095
    %v3606 = vunpack.c.h.b16 %v3095
    %v3607 = vunpack.c.l.b16 %v3096
    %v3608 = vunpack.c.h.b16 %v3096
    %v3609 = vunpack.c.l.b16 %v3097
    %v3610 = vunpack.c.l.b16 %v3098
    %v3611 = vunpack.c.h.b16 %v3098
    %v3612 = vunpack.c.l.b16 %v3099
    %v3613 = vunpack.c.h.b16 %v3099
    %v3614 = vunpack.c.l.b16 %v3100
    %v3615 = vunpack.c.h.b16 %v3100
    %v3616 = vunpack.c.l.b16 %v3101
    %v3617 = vunpack.c.h.b16 %v3101
    %v3618 = vunpack.c.l.b16 %v3102
    %v3619 = vunpack.c.l.b16 %v3103
    %v3620 = vunpack.c.h.b16 %v3103
    %v3621 = vunpack.c.l.b16 %v3104
    %v3622 = vunpack.c.h.b16 %v3104
    %v3623 = vunpack.c.l.b16 %v3105
    %v3624 = vunpack.c.h.b16 %v3105
    %v3625 = vunpack.c.l.b16 %v3106
    %v3626 = vunpack.c.h.b16 %v3106
    %v3627 = vunpack.c.l.b16 %v3107
    %v3628 = vunpack.c.l.b16 %v3108
    %v3629 = vunpack.c.h.b16 %v3108
    %v3630 = vunpack.c.l.b16 %v3109
    %v3631 = vunpack.c.h.b16 %v3109
    %v3632 = vunpack.c.l.b16 %v3110
    %v3633 = vunpack.c.h.b16 %v3110
    %v3634 = vunpack.c.l.b16 %v3111
    %v3635 = vunpack.c.h.b16 %v3111
    %v3636 = vunpack.c.l.b16 %v3112
    %v3637 = vunpack.c.l.b16 %v3113
    %v3638 = vunpack.c.h.b16 %v3113
    %v3639 = vunpack.c.l.b16 %v3114
    %v3640 = vunpack.c.h.b16 %v3114
    %v3641 = vunpack.c.l.b16 %v3115
    %v3642 = vunpack.c.h.b16 %v3115
    %v3643 = vunpack.c.l.b16 %v3116
    %v3644 = vunpack.c.h.b16 %v3116
    %v3645 = vunpack.c.l.b16 %v3117
    %v3646 = vunpack.c.l.b16 %v3118
    %v3647 = vunpack.c.h.b16 %v3118
    %v3648 = vunpack.c.l.b16 %v3119
    %v3649 = vunpack.c.h.b16 %v3119
    %v3650 = vunpack.c.l.b16 %v3120
    %v3651 = vunpack.c.h.b16 %v3120
    %v3652 = vunpack.c.l.b16 %v3121
    %v3653 = vunpack.c.h.b16 %v3121
    %v3654 = vunpack.c.l.b16 %v3122
    %v3655 = vunpack.c.l.b16 %v3123
    %v3656 = vunpack.c.h.b16 %v3123
    %v3657 = vunpack.c.l.b16 %v3124
    %v3658 = vunpack.c.h.b16 %v3124
    %v3659 = vunpack.c.l.b16 %v3125
    %v3660 = vunpack.c.h.b16 %v3125
    %v3661 = vunpack.c.l.b16 %v3126
    %v3662 = vunpack.c.h.b16 %v3126
    %v3663 = vunpack.c.l.b16 %v3127
    %v3664 = vunpack.c.l.b16 %v3128
    %v3665 = vunpack.c.h.b16 %v3128
    %v3666 = vunpack.c.l.b16 %v3129
    %v3667 = vunpack.c.h.b16 %v3129
    %v3668 = vunpack.c.l.b16 %v3130
    %v3669 = vunpack.c.h.b16 %v3130
    %v3670 = vunpack.c.l.b16 %v3131
    %v3671 = vunpack.c.h.b16 %v3131
    %v3672 = vunpack.c.l.b16 %v3132
    %v3673 = vunpack.c.l.b16 %v3133
    %v3674 = vunpack.c.h.b16 %v3133
    %v3675 = vunpack.c.l.b16 %v3134
    %v3676 = vunpack.c.h.b16 %v3134
    %v3677 = vunpack.c.l.b16 %v3135
    %v3678 = vunpack.c.h.b16 %v3135
    %v3679 = vunpack.c.l.b16 %v3136
    %v3680 = vunpack.c.h.b16 %v3136
    %v3681 = vunpack.c.l.b16 %v3137
    %v3682 = vunpack.c.l.b16 %v3138
    %v3683 = vunpack.c.h.b16 %v3138
    %v3684 = vunpack.c.l.b16 %v3139
    %v3685 = vunpack.c.h.b16 %v3139
    %v3686 = vunpack.c.l.b16 %v3140
    %v3687 = vunpack.c.h.b16 %v3140
    %v3688 = vunpack.c.l.b16 %v3141
    %v3689 = vunpack.c.h.b16 %v3141
    %v3690 = vunpack.c.l.b16 %v3142
    %v3691 = vunpack.c.l.b16 %v3143
    %v3692 = vunpack.c.h.b16 %v3143
    %v3693 = vunpack.c.l.b16 %v3144
    %v3694 = vunpack.c.h.b16 %v3144
    %v3695 = vunpack.c.l.b16 %v3145
    %v3696 = vunpack.c.h.b16 %v3145
    %v3697 = vunpack.c.l.b16 %v3146
    %v3698 = vunpack.c.h.b16 %v3146
    %v3699 = vunpack.c.l.b16 %v3147
    %v3700 = vunpack.c.l.b16 %v3148
    %v3701 = vunpack.c.h.b16 %v3148
    %v3702 = vunpack.c.l.b16 %v3149
    %v3703 = vunpack.c.h.b16 %v3149
    %v3704 = vunpack.c.l.b16 %v3150
    %v3705 = vunpack.c.h.b16 %v3150
    %v3706 = vunpack.c.l.b16 %v3151
    %v3707 = vunpack.c.h.b16 %v3151
    %v3708 = vunpack.c.l.b16 %v3152
    %v3709 = vunpack.c.l.b16 %v3153
    %v3710 = vunpack.c.h.b16 %v3153
    %v3711 = vunpack.c.l.b16 %v3154
    %v3712 = vunpack.c.h.b16 %v3154
    %v3713 = vunpack.c.l.b16 %v3155
    %v3714 = vunpack.c.h.b16 %v3155
    %v3715 = vunpack.c.l.b16 %v3156
    %v3716 = vunpack.c.h.b16 %v3156
    %v3717 = vunpack.c.l.b16 %v3157
    %v3718 = vunpack.c.l.b16 %v3158
    %v3719 = vunpack.c.h.b16 %v3158
    %v3720 = vunpack.c.l.b16 %v3159
    %v3721 = vunpack.c.h.b16 %v3159
    %v3722 = vunpack.c.l.b16 %v3160
    %v3723 = vunpack.c.h.b16 %v3160
    %v3724 = vunpack.c.l.b16 %v3161
    %v3725 = vunpack.c.h.b16 %v3161
    %v3726 = vunpack.c.l.b16 %v3162
    %v3727 = vunpack.c.l.b16 %v3163
    %v3728 = vunpack.c.h.b16 %v3163
    %v3729 = vunpack.c.l.b16 %v3164
    %v3730 = vunpack.c.h.b16 %v3164
    %v3731 = vunpack.c.l.b16 %v3165
    %v3732 = vunpack.c.h.b16 %v3165
    %v3733 = vunpack.c.l.b16 %v3166
    %v3734 = vunpack.c.h.b16 %v3166
    %v3735 = vunpack.c.l.b16 %v3167
    %v3736 = vunpack.c.l.b16 %v3168
    %v3737 = vunpack.c.h.b16 %v3168
    %v3738 = vunpack.c.l.b16 %v3169
    %v3739 = vunpack.c.h.b16 %v3169
    %v3740 = vunpack.c.l.b16 %v3170
    %v3741 = vunpack.c.h.b16 %v3170
    %v3742 = vunpack.c.l.b16 %v3171
    %v3743 = vunpack.c.h.b16 %v3171
    %v3744 = vunpack.c.l.b16 %v3172
    %v3745 = vunpack.c.l.b16 %v3173
    %v3746 = vunpack.c.h.b16 %v3173
    %v3747 = vunpack.c.l.b16 %v3174
    %v3748 = vunpack.c.h.b16 %v3174
    %v3749 = vunpack.c.l.b16 %v3175
    %v3750 = vunpack.c.h.b16 %v3175
    %v3751 = vunpack.c.l.b16 %v3176
    %v3752 = vunpack.c.h.b16 %v3176
    %v3753 = vunpack.c.l.b16 %v3177
    %v3754 = vunpack.c.l.b16 %v3178
    %v3755 = vunpack.c.h.b16 %v3178
    %v3756 = vunpack.c.l.b16 %v3179
    %v3757 = vunpack.c.h.b16 %v3179
    %v3758 = vunpack.c.l.b16 %v3180
    %v3759 = vunpack.c.h.b16 %v3180
    %v3760 = vunpack.c.l.b16 %v3181
    %v3761 = vunpack.c.h.b16 %v3181
    %v3762 = vunpack.c.l.b16 %v3182
    %v3763 = vunpack.c.l.b16 %v3183
    %v3764 = vunpack.c.h.b16 %v3183
    %v3765 = vunpack.c.l.b16 %v3184
    %v3766 = vunpack.c.h.b16 %v3184
    %v3767 = vunpack.c.l.b16 %v3185
    %v3768 = vunpack.c.h.b16 %v3185
    %v3769 = vunpack.c.l.b16 %v3186
    %v3770 = vunpack.c.h.b16 %v3186
    %v3771 = vunpack.c.l.b16 %v3187
    %v3772 = vunpack.c.l.b16 %v3188
    %v3773 = vunpack.c.h.b16 %v3188
    %v3774 = vunpack.c.l.b16 %v3189
    %v3775 = vunpack.c.h.b16 %v3189
    %v3776 = vunpack.c.l.b16 %v3190
    %v3777 = vunpack.c.h.b16 %v3190
    %v3778 = vunpack.c.l.b16 %v3191
    %v3779 = vunpack.c.h.b16 %v3191
    %v3780 = vunpack.c.l.b16 %v3192
    %v3781 = vunpack.c.l.b16 %v3193
    %v3782 = vunpack.c.h.b16 %v3193
    %v3783 = vunpack.c.l.b16 %v3194
    %v3784 = vunpack.c.h.b16 %v3194
    %v3785 = vunpack.c.l.b16 %v3195
    %v3786 = vunpack.c.h.b16 %v3195
    %v3787 = vunpack.c.l.b16 %v3196
    %v3788 = vunpack.c.h.b16 %v3196
    %v3789 = vunpack.c.l.b16 %v3197
    %v3790 = vunpack.c.l.b16 %v3198
    %v3791 = vunpack.c.h.b16 %v3198
    %v3792 = vunpack.c.l.b16 %v3199
    %v3793 = vunpack.c.h.b16 %v3199
    %v3794 = vunpack.c.l.b16 %v3200
    %v3795 = vunpack.c.h.b16 %v3200
    %v3796 = vunpack.c.l.b16 %v3201
    %v3797 = vunpack.c.h.b16 %v3201
    %v3798 = vunpack.c.l.b16 %v3202
    %v3799 = vunpack.c.l.b16 %v3203
    %v3800 = vunpack.c.h.b16 %v3203
    %v3801 = vunpack.c.l.b16 %v3204
    %v3802 = vunpack.c.h.b16 %v3204
    %v3803 = vunpack.c.l.b16 %v3205
    %v3804 = vunpack.c.h.b16 %v3205
    %v3805 = vunpack.c.l.b16 %v3206
    %v3806 = vunpack.c.h.b16 %v3206
    %v3807 = vunpack.c.l.b16 %v3207
    %v3808 = vunpack.c.l.b16 %v3208
    %v3809 = vunpack.c.h.b16 %v3208
    %v3810 = vunpack.c.l.b16 %v3209
    %v3811 = vunpack.c.h.b16 %v3209
    %v3812 = vunpack.c.l.b16 %v3210
    %v3813 = vunpack.c.h.b16 %v3210
    %v3814 = vunpack.c.l.b16 %v3211
    %v3815 = vunpack.c.h.b16 %v3211
    %v3816 = vunpack.c.l.b16 %v3212
    %v3817 = vpack.c.b16 %v3457, %v3448
    %v3818 = vpack.c.b16 %v3458, %v3449
    %v3819 = vpack.c.b16 %v3459, %v3450
    %v3820 = vpack.c.b16 %v3460, %v3451
    %v3821 = vpack.c.b16 %v3461, %v3452
    %v3822 = vpack.c.b16 %v3462, %v3453
    %v3823 = vpack.c.b16 %v3463, %v3454
    %v3824 = vpack.c.b16 %v3464, %v3455
    %v3825 = vpack.c.b16 %v3465, %v3456
    %v3826 = vpack.c.b16 %v3475, %v3466
    %v3827 = vpack.c.b16 %v3476, %v3467
    %v3828 = vpack.c.b16 %v3477, %v3468
    %v3829 = vpack.c.b16 %v3478, %v3469
    %v3830 = vpack.c.b16 %v3479, %v3470
    %v3831 = vpack.c.b16 %v3480, %v3471
    %v3832 = vpack.c.b16 %v3481, %v3472
    %v3833 = vpack.c.b16 %v3482, %v3473
    %v3834 = vpack.c.b16 %v3483, %v3474
    %v3835 = vpack.c.b16 %v3493, %v3484
    %v3836 = vpack.c.b16 %v3494, %v3485
    %v3837 = vpack.c.b16 %v3495, %v3486
    %v3838 = vpack.c.b16 %v3496, %v3487
    %v3839 = vpack.c.b16 %v3497, %v3488
    %v3840 = vpack.c.b16 %v3498, %v3489
    %v3841 = vpack.c.b16 %v3499, %v3490
    %v3842 = vpack.c.b16 %v3500, %v3491
    %v3843 = vpack.c.b16 %v3501, %v3492
    %v3844 = vpack.c.b16 %v3511, %v3502
    %v3845 = vpack.c.b16 %v3512, %v3503
    %v3846 = vpack.c.b16 %v3513, %v3504
    %v3847 = vpack.c.b16 %v3514, %v3505
    %v3848 = vpack.c.b16 %v3515, %v3506
    %v3849 = vpack.c.b16 %v3516, %v3507
    %v3850 = vpack.c.b16 %v3517, %v3508
    %v3851 = vpack.c.b16 %v3518, %v3509
    %v3852 = vpack.c.b16 %v3519, %v3510
    %v3853 = vpack.c.b16 %v3529, %v3520
    %v3854 = vpack.c.b16 %v3530, %v3521
    %v3855 = vpack.c.b16 %v3531, %v3522
    %v3856 = vpack.c.b16 %v3532, %v3523
    %v3857 = vpack.c.b16 %v3533, %v3524
    %v3858 = vpack.c.b16 %v3534, %v3525
    %v3859 = vpack.c.b16 %v3535, %v3526
    %v3860 = vpack.c.b16 %v3536, %v3527
    %v3861 = vpack.c.b16 %v3537, %v3528
    %v3862 = vpack.c.b16 %v3547, %v3538
    %v3863 = vpack.c.b16 %v3548, %v3539
    %v3864 = vpack.c.b16 %v3549, %v3540
    %v3865 = vpack.c.b16 %v3550, %v3541
    %v3866 = vpack.c.b16 %v3551, %v3542
    %v3867 = vpack.c.b16 %v3552, %v3543
    %v3868 = vpack.c.b16 %v3553, %v3544
    %v3869 = vpack.c.b16 %v3554, %v3545
    %v3870 = vpack.c.b16 %v3555, %v3546
    %v3871 = vpack.c.b16 %v3565, %v3556
    %v3872 = vpack.c.b16 %v3566, %v3557
    %v3873 = vpack.c.b16 %v3567, %v3558
    %v3874 = vpack.c.b16 %v3568, %v3559
    %v3875 = vpack.c.b16 %v3569, %v3560
    %v3876 = vpack.c.b16 %v3570, %v3561
    %v3877 = vpack.c.b16 %v3571, %v3562
    %v3878 = vpack.c.b16 %v3572, %v3563
    %v3879 = vpack.c.b16 %v3573, %v3564
    %v3880 = vpack.c.b16 %v3583, %v3574
    %v3881 = vpack.c.b16 %v3584, %v3575
    %v3882 = vpack.c.b16 %v3585, %v3576
    %v3883 = vpack.c.b16 %v3586, %v3577
    %v3884 = vpack.c.b16 %v3587, %v3578
    %v3885 = vpack.c.b16 %v3588, %v3579
    %v3886 = vpack.c.b16 %v3589, %v3580
    %v3887 = vpack.c.b16 %v3590, %v3581
    %v3888 = vpack.c.b16 %v3591, %v3582
    %v3889 = vpack.c.b16 %v3601, %v3592
    %v3890 = vpack.c.b16 %v3602, %v3593
    %v3891 = vpack.c.b16 %v3603, %v3594
    %v3892 = vpack.c.b16 %v3604, %v3595
    %v3893 = vpack.c.b16 %v3605, %v3596
    %v3894 = vpack.c.b16 %v3606, %v3597
    %v3895 = vpack.c.b16 %v3607, %v3598
    %v3896 = vpack.c.b16 %v3608, %v3599
    %v3897 = vpack.c.b16 %v3609, %v3600
    %v3898 = vpack.c.b16 %v3619, %v3610
    %v3899 = vpack.c.b16 %v3620, %v3611
    %v3900 = vpack.c.b16 %v3621, %v3612
    %v3901 = vpack.c.b16 %v3622, %v3613
    %v3902 = vpack.c.b16 %v3623, %v3614
    %v3903 = vpack.c.b16 %v3624, %v3615
    %v3904 = vpack.c.b16 %v3625, %v3616
    %v3905 = vpack.c.b16 %v3626, %v3617
    %v3906 = vpack.c.b16 %v3627, %v3618
    %v3907 = vpack.c.b16 %v3637, %v3628
    %v3908 = vpack.c.b16 %v3638, %v3629
    %v3909 = vpack.c.b16 %v3639, %v3630
    %v3910 = vpack.c.b16 %v3640, %v3631
    %v3911 = vpack.c.b16 %v3641, %v3632
    %v3912 = vpack.c.b16 %v3642, %v3633
    %v3913 = vpack.c.b16 %v3643, %v3634
    %v3914 = vpack.c.b16 %v3644, %v3635
    %v3915 = vpack.c.b16 %v3645, %v3636
    %v3916 = vpack.c.b16 %v3655, %v3646
    %v3917 = vpack.c.b16 %v3656, %v3647
    %v3918 = vpack.c.b16 %v3657, %v3648
    %v3919 = vpack.c.b16 %v3658, %v3649
    %v3920 = vpack.c.b16 %v3659, %v3650
    %v3921 = vpack.c.b16 %v3660, %v3651
    %v3922 = vpack.c.b16 %v3661, %v3652
    %v3923 = vpack.c.b16 %v3662, %v3653
    %v3924 = vpack.c.b16 %v3663, %v3654
    %v3925 = vpack.c.b16 %v3673, %v3664
    %v3926 = vpack.c.b16 %v3674, %v3665
    %v3927 = vpack.c.b16 %v3675, %v3666
    %v3928 = vpack.c.b16 %v3676, %v3667
    %v3929 = vpack.c.b16 %v3677, %v3668
    %v3930 = vpack.c.b16 %v3678, %v3669
    %v3931 = vpack.c.b16 %v3679, %v3670
    %v3932 = vpack.c.b16 %v3680, %v3671
    %v3933 = vpack.c.b16 %v3681, %v3672
    %v3934 = vpack.c.b16 %v3691, %v3682
    %v3935 = vpack.c.b16 %v3692, %v3683
    %v3936 = vpack.c.b16 %v3693, %v3684
    %v3937 = vpack.c.b16 %v3694, %v3685
    %v3938 = vpack.c.b16 %v3695, %v3686
    %v3939 = vpack.c.b16 %v3696, %v3687
    %v3940 = vpack.c.b16 %v3697, %v3688
    %v3941 = vpack.c.b16 %v3698, %v3689
    %v3942 = vpack.c.b16 %v3699, %v3690
    %v3943 = vpack.c.b16 %v3709, %v3700
    %v3944 = vpack.c.b16 %v3710, %v3701
    %v3945 = vpack.c.b16 %v3711, %v3702
    %v3946 = vpack.c.b16 %v3712, %v3703
    %v3947 = vpack.c.b16 %v3713, %v3704
    %v3948 = vpack.c.b16 %v3714, %v3705
    %v3949 = vpack.c.b16 %v3715, %v3706
    %v3950 = vpack.c.b16 %v3716, %v3707
    %v3951 = vpack.c.b16 %v3717, %v3708
    %v3952 = vpack.c.b16 %v3727, %v3718
    %v3953 = vpack.c.b16 %v3728, %v3719
    %v3954 = vpack.c.b16 %v3729, %v3720
    %v3955 = vpack.c.b16 %v3730, %v3721
    %v3956 = vpack.c.b16 %v3731, %v3722
    %v3957 = vpack.c.b16 %v3732, %v3723
    %v3958 = vpack.c.b16 %v3733, %v3724
    %v3959 = vpack.c.b16 %v3734, %v3725
    %v3960 = vpack.c.b16 %v3735, %v3726
    %v3961 = vpack.c.b16 %v3745, %v3736
    %v3962 = vpack.c.b16 %v3746, %v3737
    %v3963 = vpack.c.b16 %v3747, %v3738
    %v3964 = vpack.c.b16 %v3748, %v3739
    %v3965 = vpack.c.b16 %v3749, %v3740
    %v3966 = vpack.c.b16 %v3750, %v3741
    %v3967 = vpack.c.b16 %v3751, %v3742
    %v3968 = vpack.c.b16 %v3752, %v3743
    %v3969 = vpack.c.b16 %v3753, %v3744
    %v3970 = vpack.c.b16 %v3763, %v3754
    %v3971 = vpack.c.b16 %v3764, %v3755
    %v3972 = vpack.c.b16 %v3765, %v3756
    %v3973 = vpack.c.b16 %v3766, %v3757
    %v3974 = vpack.c.b16 %v3767, %v3758
    %v3975 = vpack.c.b16 %v3768, %v3759
    %v3976 = vpack.c.b16 %v3769, %v3760
    %v3977 = vpack.c.b16 %v3770, %v3761
    %v3978 = vpack.c.b16 %v3771, %v3762
    %v3979 = vpack.c.b16 %v3781, %v3772
    %v3980 = vpack.c.b16 %v3782, %v3773
    %v3981 = vpack.c.b16 %v3783, %v3774
    %v3982 = vpack.c.b16 %v3784, %v3775
    %v3983 = vpack.c.b16 %v3785, %v3776
    %v3984 = vpack.c.b16 %v3786, %v3777
    %v3985 = vpack.c.b16 %v3787, %v3778
    %v3986 = vpack.c.b16 %v3788, %v3779
    %v3987 = vpack.c.b16 %v3789, %v3780
    %v3988 = vpack.c.b16 %v3799, %v3790
    %v3989 = vpack.c.b16 %v3800, %v3791
    %v3990 = vpack.c.b16 %v3801, %v3792
    %v3991 = vpack.c.b16 %v3802, %v3793
    %v3992 = vpack.c.b16 %v3803, %v3794
    %v3993 = vpack.c.b16 %v3804, %v3795
    %v3994 = vpack.c.b16 %v3805, %v3796
    %v3995 = vpack.c.b16 %v3806, %v3797
    %v3996 = vpack.c.b16 %v3807, %v3798
    %v3997 = vpack.c.b16 %v3808, %v3808
    %v3998 = vpack.c.b16 %v3809, %v3809
    %v3999 = vpack.c.b16 %v3810, %v3810
    %v4000 = vpack.c.b16 %v3811, %v3811
    %v4001 = vpack.c.b16 %v3812, %v3812
    %v4002 = vpack.c.b16 %v3813, %v3813
    %v4003 = vpack.c.b16 %v3814, %v3814
    %v4004 = vpack.c.b16 %v3815, %v3815
    %v4005 = vpack.c.b16 %v3816, %v3816
    %vm4186 = vcmask 588800
    %v4188 = vsel %vm4186, %v3235, 0
    %v4191 = vsel %vm4186, %v3238, 0
    %vm4193 = vcmask 1043456
    %v4195 = vsel %vm4193, %v3997, 0
    %v4198 = vsel %vm4193, %v3998, 0
    %v4201 = vsel %vm4193, %v3999, 0
    %v4204 = vsel %vm4193, %v4000, 0
    %v4207 = vsel %vm4193, %v4001, 0
    %v4210 = vsel %vm4193, %v4002, 0
    %v4213 = vsel %vm4193, %v4003, 0
    %v4216 = vsel %vm4193, %v4004, 0
    %v4219 = vsel %vm4193, %v4005, 0
    %4221 = vmatpush.bf16.msra.mxu0 %v3880
    %4222 = vmatpush.bf16.msra.mxu0 %v3871
    %4223 = vmatpush.bf16.msra.mxu0 %v3862
    %4224 = vmatpush.bf16.msra.mxu0 %v3853
    %4225 = vmatpush.bf16.msra.mxu0 %v3844
    %4226 = vmatpush.bf16.msra.mxu0 %v3835
    %4227 = vmatpush.bf16.msra.mxu0 %v3826
    %4228 = vmatpush.bf16.msra.mxu0 %v3817
    %4229 = vmatmul.bf16.gmra.mxu0 %v3233
    %v4230 = vpop.f32.mrf.mxu0
    %v4231 = vadd.f32 0.0, %v4230
    %v4232 = vpop.f32.mrf.mxu0
    %v4233 = vadd.f32 0.0, %v4232
    %4234 = vmatmul.bf16.gmra.mxu0 %v3236
    %v4235 = vpop.f32.mrf.mxu0
    %v4236 = vadd.f32 0.0, %v4235
    %v4237 = vpop.f32.mrf.mxu0
    %v4238 = vadd.f32 0.0, %v4237
    %4239 = vdwg.mxu0
    %4240 = vmatpush.bf16.msra.mxu0 %v3952
    %4241 = vmatpush.bf16.msra.mxu0 %v3943
    %4242 = vmatpush.bf16.msra.mxu0 %v3934
    %4243 = vmatpush.bf16.msra.mxu0 %v3925
    %4244 = vmatpush.bf16.msra.mxu0 %v3916
    %4245 = vmatpush.bf16.msra.mxu0 %v3907
    %4246 = vmatpush.bf16.msra.mxu0 %v3898
    %4247 = vmatpush.bf16.msra.mxu0 %v3889
    %4248 = vmatmul.bf16.gmra.mxu0 %v3234
    %v4249 = vpop.f32.mrf.mxu0
    %v4250 = vadd.f32 %v4231, %v4249
    %v4251 = vpop.f32.mrf.mxu0
    %v4252 = vadd.f32 %v4233, %v4251
    %4253 = vmatmul.bf16.gmra.mxu0 %v3237
    %v4254 = vpop.f32.mrf.mxu0
    %v4255 = vadd.f32 %v4236, %v4254
    %v4256 = vpop.f32.mrf.mxu0
    %v4257 = vadd.f32 %v4238, %v4256
    %4258 = vdwg.mxu0
    %4259 = vmatpush.bf16.msra.mxu0 0
    %4260 = vmatpush.bf16.msra.mxu0 0
    %4261 = vmatpush.bf16.msra.mxu0 0
    %4262 = vmatpush.bf16.msra.mxu0 %v4195
    %4263 = vmatpush.bf16.msra.mxu0 %v3988
    %4264 = vmatpush.bf16.msra.mxu0 %v3979
    %4265 = vmatpush.bf16.msra.mxu0 %v3970
    %4266 = vmatpush.bf16.msra.mxu0 %v3961
    %4267 = vmatmul.bf16.gmra.mxu0 %v4188
    %v4268 = vpop.f32.mrf.mxu0
    %v4269 = vadd.f32 %v4250, %v4268
    %v4270 = vpop.f32.mrf.mxu0
    %v4271 = vadd.f32 %v4252, %v4270
    %4272 = vmatmul.bf16.gmra.mxu0 %v4191
    %v4273 = vpop.f32.mrf.mxu0
    %v4274 = vadd.f32 %v4255, %v4273
    %v4275 = vpop.f32.mrf.mxu0
    %v4276 = vadd.f32 %v4257, %v4275
    %4277 = vdwg.mxu0
    %4278 = vmatpush.bf16.msra.mxu0 %v3881
    %4279 = vmatpush.bf16.msra.mxu0 %v3872
    %4280 = vmatpush.bf16.msra.mxu0 %v3863
    %4281 = vmatpush.bf16.msra.mxu0 %v3854
    %4282 = vmatpush.bf16.msra.mxu0 %v3845
    %4283 = vmatpush.bf16.msra.mxu0 %v3836
    %4284 = vmatpush.bf16.msra.mxu0 %v3827
    %4285 = vmatpush.bf16.msra.mxu0 %v3818
    %4286 = vmatmul.bf16.gmra.mxu0 %v3233
    %v4287 = vpop.f32.mrf.mxu0
    %v4288 = vadd.f32 0.0, %v4287
    %v4289 = vpop.f32.mrf.mxu0
    %v4290 = vadd.f32 0.0, %v4289
    %4291 = vmatmul.bf16.gmra.mxu0 %v3236
    %v4292 = vpop.f32.mrf.mxu0
    %v4293 = vadd.f32 0.0, %v4292
    %v4294 = vpop.f32.mrf.mxu0
    %v4295 = vadd.f32 0.0, %v4294
    %4296 = vdwg.mxu0
    %4297 = vmatpush.bf16.msra.mxu0 %v3953
    %4298 = vmatpush.bf16.msra.mxu0 %v3944
    %4299 = vmatpush.bf16.msra.mxu0 %v3935
    %4300 = vmatpush.bf16.msra.mxu0 %v3926
    %4301 = vmatpush.bf16.msra.mxu0 %v3917
    %4302 = vmatpush.bf16.msra.mxu0 %v3908
    %4303 = vmatpush.bf16.msra.mxu0 %v3899
    %4304 = vmatpush.bf16.msra.mxu0 %v3890
    %4305 = vmatmul.bf16.gmra.mxu0 %v3234
    %v4306 = vpop.f32.mrf.mxu0
    %v4307 = vadd.f32 %v4288, %v4306
    %v4308 = vpop.f32.mrf.mxu0
    %v4309 = vadd.f32 %v4290, %v4308
    %4310 = vmatmul.bf16.gmra.mxu0 %v3237
    %v4311 = vpop.f32.mrf.mxu0
    %v4312 = vadd.f32 %v4293, %v4311
    %v4313 = vpop.f32.mrf.mxu0
    %v4314 = vadd.f32 %v4295, %v4313
    %4315 = vdwg.mxu0
    %4316 = vmatpush.bf16.msra.mxu0 0
    %4317 = vmatpush.bf16.msra.mxu0 0
    %4318 = vmatpush.bf16.msra.mxu0 0
    %4319 = vmatpush.bf16.msra.mxu0 %v4198
    %4320 = vmatpush.bf16.msra.mxu0 %v3989
    %4321 = vmatpush.bf16.msra.mxu0 %v3980
    %4322 = vmatpush.bf16.msra.mxu0 %v3971
    %4323 = vmatpush.bf16.msra.mxu0 %v3962
    %4324 = vmatmul.bf16.gmra.mxu0 %v4188
    %v4325 = vpop.f32.mrf.mxu0
    %v4326 = vadd.f32 %v4307, %v4325
    %v4327 = vpop.f32.mrf.mxu0
    %v4328 = vadd.f32 %v4309, %v4327
    %4329 = vmatmul.bf16.gmra.mxu0 %v4191
    %v4330 = vpop.f32.mrf.mxu0
    %v4331 = vadd.f32 %v4312, %v4330
    %v4332 = vpop.f32.mrf.mxu0
    %v4333 = vadd.f32 %v4314, %v4332
    %4334 = vdwg.mxu0
    %4335 = vmatpush.bf16.msra.mxu0 %v3882
    %4336 = vmatpush.bf16.msra.mxu0 %v3873
    %4337 = vmatpush.bf16.msra.mxu0 %v3864
    %4338 = vmatpush.bf16.msra.mxu0 %v3855
    %4339 = vmatpush.bf16.msra.mxu0 %v3846
    %4340 = vmatpush.bf16.msra.mxu0 %v3837
    %4341 = vmatpush.bf16.msra.mxu0 %v3828
    %4342 = vmatpush.bf16.msra.mxu0 %v3819
    %4343 = vmatmul.bf16.gmra.mxu0 %v3233
    %v4344 = vpop.f32.mrf.mxu0
    %v4345 = vadd.f32 0.0, %v4344
    %v4346 = vpop.f32.mrf.mxu0
    %v4347 = vadd.f32 0.0, %v4346
    %4348 = vmatmul.bf16.gmra.mxu0 %v3236
    %v4349 = vpop.f32.mrf.mxu0
    %v4350 = vadd.f32 0.0, %v4349
    %v4351 = vpop.f32.mrf.mxu0
    %v4352 = vadd.f32 0.0, %v4351
    %4353 = vdwg.mxu0
    %4354 = vmatpush.bf16.msra.mxu0 %v3954
    %4355 = vmatpush.bf16.msra.mxu0 %v3945
    %4356 = vmatpush.bf16.msra.mxu0 %v3936
    %4357 = vmatpush.bf16.msra.mxu0 %v3927
    %4358 = vmatpush.bf16.msra.mxu0 %v3918
    %4359 = vmatpush.bf16.msra.mxu0 %v3909
    %4360 = vmatpush.bf16.msra.mxu0 %v3900
    %4361 = vmatpush.bf16.msra.mxu0 %v3891
    %4362 = vmatmul.bf16.gmra.mxu0 %v3234
    %v4363 = vpop.f32.mrf.mxu0
    %v4364 = vadd.f32 %v4345, %v4363
    %v4365 = vpop.f32.mrf.mxu0
    %v4366 = vadd.f32 %v4347, %v4365
    %4367 = vmatmul.bf16.gmra.mxu0 %v3237
    %v4368 = vpop.f32.mrf.mxu0
    %v4369 = vadd.f32 %v4350, %v4368
    %v4370 = vpop.f32.mrf.mxu0
    %v4371 = vadd.f32 %v4352, %v4370
    %4372 = vdwg.mxu0
    %4373 = vmatpush.bf16.msra.mxu0 0
    %4374 = vmatpush.bf16.msra.mxu0 0
    %4375 = vmatpush.bf16.msra.mxu0 0
    %4376 = vmatpush.bf16.msra.mxu0 %v4201
    %4377 = vmatpush.bf16.msra.mxu0 %v3990
    %4378 = vmatpush.bf16.msra.mxu0 %v3981
    %4379 = vmatpush.bf16.msra.mxu0 %v3972
    %4380 = vmatpush.bf16.msra.mxu0 %v3963
    %4381 = vmatmul.bf16.gmra.mxu0 %v4188
    %v4382 = vpop.f32.mrf.mxu0
    %v4383 = vadd.f32 %v4364, %v4382
    %v4384 = vpop.f32.mrf.mxu0
    %v4385 = vadd.f32 %v4366, %v4384
    %4386 = vmatmul.bf16.gmra.mxu0 %v4191
    %v4387 = vpop.f32.mrf.mxu0
    %v4388 = vadd.f32 %v4369, %v4387
    %v4389 = vpop.f32.mrf.mxu0
    %v4390 = vadd.f32 %v4371, %v4389
    %4391 = vdwg.mxu0
    %4392 = vmatpush.bf16.msra.mxu0 %v3883
    %4393 = vmatpush.bf16.msra.mxu0 %v3874
    %4394 = vmatpush.bf16.msra.mxu0 %v3865
    %4395 = vmatpush.bf16.msra.mxu0 %v3856
    %4396 = vmatpush.bf16.msra.mxu0 %v3847
    %4397 = vmatpush.bf16.msra.mxu0 %v3838
    %4398 = vmatpush.bf16.msra.mxu0 %v3829
    %4399 = vmatpush.bf16.msra.mxu0 %v3820
    %4400 = vmatmul.bf16.gmra.mxu0 %v3233
    %v4401 = vpop.f32.mrf.mxu0
    %v4402 = vadd.f32 0.0, %v4401
    %v4403 = vpop.f32.mrf.mxu0
    %v4404 = vadd.f32 0.0, %v4403
    %4405 = vmatmul.bf16.gmra.mxu0 %v3236
    %v4406 = vpop.f32.mrf.mxu0
    %v4407 = vadd.f32 0.0, %v4406
    %v4408 = vpop.f32.mrf.mxu0
    %v4409 = vadd.f32 0.0, %v4408
    %4410 = vdwg.mxu0
    %4411 = vmatpush.bf16.msra.mxu0 %v3955
    %4412 = vmatpush.bf16.msra.mxu0 %v3946
    %4413 = vmatpush.bf16.msra.mxu0 %v3937
    %4414 = vmatpush.bf16.msra.mxu0 %v3928
    %4415 = vmatpush.bf16.msra.mxu0 %v3919
    %4416 = vmatpush.bf16.msra.mxu0 %v3910
    %4417 = vmatpush.bf16.msra.mxu0 %v3901
    %4418 = vmatpush.bf16.msra.mxu0 %v3892
    %4419 = vmatmul.bf16.gmra.mxu0 %v3234
    %v4420 = vpop.f32.mrf.mxu0
    %v4421 = vadd.f32 %v4402, %v4420
    %v4422 = vpop.f32.mrf.mxu0
    %v4423 = vadd.f32 %v4404, %v4422
    %4424 = vmatmul.bf16.gmra.mxu0 %v3237
    %v4425 = vpop.f32.mrf.mxu0
    %v4426 = vadd.f32 %v4407, %v4425
    %v4427 = vpop.f32.mrf.mxu0
    %v4428 = vadd.f32 %v4409, %v4427
    %4429 = vdwg.mxu0
    %4430 = vmatpush.bf16.msra.mxu0 0
    %4431 = vmatpush.bf16.msra.mxu0 0
    %4432 = vmatpush.bf16.msra.mxu0 0
    %4433 = vmatpush.bf16.msra.mxu0 %v4204
    %4434 = vmatpush.bf16.msra.mxu0 %v3991
    %4435 = vmatpush.bf16.msra.mxu0 %v3982
    %4436 = vmatpush.bf16.msra.mxu0 %v3973
    %4437 = vmatpush.bf16.msra.mxu0 %v3964
    %4438 = vmatmul.bf16.gmra.mxu0 %v4188
    %v4439 = vpop.f32.mrf.mxu0
    %v4440 = vadd.f32 %v4421, %v4439
    %v4441 = vpop.f32.mrf.mxu0
    %v4442 = vadd.f32 %v4423, %v4441
    %4443 = vmatmul.bf16.gmra.mxu0 %v4191
    %v4444 = vpop.f32.mrf.mxu0
    %v4445 = vadd.f32 %v4426, %v4444
    %v4446 = vpop.f32.mrf.mxu0
    %v4447 = vadd.f32 %v4428, %v4446
    %4448 = vdwg.mxu0
    %4449 = vmatpush.bf16.msra.mxu0 %v3884
    %4450 = vmatpush.bf16.msra.mxu0 %v3875
    %4451 = vmatpush.bf16.msra.mxu0 %v3866
    %4452 = vmatpush.bf16.msra.mxu0 %v3857
    %4453 = vmatpush.bf16.msra.mxu0 %v3848
    %4454 = vmatpush.bf16.msra.mxu0 %v3839
    %4455 = vmatpush.bf16.msra.mxu0 %v3830
    %4456 = vmatpush.bf16.msra.mxu0 %v3821
    %4457 = vmatmul.bf16.gmra.mxu0 %v3233
    %v4458 = vpop.f32.mrf.mxu0
    %v4459 = vadd.f32 0.0, %v4458
    %v4460 = vpop.f32.mrf.mxu0
    %v4461 = vadd.f32 0.0, %v4460
    %4462 = vmatmul.bf16.gmra.mxu0 %v3236
    %v4463 = vpop.f32.mrf.mxu0
    %v4464 = vadd.f32 0.0, %v4463
    %v4465 = vpop.f32.mrf.mxu0
    %v4466 = vadd.f32 0.0, %v4465
    %4467 = vdwg.mxu0
    %4468 = vmatpush.bf16.msra.mxu0 %v3956
    %4469 = vmatpush.bf16.msra.mxu0 %v3947
    %4470 = vmatpush.bf16.msra.mxu0 %v3938
    %4471 = vmatpush.bf16.msra.mxu0 %v3929
    %4472 = vmatpush.bf16.msra.mxu0 %v3920
    %4473 = vmatpush.bf16.msra.mxu0 %v3911
    %4474 = vmatpush.bf16.msra.mxu0 %v3902
    %4475 = vmatpush.bf16.msra.mxu0 %v3893
    %4476 = vmatmul.bf16.gmra.mxu0 %v3234
    %v4477 = vpop.f32.mrf.mxu0
    %v4478 = vadd.f32 %v4459, %v4477
    %v4479 = vpop.f32.mrf.mxu0
    %v4480 = vadd.f32 %v4461, %v4479
    %4481 = vmatmul.bf16.gmra.mxu0 %v3237
    %v4482 = vpop.f32.mrf.mxu0
    %v4483 = vadd.f32 %v4464, %v4482
    %v4484 = vpop.f32.mrf.mxu0
    %v4485 = vadd.f32 %v4466, %v4484
    %4486 = vdwg.mxu0
    %4487 = vmatpush.bf16.msra.mxu0 0
    %4488 = vmatpush.bf16.msra.mxu0 0
    %4489 = vmatpush.bf16.msra.mxu0 0
    %4490 = vmatpush.bf16.msra.mxu0 %v4207
    %4491 = vmatpush.bf16.msra.mxu0 %v3992
    %4492 = vmatpush.bf16.msra.mxu0 %v3983
    %4493 = vmatpush.bf16.msra.mxu0 %v3974
    %4494 = vmatpush.bf16.msra.mxu0 %v3965
    %4495 = vmatmul.bf16.gmra.mxu0 %v4188
    %v4496 = vpop.f32.mrf.mxu0
    %v4497 = vadd.f32 %v4478, %v4496
    %v4498 = vpop.f32.mrf.mxu0
    %v4499 = vadd.f32 %v4480, %v4498
    %4500 = vmatmul.bf16.gmra.mxu0 %v4191
    %v4501 = vpop.f32.mrf.mxu0
    %v4502 = vadd.f32 %v4483, %v4501
    %v4503 = vpop.f32.mrf.mxu0
    %v4504 = vadd.f32 %v4485, %v4503
    %4505 = vdwg.mxu0
    %4506 = vmatpush.bf16.msra.mxu0 %v3885
    %4507 = vmatpush.bf16.msra.mxu0 %v3876
    %4508 = vmatpush.bf16.msra.mxu0 %v3867
    %4509 = vmatpush.bf16.msra.mxu0 %v3858
    %4510 = vmatpush.bf16.msra.mxu0 %v3849
    %4511 = vmatpush.bf16.msra.mxu0 %v3840
    %4512 = vmatpush.bf16.msra.mxu0 %v3831
    %4513 = vmatpush.bf16.msra.mxu0 %v3822
    %4514 = vmatmul.bf16.gmra.mxu0 %v3233
    %v4515 = vpop.f32.mrf.mxu0
    %v4516 = vadd.f32 0.0, %v4515
    %v4517 = vpop.f32.mrf.mxu0
    %v4518 = vadd.f32 0.0, %v4517
    %4519 = vmatmul.bf16.gmra.mxu0 %v3236
    %v4520 = vpop.f32.mrf.mxu0
    %v4521 = vadd.f32 0.0, %v4520
    %v4522 = vpop.f32.mrf.mxu0
    %v4523 = vadd.f32 0.0, %v4522
    %4524 = vdwg.mxu0
    %4525 = vmatpush.bf16.msra.mxu0 %v3957
    %4526 = vmatpush.bf16.msra.mxu0 %v3948
    %4527 = vmatpush.bf16.msra.mxu0 %v3939
    %4528 = vmatpush.bf16.msra.mxu0 %v3930
    %4529 = vmatpush.bf16.msra.mxu0 %v3921
    %4530 = vmatpush.bf16.msra.mxu0 %v3912
    %4531 = vmatpush.bf16.msra.mxu0 %v3903
    %4532 = vmatpush.bf16.msra.mxu0 %v3894
    %4533 = vmatmul.bf16.gmra.mxu0 %v3234
    %v4534 = vpop.f32.mrf.mxu0
    %v4535 = vadd.f32 %v4516, %v4534
    %v4536 = vpop.f32.mrf.mxu0
    %v4537 = vadd.f32 %v4518, %v4536
    %4538 = vmatmul.bf16.gmra.mxu0 %v3237
    %v4539 = vpop.f32.mrf.mxu0
    %v4540 = vadd.f32 %v4521, %v4539
    %v4541 = vpop.f32.mrf.mxu0
    %v4542 = vadd.f32 %v4523, %v4541
    %4543 = vdwg.mxu0
    %4544 = vmatpush.bf16.msra.mxu0 0
    %4545 = vmatpush.bf16.msra.mxu0 0
    %4546 = vmatpush.bf16.msra.mxu0 0
    %4547 = vmatpush.bf16.msra.mxu0 %v4210
    %4548 = vmatpush.bf16.msra.mxu0 %v3993
    %4549 = vmatpush.bf16.msra.mxu0 %v3984
    %4550 = vmatpush.bf16.msra.mxu0 %v3975
    %4551 = vmatpush.bf16.msra.mxu0 %v3966
    %4552 = vmatmul.bf16.gmra.mxu0 %v4188
    %v4553 = vpop.f32.mrf.mxu0
    %v4554 = vadd.f32 %v4535, %v4553
    %v4555 = vpop.f32.mrf.mxu0
    %v4556 = vadd.f32 %v4537, %v4555
    %4557 = vmatmul.bf16.gmra.mxu0 %v4191
    %v4558 = vpop.f32.mrf.mxu0
    %v4559 = vadd.f32 %v4540, %v4558
    %v4560 = vpop.f32.mrf.mxu0
    %v4561 = vadd.f32 %v4542, %v4560
    %4562 = vdwg.mxu0
    %4563 = vmatpush.bf16.msra.mxu0 %v3886
    %4564 = vmatpush.bf16.msra.mxu0 %v3877
    %4565 = vmatpush.bf16.msra.mxu0 %v3868
    %4566 = vmatpush.bf16.msra.mxu0 %v3859
    %4567 = vmatpush.bf16.msra.mxu0 %v3850
    %4568 = vmatpush.bf16.msra.mxu0 %v3841
    %4569 = vmatpush.bf16.msra.mxu0 %v3832
    %4570 = vmatpush.bf16.msra.mxu0 %v3823
    %4571 = vmatmul.bf16.gmra.mxu0 %v3233
    %v4572 = vpop.f32.mrf.mxu0
    %v4573 = vadd.f32 0.0, %v4572
    %v4574 = vpop.f32.mrf.mxu0
    %v4575 = vadd.f32 0.0, %v4574
    %4576 = vmatmul.bf16.gmra.mxu0 %v3236
    %v4577 = vpop.f32.mrf.mxu0
    %v4578 = vadd.f32 0.0, %v4577
    %v4579 = vpop.f32.mrf.mxu0
    %v4580 = vadd.f32 0.0, %v4579
    %4581 = vdwg.mxu0
    %4582 = vmatpush.bf16.msra.mxu0 %v3958
    %4583 = vmatpush.bf16.msra.mxu0 %v3949
    %4584 = vmatpush.bf16.msra.mxu0 %v3940
    %4585 = vmatpush.bf16.msra.mxu0 %v3931
    %4586 = vmatpush.bf16.msra.mxu0 %v3922
    %4587 = vmatpush.bf16.msra.mxu0 %v3913
    %4588 = vmatpush.bf16.msra.mxu0 %v3904
    %4589 = vmatpush.bf16.msra.mxu0 %v3895
    %4590 = vmatmul.bf16.gmra.mxu0 %v3234
    %v4591 = vpop.f32.mrf.mxu0
    %v4592 = vadd.f32 %v4573, %v4591
    %v4593 = vpop.f32.mrf.mxu0
    %v4594 = vadd.f32 %v4575, %v4593
    %4595 = vmatmul.bf16.gmra.mxu0 %v3237
    %v4596 = vpop.f32.mrf.mxu0
    %v4597 = vadd.f32 %v4578, %v4596
    %v4598 = vpop.f32.mrf.mxu0
    %v4599 = vadd.f32 %v4580, %v4598
    %4600 = vdwg.mxu0
    %4601 = vmatpush.bf16.msra.mxu0 0
    %4602 = vmatpush.bf16.msra.mxu0 0
    %4603 = vmatpush.bf16.msra.mxu0 0
    %4604 = vmatpush.bf16.msra.mxu0 %v4213
    %4605 = vmatpush.bf16.msra.mxu0 %v3994
    %4606 = vmatpush.bf16.msra.mxu0 %v3985
    %4607 = vmatpush.bf16.msra.mxu0 %v3976
    %4608 = vmatpush.bf16.msra.mxu0 %v3967
    %4609 = vmatmul.bf16.gmra.mxu0 %v4188
    %v4610 = vpop.f32.mrf.mxu0
    %v4611 = vadd.f32 %v4592, %v4610
    %v4612 = vpop.f32.mrf.mxu0
    %v4613 = vadd.f32 %v4594, %v4612
    %4614 = vmatmul.bf16.gmra.mxu0 %v4191
    %v4615 = vpop.f32.mrf.mxu0
    %v4616 = vadd.f32 %v4597, %v4615
    %v4617 = vpop.f32.mrf.mxu0
    %v4618 = vadd.f32 %v4599, %v4617
    %4619 = vdwg.mxu0
    %4620 = vmatpush.bf16.msra.mxu0 %v3887
    %4621 = vmatpush.bf16.msra.mxu0 %v3878
    %4622 = vmatpush.bf16.msra.mxu0 %v3869
    %4623 = vmatpush.bf16.msra.mxu0 %v3860
    %4624 = vmatpush.bf16.msra.mxu0 %v3851
    %4625 = vmatpush.bf16.msra.mxu0 %v3842
    %4626 = vmatpush.bf16.msra.mxu0 %v3833
    %4627 = vmatpush.bf16.msra.mxu0 %v3824
    %4628 = vmatmul.bf16.gmra.mxu0 %v3233
    %v4629 = vpop.f32.mrf.mxu0
    %v4630 = vadd.f32 0.0, %v4629
    %v4631 = vpop.f32.mrf.mxu0
    %v4632 = vadd.f32 0.0, %v4631
    %4633 = vmatmul.bf16.gmra.mxu0 %v3236
    %v4634 = vpop.f32.mrf.mxu0
    %v4635 = vadd.f32 0.0, %v4634
    %v4636 = vpop.f32.mrf.mxu0
    %v4637 = vadd.f32 0.0, %v4636
    %4638 = vdwg.mxu0
    %4639 = vmatpush.bf16.msra.mxu0 %v3959
    %4640 = vmatpush.bf16.msra.mxu0 %v3950
    %4641 = vmatpush.bf16.msra.mxu0 %v3941
    %4642 = vmatpush.bf16.msra.mxu0 %v3932
    %4643 = vmatpush.bf16.msra.mxu0 %v3923
    %4644 = vmatpush.bf16.msra.mxu0 %v3914
    %4645 = vmatpush.bf16.msra.mxu0 %v3905
    %4646 = vmatpush.bf16.msra.mxu0 %v3896
    %4647 = vmatmul.bf16.gmra.mxu0 %v3234
    %v4648 = vpop.f32.mrf.mxu0
    %v4649 = vadd.f32 %v4630, %v4648
    %v4650 = vpop.f32.mrf.mxu0
    %v4651 = vadd.f32 %v4632, %v4650
    %4652 = vmatmul.bf16.gmra.mxu0 %v3237
    %v4653 = vpop.f32.mrf.mxu0
    %v4654 = vadd.f32 %v4635, %v4653
    %v4655 = vpop.f32.mrf.mxu0
    %v4656 = vadd.f32 %v4637, %v4655
    %4657 = vdwg.mxu0
    %4658 = vmatpush.bf16.msra.mxu0 0
    %4659 = vmatpush.bf16.msra.mxu0 0
    %4660 = vmatpush.bf16.msra.mxu0 0
    %4661 = vmatpush.bf16.msra.mxu0 %v4216
    %4662 = vmatpush.bf16.msra.mxu0 %v3995
    %4663 = vmatpush.bf16.msra.mxu0 %v3986
    %4664 = vmatpush.bf16.msra.mxu0 %v3977
    %4665 = vmatpush.bf16.msra.mxu0 %v3968
    %4666 = vmatmul.bf16.gmra.mxu0 %v4188
    %v4667 = vpop.f32.mrf.mxu0
    %v4668 = vadd.f32 %v4649, %v4667
    %v4669 = vpop.f32.mrf.mxu0
    %v4670 = vadd.f32 %v4651, %v4669
    %4671 = vmatmul.bf16.gmra.mxu0 %v4191
    %v4672 = vpop.f32.mrf.mxu0
    %v4673 = vadd.f32 %v4654, %v4672
    %v4674 = vpop.f32.mrf.mxu0
    %v4675 = vadd.f32 %v4656, %v4674
    %4676 = vdwg.mxu0
    %4677 = vmatpush.bf16.msra.mxu0 %v3888
    %4678 = vmatpush.bf16.msra.mxu0 %v3879
    %4679 = vmatpush.bf16.msra.mxu0 %v3870
    %4680 = vmatpush.bf16.msra.mxu0 %v3861
    %4681 = vmatpush.bf16.msra.mxu0 %v3852
    %4682 = vmatpush.bf16.msra.mxu0 %v3843
    %4683 = vmatpush.bf16.msra.mxu0 %v3834
    %4684 = vmatpush.bf16.msra.mxu0 %v3825
    %4685 = vmatmul.bf16.gmra.mxu0 %v3233
    %v4686 = vpop.f32.mrf.mxu0
    %v4687 = vadd.f32 0.0, %v4686
    %v4688 = vpop.f32.mrf.mxu0
    %v4689 = vadd.f32 0.0, %v4688
    %4690 = vmatmul.bf16.gmra.mxu0 %v3236
    %v4691 = vpop.f32.mrf.mxu0
    %v4692 = vadd.f32 0.0, %v4691
    %v4693 = vpop.f32.mrf.mxu0
    %v4694 = vadd.f32 0.0, %v4693
    %4695 = vdwg.mxu0
    %4696 = vmatpush.bf16.msra.mxu0 %v3960
    %4697 = vmatpush.bf16.msra.mxu0 %v3951
    %4698 = vmatpush.bf16.msra.mxu0 %v3942
    %4699 = vmatpush.bf16.msra.mxu0 %v3933
    %4700 = vmatpush.bf16.msra.mxu0 %v3924
    %4701 = vmatpush.bf16.msra.mxu0 %v3915
    %4702 = vmatpush.bf16.msra.mxu0 %v3906
    %4703 = vmatpush.bf16.msra.mxu0 %v3897
    %4704 = vmatmul.bf16.gmra.mxu0 %v3234
    %v4705 = vpop.f32.mrf.mxu0
    %v4706 = vadd.f32 %v4687, %v4705
    %v4707 = vpop.f32.mrf.mxu0
    %v4708 = vadd.f32 %v4689, %v4707
    %4709 = vmatmul.bf16.gmra.mxu0 %v3237
    %v4710 = vpop.f32.mrf.mxu0
    %v4711 = vadd.f32 %v4692, %v4710
    %v4712 = vpop.f32.mrf.mxu0
    %v4713 = vadd.f32 %v4694, %v4712
    %4714 = vdwg.mxu0
    %4715 = vmatpush.bf16.msra.mxu0 0
    %4716 = vmatpush.bf16.msra.mxu0 0
    %4717 = vmatpush.bf16.msra.mxu0 0
    %4718 = vmatpush.bf16.msra.mxu0 %v4219
    %4719 = vmatpush.bf16.msra.mxu0 %v3996
    %4720 = vmatpush.bf16.msra.mxu0 %v3987
    %4721 = vmatpush.bf16.msra.mxu0 %v3978
    %4722 = vmatpush.bf16.msra.mxu0 %v3969
    %4723 = vmatmul.bf16.gmra.mxu0 %v4188
    %v4724 = vpop.f32.mrf.mxu0
    %v4725 = vadd.f32 %v4706, %v4724
    %v4726 = vpop.f32.mrf.mxu0
    %v4727 = vadd.f32 %v4708, %v4726
    %4728 = vmatmul.bf16.gmra.mxu0 %v4191
    %v4729 = vpop.f32.mrf.mxu0
    %v4730 = vadd.f32 %v4711, %v4729
    %v4731 = vpop.f32.mrf.mxu0
    %v4732 = vadd.f32 %v4713, %v4731
    %4733 = vdwg.mxu0
    %s4734 = sld [smem:[#allocation3 + $0x4]]
    %4735 = vrot.lane.b32.xlu0 %v2484, 28
    %v4736 = vpop.permute.xlu0 %4735
    %4737 = vrot.lane.b32.xlu0 %v2485, 28
    %v4738 = vpop.permute.xlu0 %4737
    %4739 = vrot.lane.b32.xlu0 %v2486, 28
    %v4740 = vpop.permute.xlu0 %4739
    %4741 = vrot.lane.b32.xlu0 %v2487, 28
    %v4742 = vpop.permute.xlu0 %4741
    %4743 = vrot.lane.b32.xlu0 %v2488, 28
    %v4744 = vpop.permute.xlu0 %4743
    %4745 = vrot.lane.b32.xlu0 %v2489, 28
    %v4746 = vpop.permute.xlu0 %4745
    %4747 = vrot.lane.b32.xlu0 %v2490, 28
    %v4748 = vpop.permute.xlu0 %4747
    %4749 = vrot.lane.b32.xlu0 %v2491, 28
    %v4750 = vpop.permute.xlu0 %4749
    %4751 = vrot.lane.b32.xlu0 %v2492, 28
    %v4752 = vpop.permute.xlu0 %4751
    %4753 = vrot.lane.b32.xlu0 %v2493, 28
    %v4754 = vpop.permute.xlu0 %4753
    %vm4755 = vcmask 228352
    %v4756 = vsel %vm4755, %v4736, %v4738
    %v4757 = vsel %vm4755, %v4738, %v4740
    %v4758 = vsel %vm4755, %v4740, %v4742
    %v4759 = vsel %vm4755, %v4742, %v4744
    %v4760 = vsel %vm4755, %v4744, %v4746
    %v4761 = vsel %vm4755, %v4746, %v4748
    %v4762 = vsel %vm4755, %v4748, %v4750
    %v4763 = vsel %vm4755, %v4750, %v4752
    %v4764 = vsel %vm4755, %v4752, %v4754
    %v4774 = vmul.f32 %v4269, %v4756
    %v4775 = vmul.f32 %v4326, %v4757
    %v4776 = vmul.f32 %v4383, %v4758
    %v4777 = vmul.f32 %v4440, %v4759
    %v4778 = vmul.f32 %v4497, %v4760
    %v4779 = vmul.f32 %v4554, %v4761
    %v4780 = vmul.f32 %v4611, %v4762
    %v4781 = vmul.f32 %v4668, %v4763
    %v4782 = vmul.f32 %v4725, %v4764
    %v4783 = vadd.f32 %v4774, %v4775
    %v4784 = vadd.f32 %v4783, %v4776
    %v4785 = vadd.f32 %v4784, %v4777
    %v4786 = vadd.f32 %v4785, %v4778
    %v4787 = vadd.f32 %v4786, %v4779
    %v4788 = vadd.f32 %v4787, %v4780
    %v4789 = vadd.f32 %v4788, %v4781
    %v4790 = vadd.f32 %v4789, %v4782
    %4791 = vadd.xlane.f32.xlu0 %v4790
    %v4792 = vpop.xlane.xlu0 %4791
    %v4793 = vmul.f32 %v4774, %v4774
    %v4794 = vmul.f32 %v4775, %v4775
    %v4795 = vmul.f32 %v4776, %v4776
    %v4796 = vmul.f32 %v4777, %v4777
    %v4797 = vmul.f32 %v4778, %v4778
    %v4798 = vmul.f32 %v4779, %v4779
    %v4799 = vmul.f32 %v4780, %v4780
    %v4800 = vmul.f32 %v4781, %v4781
    %v4801 = vmul.f32 %v4782, %v4782
    %v4802 = vadd.f32 %v4793, %v4794
    %v4803 = vadd.f32 %v4802, %v4795
    %v4804 = vadd.f32 %v4803, %v4796
    %v4805 = vadd.f32 %v4804, %v4797
    %v4806 = vadd.f32 %v4805, %v4798
    %v4807 = vadd.f32 %v4806, %v4799
    %v4808 = vadd.f32 %v4807, %v4800
    %v4809 = vadd.f32 %v4808, %v4801
    %4810 = vadd.xlane.f32.xlu0 %v4809
    %v4811 = vpop.xlane.xlu0 %4810
    %v4812 = vmul.f32 %v4792, 0.001953125
    %v4813 = vmul.f32 %v4811, 0.001953125
    %v4814 = vmul.f32 %v4812, %v4812
    %v4815 = vsub.f32 %v4813, %v4814
    %v4816 = vadd.f32 %v4815, 1e-05
    %v4817 = vrsqrt.pop %v4816
    %v4818 = vmul.f32 %v4817, %v4816
    %v4819 = vmul.f32 %v4818, %v4817
    %v4820 = vmul.f32 0.5, %v4819
    %v4821 = vsub.f32 1.5, %v4820
    %v4822 = vmul.f32 %v4817, %v4821
    %vm4823 = vweird.f32 %v4816
    %vm4824 = vweird.f32 %v4817
    %vm4825 = vmor %vm4823, %vm4824
    %v4826 = vsel %vm4825, %v4817, %v4822
    %v4827 = vstv %s4734
    %v4828 = vmul.f32 %v4827, %v4826
    %v4829 = vsub.f32 %v4774, %v4812
    %v4830 = vsub.f32 %v4775, %v4812
    %v4831 = vsub.f32 %v4776, %v4812
    %v4832 = vsub.f32 %v4777, %v4812
    %v4833 = vsub.f32 %v4778, %v4812
    %v4834 = vsub.f32 %v4779, %v4812
    %v4835 = vsub.f32 %v4780, %v4812
    %v4836 = vsub.f32 %v4781, %v4812
    %v4837 = vsub.f32 %v4782, %v4812
    %v4838 = vmul.f32 %v4828, %v4829
    %v4839 = vmul.f32 %v4828, %v4830
    %v4840 = vmul.f32 %v4828, %v4831
    %v4841 = vmul.f32 %v4828, %v4832
    %v4842 = vmul.f32 %v4828, %v4833
    %v4843 = vmul.f32 %v4828, %v4834
    %v4844 = vmul.f32 %v4828, %v4835
    %v4845 = vmul.f32 %v4828, %v4836
    %v4846 = vmul.f32 %v4828, %v4837
    %4856 = vrot.lane.b32.xlu0 %v4838, 100
    %v4857 = vpop.permute.xlu0 %4856
    %4858 = vrot.lane.b32.xlu0 %v4839, 100
    %v4859 = vpop.permute.xlu0 %4858
    %4860 = vrot.lane.b32.xlu0 %v4840, 100
    %v4861 = vpop.permute.xlu0 %4860
    %4862 = vrot.lane.b32.xlu0 %v4841, 100
    %v4863 = vpop.permute.xlu0 %4862
    %4864 = vrot.lane.b32.xlu0 %v4842, 100
    %v4865 = vpop.permute.xlu0 %4864
    %4866 = vrot.lane.b32.xlu0 %v4843, 100
    %v4867 = vpop.permute.xlu0 %4866
    %4868 = vrot.lane.b32.xlu0 %v4844, 100
    %v4869 = vpop.permute.xlu0 %4868
    %4870 = vrot.lane.b32.xlu0 %v4845, 100
    %v4871 = vpop.permute.xlu0 %4870
    %4872 = vrot.lane.b32.xlu0 %v4846, 100
    %v4873 = vpop.permute.xlu0 %4872
    %vm4874 = vcmask 818176
    %v4875 = vsel %vm4874, %v4857, %v4859
    %v4876 = vsel %vm4874, %v4859, %v4861
    %v4877 = vsel %vm4874, %v4861, %v4863
    %v4878 = vsel %vm4874, %v4863, %v4865
    %v4879 = vsel %vm4874, %v4865, %v4867
    %v4880 = vsel %vm4874, %v4867, %v4869
    %v4881 = vsel %vm4874, %v4869, %v4871
    %v4882 = vsel %vm4874, %v4871, %v4873
    %v4893 = vadd.f32 %v2990, %v4857
    %v4894 = vadd.f32 %v2991, %v4875
    %v4895 = vadd.f32 %v2992, %v4876
    %v4896 = vadd.f32 %v2993, %v4877
    %v4897 = vadd.f32 %v2994, %v4878
    %v4898 = vadd.f32 %v2995, %v4879
    %v4899 = vadd.f32 %v2996, %v4880
    %v4900 = vadd.f32 %v2997, %v4881
    %v4901 = vadd.f32 %v2998, %v4882
    %v4902 = vadd.f32 %v2999, %v4873
    %s4903 = sld [smem:[#allocation3 + $0x5]]
    %v4904 = vmul.f32 %v4271, %v4756
    %v4905 = vmul.f32 %v4328, %v4757
    %v4906 = vmul.f32 %v4385, %v4758
    %v4907 = vmul.f32 %v4442, %v4759
    %v4908 = vmul.f32 %v4499, %v4760
    %v4909 = vmul.f32 %v4556, %v4761
    %v4910 = vmul.f32 %v4613, %v4762
    %v4911 = vmul.f32 %v4670, %v4763
    %v4912 = vmul.f32 %v4727, %v4764
    %v4913 = vadd.f32 %v4904, %v4905
    %v4914 = vadd.f32 %v4913, %v4906
    %v4915 = vadd.f32 %v4914, %v4907
    %v4916 = vadd.f32 %v4915, %v4908
    %v4917 = vadd.f32 %v4916, %v4909
    %v4918 = vadd.f32 %v4917, %v4910
    %v4919 = vadd.f32 %v4918, %v4911
    %v4920 = vadd.f32 %v4919, %v4912
    %4921 = vadd.xlane.f32.xlu0 %v4920
    %v4922 = vpop.xlane.xlu0 %4921
    %v4923 = vmul.f32 %v4904, %v4904
    %v4924 = vmul.f32 %v4905, %v4905
    %v4925 = vmul.f32 %v4906, %v4906
    %v4926 = vmul.f32 %v4907, %v4907
    %v4927 = vmul.f32 %v4908, %v4908
    %v4928 = vmul.f32 %v4909, %v4909
    %v4929 = vmul.f32 %v4910, %v4910
    %v4930 = vmul.f32 %v4911, %v4911
    %v4931 = vmul.f32 %v4912, %v4912
    %v4932 = vadd.f32 %v4923, %v4924
    %v4933 = vadd.f32 %v4932, %v4925
    %v4934 = vadd.f32 %v4933, %v4926
    %v4935 = vadd.f32 %v4934, %v4927
    %v4936 = vadd.f32 %v4935, %v4928
    %v4937 = vadd.f32 %v4936, %v4929
    %v4938 = vadd.f32 %v4937, %v4930
    %v4939 = vadd.f32 %v4938, %v4931
    %4940 = vadd.xlane.f32.xlu0 %v4939
    %v4941 = vpop.xlane.xlu0 %4940
    %v4942 = vmul.f32 %v4922, 0.001953125
    %v4943 = vmul.f32 %v4941, 0.001953125
    %v4944 = vmul.f32 %v4942, %v4942
    %v4945 = vsub.f32 %v4943, %v4944
    %v4946 = vadd.f32 %v4945, 1e-05
    %v4947 = vrsqrt.pop %v4946
    %v4948 = vmul.f32 %v4947, %v4946
    %v4949 = vmul.f32 %v4948, %v4947
    %v4950 = vmul.f32 0.5, %v4949
    %v4951 = vsub.f32 1.5, %v4950
    %v4952 = vmul.f32 %v4947, %v4951
    %vm4953 = vweird.f32 %v4946
    %vm4954 = vweird.f32 %v4947
    %vm4955 = vmor %vm4953, %vm4954
    %v4956 = vsel %vm4955, %v4947, %v4952
    %v4957 = vstv %s4903
    %v4958 = vmul.f32 %v4957, %v4956
    %v4959 = vsub.f32 %v4904, %v4942
    %v4960 = vsub.f32 %v4905, %v4942
    %v4961 = vsub.f32 %v4906, %v4942
    %v4962 = vsub.f32 %v4907, %v4942
    %v4963 = vsub.f32 %v4908, %v4942
    %v4964 = vsub.f32 %v4909, %v4942
    %v4965 = vsub.f32 %v4910, %v4942
    %v4966 = vsub.f32 %v4911, %v4942
    %v4967 = vsub.f32 %v4912, %v4942
    %v4968 = vmul.f32 %v4958, %v4959
    %v4969 = vmul.f32 %v4958, %v4960
    %v4970 = vmul.f32 %v4958, %v4961
    %v4971 = vmul.f32 %v4958, %v4962
    %v4972 = vmul.f32 %v4958, %v4963
    %v4973 = vmul.f32 %v4958, %v4964
    %v4974 = vmul.f32 %v4958, %v4965
    %v4975 = vmul.f32 %v4958, %v4966
    %v4976 = vmul.f32 %v4958, %v4967
    %4986 = vrot.lane.b32.xlu0 %v4968, 100
    %v4987 = vpop.permute.xlu0 %4986
    %4988 = vrot.lane.b32.xlu0 %v4969, 100
    %v4989 = vpop.permute.xlu0 %4988
    %4990 = vrot.lane.b32.xlu0 %v4970, 100
    %v4991 = vpop.permute.xlu0 %4990
    %4992 = vrot.lane.b32.xlu0 %v4971, 100
    %v4993 = vpop.permute.xlu0 %4992
    %4994 = vrot.lane.b32.xlu0 %v4972, 100
    %v4995 = vpop.permute.xlu0 %4994
    %4996 = vrot.lane.b32.xlu0 %v4973, 100
    %v4997 = vpop.permute.xlu0 %4996
    %4998 = vrot.lane.b32.xlu0 %v4974, 100
    %v4999 = vpop.permute.xlu0 %4998
    %5000 = vrot.lane.b32.xlu0 %v4975, 100
    %v5001 = vpop.permute.xlu0 %5000
    %5002 = vrot.lane.b32.xlu0 %v4976, 100
    %v5003 = vpop.permute.xlu0 %5002
    %v5004 = vsel %vm4874, %v4987, %v4989
    %v5005 = vsel %vm4874, %v4989, %v4991
    %v5006 = vsel %vm4874, %v4991, %v4993
    %v5007 = vsel %vm4874, %v4993, %v4995
    %v5008 = vsel %vm4874, %v4995, %v4997
    %v5009 = vsel %vm4874, %v4997, %v4999
    %v5010 = vsel %vm4874, %v4999, %v5001
    %v5011 = vsel %vm4874, %v5001, %v5003
    %v5022 = vadd.f32 %v4893, %v4987
    %v5023 = vadd.f32 %v4894, %v5004
    %v5024 = vadd.f32 %v4895, %v5005
    %v5025 = vadd.f32 %v4896, %v5006
    %v5026 = vadd.f32 %v4897, %v5007
    %v5027 = vadd.f32 %v4898, %v5008
    %v5028 = vadd.f32 %v4899, %v5009
    %v5029 = vadd.f32 %v4900, %v5010
    %v5030 = vadd.f32 %v4901, %v5011
    %v5031 = vadd.f32 %v4902, %v5003
    %s5032 = sld [smem:[#allocation3 + $0x6]]
    %v5033 = vmul.f32 %v4274, %v4756
    %v5034 = vmul.f32 %v4331, %v4757
    %v5035 = vmul.f32 %v4388, %v4758
    %v5036 = vmul.f32 %v4445, %v4759
    %v5037 = vmul.f32 %v4502, %v4760
    %v5038 = vmul.f32 %v4559, %v4761
    %v5039 = vmul.f32 %v4616, %v4762
    %v5040 = vmul.f32 %v4673, %v4763
    %v5041 = vmul.f32 %v4730, %v4764
    %v5042 = vadd.f32 %v5033, %v5034
    %v5043 = vadd.f32 %v5042, %v5035
    %v5044 = vadd.f32 %v5043, %v5036
    %v5045 = vadd.f32 %v5044, %v5037
    %v5046 = vadd.f32 %v5045, %v5038
    %v5047 = vadd.f32 %v5046, %v5039
    %v5048 = vadd.f32 %v5047, %v5040
    %v5049 = vadd.f32 %v5048, %v5041
    %5050 = vadd.xlane.f32.xlu0 %v5049
    %v5051 = vpop.xlane.xlu0 %5050
    %v5052 = vmul.f32 %v5033, %v5033
    %v5053 = vmul.f32 %v5034, %v5034
    %v5054 = vmul.f32 %v5035, %v5035
    %v5055 = vmul.f32 %v5036, %v5036
    %v5056 = vmul.f32 %v5037, %v5037
    %v5057 = vmul.f32 %v5038, %v5038
    %v5058 = vmul.f32 %v5039, %v5039
    %v5059 = vmul.f32 %v5040, %v5040
    %v5060 = vmul.f32 %v5041, %v5041
    %v5061 = vadd.f32 %v5052, %v5053
    %v5062 = vadd.f32 %v5061, %v5054
    %v5063 = vadd.f32 %v5062, %v5055
    %v5064 = vadd.f32 %v5063, %v5056
    %v5065 = vadd.f32 %v5064, %v5057
    %v5066 = vadd.f32 %v5065, %v5058
    %v5067 = vadd.f32 %v5066, %v5059
    %v5068 = vadd.f32 %v5067, %v5060
    %5069 = vadd.xlane.f32.xlu0 %v5068
    %v5070 = vpop.xlane.xlu0 %5069
    %v5071 = vmul.f32 %v5051, 0.001953125
    %v5072 = vmul.f32 %v5070, 0.001953125
    %v5073 = vmul.f32 %v5071, %v5071
    %v5074 = vsub.f32 %v5072, %v5073
    %v5075 = vadd.f32 %v5074, 1e-05
    %v5076 = vrsqrt.pop %v5075
    %v5077 = vmul.f32 %v5076, %v5075
    %v5078 = vmul.f32 %v5077, %v5076
    %v5079 = vmul.f32 0.5, %v5078
    %v5080 = vsub.f32 1.5, %v5079
    %v5081 = vmul.f32 %v5076, %v5080
    %vm5082 = vweird.f32 %v5075
    %vm5083 = vweird.f32 %v5076
    %vm5084 = vmor %vm5082, %vm5083
    %v5085 = vsel %vm5084, %v5076, %v5081
    %v5086 = vstv %s5032
    %v5087 = vmul.f32 %v5086, %v5085
    %v5088 = vsub.f32 %v5033, %v5071
    %v5089 = vsub.f32 %v5034, %v5071
    %v5090 = vsub.f32 %v5035, %v5071
    %v5091 = vsub.f32 %v5036, %v5071
    %v5092 = vsub.f32 %v5037, %v5071
    %v5093 = vsub.f32 %v5038, %v5071
    %v5094 = vsub.f32 %v5039, %v5071
    %v5095 = vsub.f32 %v5040, %v5071
    %v5096 = vsub.f32 %v5041, %v5071
    %v5097 = vmul.f32 %v5087, %v5088
    %v5098 = vmul.f32 %v5087, %v5089
    %v5099 = vmul.f32 %v5087, %v5090
    %v5100 = vmul.f32 %v5087, %v5091
    %v5101 = vmul.f32 %v5087, %v5092
    %v5102 = vmul.f32 %v5087, %v5093
    %v5103 = vmul.f32 %v5087, %v5094
    %v5104 = vmul.f32 %v5087, %v5095
    %v5105 = vmul.f32 %v5087, %v5096
    %5115 = vrot.lane.b32.xlu0 %v5097, 100
    %v5116 = vpop.permute.xlu0 %5115
    %5117 = vrot.lane.b32.xlu0 %v5098, 100
    %v5118 = vpop.permute.xlu0 %5117
    %5119 = vrot.lane.b32.xlu0 %v5099, 100
    %v5120 = vpop.permute.xlu0 %5119
    %5121 = vrot.lane.b32.xlu0 %v5100, 100
    %v5122 = vpop.permute.xlu0 %5121
    %5123 = vrot.lane.b32.xlu0 %v5101, 100
    %v5124 = vpop.permute.xlu0 %5123
    %5125 = vrot.lane.b32.xlu0 %v5102, 100
    %v5126 = vpop.permute.xlu0 %5125
    %5127 = vrot.lane.b32.xlu0 %v5103, 100
    %v5128 = vpop.permute.xlu0 %5127
    %5129 = vrot.lane.b32.xlu0 %v5104, 100
    %v5130 = vpop.permute.xlu0 %5129
    %5131 = vrot.lane.b32.xlu0 %v5105, 100
    %v5132 = vpop.permute.xlu0 %5131
    %v5133 = vsel %vm4874, %v5116, %v5118
    %v5134 = vsel %vm4874, %v5118, %v5120
    %v5135 = vsel %vm4874, %v5120, %v5122
    %v5136 = vsel %vm4874, %v5122, %v5124
    %v5137 = vsel %vm4874, %v5124, %v5126
    %v5138 = vsel %vm4874, %v5126, %v5128
    %v5139 = vsel %vm4874, %v5128, %v5130
    %v5140 = vsel %vm4874, %v5130, %v5132
    %v5151 = vadd.f32 %v5022, %v5116
    %v5152 = vadd.f32 %v5023, %v5133
    %v5153 = vadd.f32 %v5024, %v5134
    %v5154 = vadd.f32 %v5025, %v5135
    %v5155 = vadd.f32 %v5026, %v5136
    %v5156 = vadd.f32 %v5027, %v5137
    %v5157 = vadd.f32 %v5028, %v5138
    %v5158 = vadd.f32 %v5029, %v5139
    %v5159 = vadd.f32 %v5030, %v5140
    %v5160 = vadd.f32 %v5031, %v5132
    %s5161 = sld [smem:[#allocation3 + $0x7]]
    %v5162 = vmul.f32 %v4276, %v4756
    %v5163 = vmul.f32 %v4333, %v4757
    %v5164 = vmul.f32 %v4390, %v4758
    %v5165 = vmul.f32 %v4447, %v4759
    %v5166 = vmul.f32 %v4504, %v4760
    %v5167 = vmul.f32 %v4561, %v4761
    %v5168 = vmul.f32 %v4618, %v4762
    %v5169 = vmul.f32 %v4675, %v4763
    %v5170 = vmul.f32 %v4732, %v4764
    %v5171 = vadd.f32 %v5162, %v5163
    %v5172 = vadd.f32 %v5171, %v5164
    %v5173 = vadd.f32 %v5172, %v5165
    %v5174 = vadd.f32 %v5173, %v5166
    %v5175 = vadd.f32 %v5174, %v5167
    %v5176 = vadd.f32 %v5175, %v5168
    %v5177 = vadd.f32 %v5176, %v5169
    %v5178 = vadd.f32 %v5177, %v5170
    %5179 = vadd.xlane.f32.xlu0 %v5178
    %v5180 = vpop.xlane.xlu0 %5179
    %v5181 = vmul.f32 %v5162, %v5162
    %v5182 = vmul.f32 %v5163, %v5163
    %v5183 = vmul.f32 %v5164, %v5164
    %v5184 = vmul.f32 %v5165, %v5165
    %v5185 = vmul.f32 %v5166, %v5166
    %v5186 = vmul.f32 %v5167, %v5167
    %v5187 = vmul.f32 %v5168, %v5168
    %v5188 = vmul.f32 %v5169, %v5169
    %v5189 = vmul.f32 %v5170, %v5170
    %v5190 = vadd.f32 %v5181, %v5182
    %v5191 = vadd.f32 %v5190, %v5183
    %v5192 = vadd.f32 %v5191, %v5184
    %v5193 = vadd.f32 %v5192, %v5185
    %v5194 = vadd.f32 %v5193, %v5186
    %v5195 = vadd.f32 %v5194, %v5187
    %v5196 = vadd.f32 %v5195, %v5188
    %v5197 = vadd.f32 %v5196, %v5189
    %5198 = vadd.xlane.f32.xlu0 %v5197
    %v5199 = vpop.xlane.xlu0 %5198
    %v5200 = vmul.f32 %v5180, 0.001953125
    %v5201 = vmul.f32 %v5199, 0.001953125
    %v5202 = vmul.f32 %v5200, %v5200
    %v5203 = vsub.f32 %v5201, %v5202
    %v5204 = vadd.f32 %v5203, 1e-05
    %v5205 = vrsqrt.pop %v5204
    %v5206 = vmul.f32 %v5205, %v5204
    %v5207 = vmul.f32 %v5206, %v5205
    %v5208 = vmul.f32 0.5, %v5207
    %v5209 = vsub.f32 1.5, %v5208
    %v5210 = vmul.f32 %v5205, %v5209
    %vm5211 = vweird.f32 %v5204
    %vm5212 = vweird.f32 %v5205
    %vm5213 = vmor %vm5211, %vm5212
    %v5214 = vsel %vm5213, %v5205, %v5210
    %v5215 = vstv %s5161
    %v5216 = vmul.f32 %v5215, %v5214
    %v5217 = vsub.f32 %v5162, %v5200
    %v5218 = vsub.f32 %v5163, %v5200
    %v5219 = vsub.f32 %v5164, %v5200
    %v5220 = vsub.f32 %v5165, %v5200
    %v5221 = vsub.f32 %v5166, %v5200
    %v5222 = vsub.f32 %v5167, %v5200
    %v5223 = vsub.f32 %v5168, %v5200
    %v5224 = vsub.f32 %v5169, %v5200
    %v5225 = vsub.f32 %v5170, %v5200
    %v5226 = vmul.f32 %v5216, %v5217
    %v5227 = vmul.f32 %v5216, %v5218
    %v5228 = vmul.f32 %v5216, %v5219
    %v5229 = vmul.f32 %v5216, %v5220
    %v5230 = vmul.f32 %v5216, %v5221
    %v5231 = vmul.f32 %v5216, %v5222
    %v5232 = vmul.f32 %v5216, %v5223
    %v5233 = vmul.f32 %v5216, %v5224
    %v5234 = vmul.f32 %v5216, %v5225
    %5244 = vrot.lane.b32.xlu0 %v5226, 100
    %v5245 = vpop.permute.xlu0 %5244
    %5246 = vrot.lane.b32.xlu0 %v5227, 100
    %v5247 = vpop.permute.xlu0 %5246
    %5248 = vrot.lane.b32.xlu0 %v5228, 100
    %v5249 = vpop.permute.xlu0 %5248
    %5250 = vrot.lane.b32.xlu0 %v5229, 100
    %v5251 = vpop.permute.xlu0 %5250
    %5252 = vrot.lane.b32.xlu0 %v5230, 100
    %v5253 = vpop.permute.xlu0 %5252
    %5254 = vrot.lane.b32.xlu0 %v5231, 100
    %v5255 = vpop.permute.xlu0 %5254
    %5256 = vrot.lane.b32.xlu0 %v5232, 100
    %v5257 = vpop.permute.xlu0 %5256
    %5258 = vrot.lane.b32.xlu0 %v5233, 100
    %v5259 = vpop.permute.xlu0 %5258
    %5260 = vrot.lane.b32.xlu0 %v5234, 100
    %v5261 = vpop.permute.xlu0 %5260
    %v5262 = vsel %vm4874, %v5245, %v5247
    %v5263 = vsel %vm4874, %v5247, %v5249
    %v5264 = vsel %vm4874, %v5249, %v5251
    %v5265 = vsel %vm4874, %v5251, %v5253
    %v5266 = vsel %vm4874, %v5253, %v5255
    %v5267 = vsel %vm4874, %v5255, %v5257
    %v5268 = vsel %vm4874, %v5257, %v5259
    %v5269 = vsel %vm4874, %v5259, %v5261
    %v5280 = vadd.f32 %v5151, %v5245
    %v5281 = vadd.f32 %v5152, %v5262
    %v5282 = vadd.f32 %v5153, %v5263
    %v5283 = vadd.f32 %v5154, %v5264
    %v5284 = vadd.f32 %v5155, %v5265
    %v5285 = vadd.f32 %v5156, %v5266
    %v5286 = vadd.f32 %v5157, %v5267
    %v5287 = vadd.f32 %v5158, %v5268
    %v5288 = vadd.f32 %v5159, %v5269
    %v5289 = vadd.f32 %v5160, %v5261
    %5300 = vrot.lane.b32.xlu0 %v5280, 28
    %v5301 = vpop.permute.xlu0 %5300
    %5302 = vrot.lane.b32.xlu0 %v5281, 28
    %v5303 = vpop.permute.xlu0 %5302
    %5304 = vrot.lane.b32.xlu0 %v5282, 28
    %v5305 = vpop.permute.xlu0 %5304
    %5306 = vrot.lane.b32.xlu0 %v5283, 28
    %v5307 = vpop.permute.xlu0 %5306
    %5308 = vrot.lane.b32.xlu0 %v5284, 28
    %v5309 = vpop.permute.xlu0 %5308
    %5310 = vrot.lane.b32.xlu0 %v5285, 28
    %v5311 = vpop.permute.xlu0 %5310
    %5312 = vrot.lane.b32.xlu0 %v5286, 28
    %v5313 = vpop.permute.xlu0 %5312
    %5314 = vrot.lane.b32.xlu0 %v5287, 28
    %v5315 = vpop.permute.xlu0 %5314
    %5316 = vrot.lane.b32.xlu0 %v5288, 28
    %v5317 = vpop.permute.xlu0 %5316
    %5318 = vrot.lane.b32.xlu0 %v5289, 28
    %v5319 = vpop.permute.xlu0 %5318
    %v5320 = vsel %vm4755, %v5301, %v5303
    %v5321 = vsel %vm4755, %v5303, %v5305
    %v5322 = vsel %vm4755, %v5305, %v5307
    %v5323 = vsel %vm4755, %v5307, %v5309
    %v5324 = vsel %vm4755, %v5309, %v5311
    %v5325 = vsel %vm4755, %v5311, %v5313
    %v5326 = vsel %vm4755, %v5313, %v5315
    %v5327 = vsel %vm4755, %v5315, %v5317
    %v5328 = vsel %vm4755, %v5317, %v5319
    %5338 = vst [vmem:[#allocation13] sm:$0xff] %v5320
    %5339 = vst [vmem:[#allocation13 + $0x8] sm:$0xff] %v5321
    %5340 = vst [vmem:[#allocation13 + $0x10] sm:$0xff] %v5322
    %5341 = vst [vmem:[#allocation13 + $0x18] sm:$0xff] %v5323
    %5342 = vst [vmem:[#allocation13 + $0x20] sm:$0xff] %v5324
    %5343 = vst [vmem:[#allocation13 + $0x28] sm:$0xff] %v5325
    %5344 = vst [vmem:[#allocation13 + $0x30] sm:$0xff] %v5326
    %5345 = vst [vmem:[#allocation13 + $0x38] sm:$0xff] %v5327
    %5346 = vst [vmem:[#allocation13 + $0x40] sm:$0xff] %v5328
    // Predicated region
    $region46: #{tpu_custom_call.1} parent=1 // pred_check
      _
    $region47: #{tpu_custom_call.1} parent=1 // pred_check_branch
      %5348 = sbr.rel (0) target = $region49
    $region48: #{tpu_custom_call.1} parent=1 // pred_region
      %5350 = vsyncadd [#allocation5], 0
      %s5352 = sshll.u32 [#allocation13], 4
      %s5353 = int_to_ptr.vmem [resolvable:$true] %s5352
      %s5354 = sshll.u32 %s5, 4
      %s5355 = int_to_ptr.hbm [resolvable:$true] %s5354
      %5357 = dma.vmem_to_hbm [thread:$0]  %s5353, 1152, %s5355, [#allocation5]
    $region49: #{tpu_custom_call.1} parent=1 // pred_fallthru
      _
    // Predicated region
    $region50: #{tpu_custom_call.1} parent=1 // pred_check
      _
    $region51: #{tpu_custom_call.1} parent=1 // pred_check_branch
      %5359 = sbr.rel (0) target = $region53
    $region52: #{tpu_custom_call.1} parent=1 // pred_region
      %5361 = dma.done [#allocation5], 1152
    $region53: #{tpu_custom_call.1} parent=1 // pred_fallthru
      _
    %5362 = vsyncpa [#allocation4], 1
    %5363 = vsyncpa [#allocation9], 1
    %5364 = vsyncpa [#allocation12], 1
    %5365 = vsyncpa [#allocation5], 1
    %5366 = vsyncpa [#allocation6], 1

</llo_original>
